<compile_context>
chip_gen: v7x
topology: tpu7x:2x2x1
jax: 0.10.0
libtpu: 0.0.40
codegen_flags: <defaults>
</compile_context>

<pallas_src>
import functools

import jax
import jax.numpy as jnp
from jax.experimental import pallas as pl
from jax.experimental.pallas import tpu as pltpu


# --------------------------------------------------------------------------
# Fused GATv2 layer kernel (projection + attention + aggregation + bias)
# --------------------------------------------------------------------------
def _gat_layer_kernel(x_ref, wl_ref, wr_ref, bl_ref, br_ref, att_ref, bias_ref,
                      adj_ref, o_ref, *, heads, out_ch, tile_i, concat):
    """One grid step computes one tile of destination nodes for ALL heads.

    x_ref   : [N, Fin]        full node features (f32)
    wl_ref  : [Fin, H*C]      lin_l weight
    wr_ref  : [Fin, H*C]      lin_r weight
    bl_ref  : [1, H*C]        lin_l bias
    br_ref  : [1, H*C]        lin_r bias
    att_ref : [1, H*C]        per-head attention vectors, head-major
    bias_ref: [1, out_dim]    GATv2Conv output bias
    adj_ref : [TILE_I, N]     adj[i, j] = 1 iff edge j -> i (incl. self loops), bf16
    o_ref   : [TILE_I, out_dim]
    """
    i = pl.program_id(0)
    C = out_ch

    # ---- fused projections (bf16 MXU operands, f32 accumulation) ----
    x_all = x_ref[...]
    xb = x_all.astype(jnp.bfloat16)                                   # [N, Fin]
    wl = wl_ref[...].astype(jnp.bfloat16)
    wr = wr_ref[...].astype(jnp.bfloat16)
    # lin_l of ALL nodes (source / message payload).
    xl_all = jnp.dot(xb, wl, preferred_element_type=jnp.float32) + bl_ref[...]   # [N, H*C]
    # lin_r only for this destination tile.
    row0 = pl.multiple_of(i * tile_i, tile_i)
    x_dst = x_ref[pl.ds(row0, tile_i), :].astype(jnp.bfloat16)        # [TILE_I, Fin]
    xr_t = jnp.dot(x_dst, wr, preferred_element_type=jnp.float32) + br_ref[...]  # [TILE_I, H*C]

    mask = adj_ref[...].astype(jnp.float32) > 0.0                     # [TILE_I, N]
    att = att_ref[...]                                                # [1, H*C] f32

    head_outs = []
    for h in range(heads):  # static unroll (H is small)
        c0 = h * C
        xl_h = xl_all[:, c0:c0 + C]                                   # [N, C]
        xr_h = xr_t[:, c0:c0 + C]                                     # [TILE_I, C]
        a_h = att[:, c0:c0 + C]                                       # [1, C]

        # e[i, j] = att_h . leaky_relu(xr_h[i] + xl_h[j])   (f32)
        s = xr_h[:, None, :] + xl_h[None, :, :]                       # [TILE_I, N, C]
        s = jnp.where(s > 0, s, 0.2 * s)                              # LeakyReLU(0.2)
        e = jnp.sum(s * a_h[None, :, :], axis=-1)                     # [TILE_I, N]

        # masked softmax over incoming edges j, kept in f32
        e = jnp.where(mask, e, jnp.float32(-1e30))
        m = jnp.max(e, axis=-1, keepdims=True)
        p = jnp.where(mask, jnp.exp(e - m), 0.0)                      # [TILE_I, N]
        denom = jnp.sum(p, axis=-1, keepdims=True)
        inv = pl.reciprocal(jnp.maximum(denom, jnp.float32(1e-20)), approx=True)

        # aggregate first (bf16 MXU), normalize after (EUP reciprocal is ~free)
        agg = jnp.dot(p.astype(jnp.bfloat16), xl_h.astype(jnp.bfloat16),
                      preferred_element_type=jnp.float32)             # [TILE_I, C]
        head_outs.append(agg * inv)

    if concat:
        out = jnp.concatenate(head_outs, axis=-1)                     # [TILE_I, H*C]
    else:
        out = sum(head_outs) / float(heads)                           # [TILE_I, C]
    o_ref[...] = out + bias_ref[...]


def gatv2_layer(x, adj_bf16, p, heads, out_ch, concat, tile_i):
    """x: [N, Fin] f32, adj_bf16: [N, N] bf16 -> [N, H*C] (concat) or [N, C]."""
    N, Fin = x.shape
    HC = heads * out_ch
    out_dim = HC if concat else out_ch
    assert N % tile_i == 0

    kernel = functools.partial(
        _gat_layer_kernel, heads=heads, out_ch=out_ch, tile_i=tile_i, concat=concat
    )
    return pl.pallas_call(
        kernel,
        out_shape=jax.ShapeDtypeStruct((N, out_dim), jnp.float32),
        grid=(N // tile_i,),
        in_specs=[
            pl.BlockSpec((N, Fin), lambda i: (0, 0)),        # x (full)
            pl.BlockSpec((Fin, HC), lambda i: (0, 0)),       # wl
            pl.BlockSpec((Fin, HC), lambda i: (0, 0)),       # wr
            pl.BlockSpec((1, HC), lambda i: (0, 0)),         # bl
            pl.BlockSpec((1, HC), lambda i: (0, 0)),         # br
            pl.BlockSpec((1, HC), lambda i: (0, 0)),         # att
            pl.BlockSpec((1, out_dim), lambda i: (0, 0)),    # output bias
            pl.BlockSpec((tile_i, N), lambda i: (i, 0)),     # adj dst tile
        ],
        out_specs=pl.BlockSpec((tile_i, out_dim), lambda i: (i, 0)),
        compiler_params=pltpu.CompilerParams(
            dimension_semantics=("parallel",),               # dst tiles independent -> megacore
            vmem_limit_bytes=32 * 1024 * 1024,
        ),
    )(x, p["wl"], p["wr"], p["bl"], p["br"], p["att"], p["bias"], adj_bf16)


# --------------------------------------------------------------------------
# Final Linear as a Pallas kernel (tiny: [G, h3] @ [h3, 2] + b)
# --------------------------------------------------------------------------
def _linear_kernel(x_ref, w_ref, b_ref, o_ref):
    o_ref[...] = (
        jnp.dot(x_ref[...], w_ref[...], preferred_element_type=jnp.float32)
        + b_ref[...]
    )


def pallas_linear(x, w, b):
    M, K = x.shape
    N = w.shape[1]
    return pl.pallas_call(
        _linear_kernel,
        out_shape=jax.ShapeDtypeStruct((M, N), jnp.float32),
        grid=(1,),
        in_specs=[
            pl.BlockSpec((M, K), lambda i: (0, 0)),
            pl.BlockSpec((K, N), lambda i: (0, 0)),
            pl.BlockSpec((1, N), lambda i: (0, 0)),
        ],
        out_specs=pl.BlockSpec((M, N), lambda i: (0, 0)),
    )(x, w, b)


# --------------------------------------------------------------------------
# JAX glue: GraphNorm, global_mean_pool  (per-graph scatter means)
# --------------------------------------------------------------------------
def graph_norm(x, batch, num_graphs, p, eps=1e-5):
    """Matches torch_geometric GraphNorm (eval mode)."""
    one_hot = (batch[:, None] == jnp.arange(num_graphs)[None, :]).astype(x.dtype)
    counts = one_hot.sum(axis=0)                          # [G]
    mean = (one_hot.T @ x) / counts[:, None]              # [G, F]
    out = x - mean[batch] * p["mean_scale"]
    var = (one_hot.T @ (out * out)) / counts[:, None]
    std = jnp.sqrt(var[batch] + eps)
    return p["weight"] * out / std + p["bias"]


def global_mean_pool(x, batch, num_graphs):
    one_hot = (batch[:, None] == jnp.arange(num_graphs)[None, :]).astype(x.dtype)
    counts = one_hot.sum(axis=0)
    return (one_hot.T @ x) / counts[:, None]


# --------------------------------------------------------------------------
# Full forward
# --------------------------------------------------------------------------
def simple_gat_forward(x, adj_bf16, batch, num_graphs, params, heads, h1, h2, h3,
                       tile_i):
    h = gatv2_layer(x, adj_bf16, params["conv1"], heads, h1, concat=True, tile_i=tile_i)
    h = jax.nn.relu(graph_norm(h, batch, num_graphs, params["gn1"]))
    h = gatv2_layer(h, adj_bf16, params["conv2"], heads, h2, concat=True, tile_i=tile_i)
    h = jax.nn.relu(graph_norm(h, batch, num_graphs, params["gn2"]))
    h = gatv2_layer(h, adj_bf16, params["conv3"], heads, h3, concat=False, tile_i=tile_i)
    h = jax.nn.relu(graph_norm(h, batch, num_graphs, params["gn3"]))
    pooled = global_mean_pool(h, batch, num_graphs)                   # [G, h3]
    return pallas_linear(pooled, params["lin"]["w"], params["lin"]["b"])  # [G, 2]


# --------------------------------------------------------------------------
# Deterministic parameter init
# --------------------------------------------------------------------------
def _glorot(key, shape):
    fan_in, fan_out = shape[0], shape[-1]
    limit = jnp.sqrt(6.0 / (fan_in + fan_out))
    return jax.random.uniform(key, shape, jnp.float32, -limit, limit)


def init_gatv2_params(key, in_ch, out_ch, heads, concat):
    k = jax.random.split(key, 3)
    HC = heads * out_ch
    bias_dim = HC if concat else out_ch
    return {
        "wl": _glorot(k[0], (in_ch, HC)),
        "bl": jnp.zeros((1, HC), jnp.float32),
        "wr": _glorot(k[1], (in_ch, HC)),
        "br": jnp.zeros((1, HC), jnp.float32),
        # att stored head-major & flat: att[0, h*C + c]
        "att": _glorot(k[2], (1, HC)),
        "bias": jnp.zeros((1, bias_dim), jnp.float32),
    }


def init_graphnorm_params(dim):
    return {
        "weight": jnp.ones((dim,), jnp.float32),
        "bias": jnp.zeros((dim,), jnp.float32),
        "mean_scale": jnp.ones((dim,), jnp.float32),
    }


def init_params(key, in_ch, h1, h2, h3, heads):
    k = jax.random.split(key, 5)
    return {
        "conv1": init_gatv2_params(k[0], in_ch, h1, heads, concat=True),
        "gn1": init_graphnorm_params(h1 * heads),
        "conv2": init_gatv2_params(k[1], h1 * heads, h2, heads, concat=True),
        "gn2": init_graphnorm_params(h2 * heads),
        "conv3": init_gatv2_params(k[2], h2 * heads, h3, heads, concat=False),
        "gn3": init_graphnorm_params(h3),
        "lin": {
            "w": _glorot(k[3], (h3, 2)),
            "b": 0.01 * jax.random.normal(k[4], (1, 2), jnp.float32),
        },
    }


# --------------------------------------------------------------------------
# Main
# --------------------------------------------------------------------------
if __name__ == "__main__":
    in_ch, h1, h2, h3, heads = 4, 8, 8, 8, 2
    nodes_per_graph, num_graphs = 8, 2
    N = nodes_per_graph * num_graphs
    TILE_I = 8  # dst-node tile (multiple of 8 sublanes); grid = N // TILE_I steps

    key = jax.random.PRNGKey(0)
    kx, kp = jax.random.split(key)

    # node features and batch assignment
    x = jax.random.normal(kx, (N, in_ch), jnp.float32)
    batch = jnp.repeat(jnp.arange(num_graphs), nodes_per_graph)

    # edge_index: bidirectional ring inside each graph
    src, dst = [], []
    for g in range(num_graphs):
        off = g * nodes_per_graph
        for i in range(nodes_per_graph):
            j = (i + 1) % nodes_per_graph
            src += [off + i, off + j]
            dst += [off + j, off + i]
    edge_index = jnp.array([src, dst], dtype=jnp.int32)          # [2, E]

    # dense adjacency: adj[dst, src] = 1, plus self loops (GATv2 add_self_loops)
    adj = jnp.zeros((N, N), jnp.float32)
    adj = adj.at[edge_index[1], edge_index[0]].set(1.0)
    adj = adj.at[jnp.arange(N), jnp.arange(N)].set(1.0)
    adj_bf16 = adj.astype(jnp.bfloat16)   # 0/1 mask; streamed at half the bytes

    params = init_params(kp, in_ch, h1, h2, h3, heads)

    fwd = jax.jit(
        lambda x, adj_bf16, batch: simple_gat_forward(
            x, adj_bf16, batch, num_graphs, params, heads, h1, h2, h3, TILE_I
        )
    )
    out = fwd(x, adj_bf16, batch)
    jax.block_until_ready(out)
    assert out.shape == (num_graphs, 2)
    assert bool(jnp.all(jnp.isfinite(out)))
    print("KERNEL_OK")
</pallas_src>

<mosaic_0001>
module attributes {stable_mosaic.version = 11 : i64} {
  func.func @_gat_layer_kernel(%arg0: i32, %arg1: memref<16x4xf32, #tpu.memory_space<vmem>>, %arg2: memref<4x16xf32, #tpu.memory_space<vmem>>, %arg3: memref<4x16xf32, #tpu.memory_space<vmem>>, %arg4: memref<1x16xf32, #tpu.memory_space<vmem>>, %arg5: memref<1x16xf32, #tpu.memory_space<vmem>>, %arg6: memref<1x16xf32, #tpu.memory_space<vmem>>, %arg7: memref<1x16xf32, #tpu.memory_space<vmem>>, %arg8: memref<8x16xbf16, #tpu.memory_space<vmem>>, %arg9: memref<8x16xf32, #tpu.memory_space<vmem>>) attributes {dimension_semantics = [#tpu.dimension_semantics<parallel>], iteration_bounds = array<i64: 2>, scalar_prefetch = 0 : i64, scratch_operands = 0 : i64, tpu.core_type = #tpu.core_type<tc>, window_params = [{pipeline_mode = #tpu.pipeline_mode<synchronous>, transform_indices = @transform_0, window_bounds = array<i64: 16, 4>}, {pipeline_mode = #tpu.pipeline_mode<synchronous>, transform_indices = @transform_1, window_bounds = array<i64: 4, 16>}, {pipeline_mode = #tpu.pipeline_mode<synchronous>, transform_indices = @transform_2, window_bounds = array<i64: 4, 16>}, {pipeline_mode = #tpu.pipeline_mode<synchronous>, transform_indices = @transform_3, window_bounds = array<i64: 1, 16>}, {pipeline_mode = #tpu.pipeline_mode<synchronous>, transform_indices = @transform_4, window_bounds = array<i64: 1, 16>}, {pipeline_mode = #tpu.pipeline_mode<synchronous>, transform_indices = @transform_5, window_bounds = array<i64: 1, 16>}, {pipeline_mode = #tpu.pipeline_mode<synchronous>, transform_indices = @transform_6, window_bounds = array<i64: 1, 16>}, {transform_indices = @transform_7, window_bounds = array<i64: 8, 16>}, {transform_indices = @transform_8, window_bounds = array<i64: 8, 16>}]} {
    %c0 = arith.constant 0 : index
    %c0_0 = arith.constant 0 : index
    %0 = vector.load %arg1[%c0, %c0_0] : memref<16x4xf32, #tpu.memory_space<vmem>>, vector<16x4xf32>
    %1 = arith.truncf %0 : vector<16x4xf32> to vector<16x4xbf16>
    %c0_1 = arith.constant 0 : index
    %c0_2 = arith.constant 0 : index
    %2 = vector.load %arg2[%c0_1, %c0_2] : memref<4x16xf32, #tpu.memory_space<vmem>>, vector<4x16xf32>
    %3 = arith.truncf %2 : vector<4x16xf32> to vector<4x16xbf16>
    %c0_3 = arith.constant 0 : index
    %c0_4 = arith.constant 0 : index
    %4 = vector.load %arg3[%c0_3, %c0_4] : memref<4x16xf32, #tpu.memory_space<vmem>>, vector<4x16xf32>
    %5 = arith.truncf %4 : vector<4x16xf32> to vector<4x16xbf16>
    %cst = arith.constant dense<0.000000e+00> : vector<16x16xf32>
    %6 = tpu.matmul %1, %3, %cst {dimension_numbers = #tpu.dot_dimension_numbers<[1], [0], [0], [1], [0, 0, 1, 1], [], []>} : vector<16x4xbf16>, vector<4x16xbf16>, vector<16x16xf32> -> vector<16x16xf32>
    %c0_5 = arith.constant 0 : index
    %c0_6 = arith.constant 0 : index
    %7 = vector.load %arg4[%c0_5, %c0_6] : memref<1x16xf32, #tpu.memory_space<vmem>>, vector<1x16xf32>
    %8 = vector.broadcast %7 : vector<1x16xf32> to vector<16x16xf32>
    %9 = arith.addf %6, %8 : vector<16x16xf32>
    %c8_i32 = arith.constant 8 : i32
    %10 = arith.muli %arg0, %c8_i32 : i32
    %11 = tpu.assume_multiple %10, 8 : i32
    %12 = arith.index_cast %11 : i32 to index
    %c0_7 = arith.constant 0 : index
    %13 = vector.load %arg1[%12, %c0_7] : memref<16x4xf32, #tpu.memory_space<vmem>>, vector<8x4xf32>
    %14 = arith.truncf %13 : vector<8x4xf32> to vector<8x4xbf16>
    %cst_8 = arith.constant dense<0.000000e+00> : vector<8x16xf32>
    %15 = tpu.matmul %14, %5, %cst_8 {dimension_numbers = #tpu.dot_dimension_numbers<[1], [0], [0], [1], [0, 0, 1, 1], [], []>} : vector<8x4xbf16>, vector<4x16xbf16>, vector<8x16xf32> -> vector<8x16xf32>
    %c0_9 = arith.constant 0 : index
    %c0_10 = arith.constant 0 : index
    %16 = vector.load %arg5[%c0_9, %c0_10] : memref<1x16xf32, #tpu.memory_space<vmem>>, vector<1x16xf32>
    %17 = vector.broadcast %16 : vector<1x16xf32> to vector<8x16xf32>
    %18 = arith.addf %15, %17 : vector<8x16xf32>
    %c0_11 = arith.constant 0 : index
    %c0_12 = arith.constant 0 : index
    %19 = vector.load %arg8[%c0_11, %c0_12] : memref<8x16xbf16, #tpu.memory_space<vmem>>, vector<8x16xbf16>
    %20 = arith.extf %19 : vector<8x16xbf16> to vector<8x16xf32>
    %cst_13 = arith.constant 0.000000e+00 : f32
    %21 = vector.broadcast %cst_13 : f32 to vector<8x16xf32>
    %22 = arith.cmpf ogt, %20, %21 : vector<8x16xf32>
    %c0_14 = arith.constant 0 : index
    %c0_15 = arith.constant 0 : index
    %23 = vector.load %arg6[%c0_14, %c0_15] : memref<1x16xf32, #tpu.memory_space<vmem>>, vector<1x16xf32>
    %24 = vector.extract_strided_slice %9 {offsets = [0, 0], sizes = [16, 8], strides = [1, 1]} : vector<16x16xf32> to vector<16x8xf32>
    %25 = vector.extract_strided_slice %18 {offsets = [0, 0], sizes = [8, 8], strides = [1, 1]} : vector<8x16xf32> to vector<8x8xf32>
    %26 = vector.extract_strided_slice %23 {offsets = [0, 0], sizes = [1, 8], strides = [1, 1]} : vector<1x16xf32> to vector<1x8xf32>
    %27 = vector.shape_cast %25 : vector<8x8xf32> to vector<8x1x8xf32>
    %28 = vector.shape_cast %24 : vector<16x8xf32> to vector<1x16x8xf32>
    %29 = vector.broadcast %27 : vector<8x1x8xf32> to vector<8x16x8xf32>
    %30 = vector.broadcast %28 : vector<1x16x8xf32> to vector<8x16x8xf32>
    %31 = arith.addf %29, %30 : vector<8x16x8xf32>
    %cst_16 = arith.constant 0.000000e+00 : f32
    %32 = vector.broadcast %cst_16 : f32 to vector<8x16x8xf32>
    %33 = arith.cmpf ogt, %31, %32 : vector<8x16x8xf32>
    %cst_17 = arith.constant 2.000000e-01 : f32
    %34 = vector.broadcast %cst_17 : f32 to vector<8x16x8xf32>
    %35 = arith.mulf %34, %31 : vector<8x16x8xf32>
    %36 = arith.select %33, %31, %35 : vector<8x16x8xi1>, vector<8x16x8xf32>
    %37 = vector.shape_cast %26 : vector<1x8xf32> to vector<1x1x8xf32>
    %38 = vector.broadcast %37 : vector<1x1x8xf32> to vector<8x16x8xf32>
    %39 = arith.mulf %36, %38 : vector<8x16x8xf32>
    %cst_18 = arith.constant dense<0.000000e+00> : vector<8x16xf32>
    %40 = vector.multi_reduction <add>, %39, %cst_18 [2] : vector<8x16x8xf32> to vector<8x16xf32>
    %cst_19 = arith.constant -1.000000e+30 : f32
    %41 = vector.broadcast %cst_19 : f32 to vector<8x16xf32>
    %42 = arith.select %22, %40, %41 : vector<8x16xi1>, vector<8x16xf32>
    %cst_20 = arith.constant dense<0xFF800000> : vector<8xf32>
    %43 = vector.multi_reduction <maximumf>, %42, %cst_20 [1] : vector<8x16xf32> to vector<8xf32>
    %44 = vector.shape_cast %43 : vector<8xf32> to vector<8x1xf32>
    %45 = vector.broadcast %44 : vector<8x1xf32> to vector<8x16xf32>
    %46 = arith.subf %42, %45 : vector<8x16xf32>
    %47 = math.exp %46 : vector<8x16xf32>
    %cst_21 = arith.constant 0.000000e+00 : f32
    %48 = vector.broadcast %cst_21 : f32 to vector<8x16xf32>
    %49 = arith.select %22, %47, %48 : vector<8x16xi1>, vector<8x16xf32>
    %cst_22 = arith.constant dense<0.000000e+00> : vector<8xf32>
    %50 = vector.multi_reduction <add>, %49, %cst_22 [1] : vector<8x16xf32> to vector<8xf32>
    %51 = vector.shape_cast %50 : vector<8xf32> to vector<8x1xf32>
    %cst_23 = arith.constant 9.99999968E-21 : f32
    %52 = vector.broadcast %cst_23 : f32 to vector<8x1xf32>
    %53 = arith.maximumf %51, %52 : vector<8x1xf32>
    %54 = tpu.reciprocal %53 {approx = true} : vector<8x1xf32> -> vector<8x1xf32>
    %55 = arith.truncf %49 : vector<8x16xf32> to vector<8x16xbf16>
    %56 = arith.truncf %24 : vector<16x8xf32> to vector<16x8xbf16>
    %cst_24 = arith.constant dense<0.000000e+00> : vector<8x8xf32>
    %57 = tpu.matmul %55, %56, %cst_24 {dimension_numbers = #tpu.dot_dimension_numbers<[1], [0], [0], [1], [0, 0, 1, 1], [], []>} : vector<8x16xbf16>, vector<16x8xbf16>, vector<8x8xf32> -> vector<8x8xf32>
    %58 = vector.broadcast %54 : vector<8x1xf32> to vector<8x8xf32>
    %59 = arith.mulf %57, %58 : vector<8x8xf32>
    %60 = vector.extract_strided_slice %9 {offsets = [0, 8], sizes = [16, 8], strides = [1, 1]} : vector<16x16xf32> to vector<16x8xf32>
    %61 = vector.extract_strided_slice %18 {offsets = [0, 8], sizes = [8, 8], strides = [1, 1]} : vector<8x16xf32> to vector<8x8xf32>
    %62 = vector.extract_strided_slice %23 {offsets = [0, 8], sizes = [1, 8], strides = [1, 1]} : vector<1x16xf32> to vector<1x8xf32>
    %63 = vector.shape_cast %61 : vector<8x8xf32> to vector<8x1x8xf32>
    %64 = vector.shape_cast %60 : vector<16x8xf32> to vector<1x16x8xf32>
    %65 = vector.broadcast %63 : vector<8x1x8xf32> to vector<8x16x8xf32>
    %66 = vector.broadcast %64 : vector<1x16x8xf32> to vector<8x16x8xf32>
    %67 = arith.addf %65, %66 : vector<8x16x8xf32>
    %cst_25 = arith.constant 0.000000e+00 : f32
    %68 = vector.broadcast %cst_25 : f32 to vector<8x16x8xf32>
    %69 = arith.cmpf ogt, %67, %68 : vector<8x16x8xf32>
    %cst_26 = arith.constant 2.000000e-01 : f32
    %70 = vector.broadcast %cst_26 : f32 to vector<8x16x8xf32>
    %71 = arith.mulf %70, %67 : vector<8x16x8xf32>
    %72 = arith.select %69, %67, %71 : vector<8x16x8xi1>, vector<8x16x8xf32>
    %73 = vector.shape_cast %62 : vector<1x8xf32> to vector<1x1x8xf32>
    %74 = vector.broadcast %73 : vector<1x1x8xf32> to vector<8x16x8xf32>
    %75 = arith.mulf %72, %74 : vector<8x16x8xf32>
    %cst_27 = arith.constant dense<0.000000e+00> : vector<8x16xf32>
    %76 = vector.multi_reduction <add>, %75, %cst_27 [2] : vector<8x16x8xf32> to vector<8x16xf32>
    %cst_28 = arith.constant -1.000000e+30 : f32
    %77 = vector.broadcast %cst_28 : f32 to vector<8x16xf32>
    %78 = arith.select %22, %76, %77 : vector<8x16xi1>, vector<8x16xf32>
    %cst_29 = arith.constant dense<0xFF800000> : vector<8xf32>
    %79 = vector.multi_reduction <maximumf>, %78, %cst_29 [1] : vector<8x16xf32> to vector<8xf32>
    %80 = vector.shape_cast %79 : vector<8xf32> to vector<8x1xf32>
    %81 = vector.broadcast %80 : vector<8x1xf32> to vector<8x16xf32>
    %82 = arith.subf %78, %81 : vector<8x16xf32>
    %83 = math.exp %82 : vector<8x16xf32>
    %cst_30 = arith.constant 0.000000e+00 : f32
    %84 = vector.broadcast %cst_30 : f32 to vector<8x16xf32>
    %85 = arith.select %22, %83, %84 : vector<8x16xi1>, vector<8x16xf32>
    %cst_31 = arith.constant dense<0.000000e+00> : vector<8xf32>
    %86 = vector.multi_reduction <add>, %85, %cst_31 [1] : vector<8x16xf32> to vector<8xf32>
    %87 = vector.shape_cast %86 : vector<8xf32> to vector<8x1xf32>
    %cst_32 = arith.constant 9.99999968E-21 : f32
    %88 = vector.broadcast %cst_32 : f32 to vector<8x1xf32>
    %89 = arith.maximumf %87, %88 : vector<8x1xf32>
    %90 = tpu.reciprocal %89 {approx = true} : vector<8x1xf32> -> vector<8x1xf32>
    %91 = arith.truncf %85 : vector<8x16xf32> to vector<8x16xbf16>
    %92 = arith.truncf %60 : vector<16x8xf32> to vector<16x8xbf16>
    %cst_33 = arith.constant dense<0.000000e+00> : vector<8x8xf32>
    %93 = tpu.matmul %91, %92, %cst_33 {dimension_numbers = #tpu.dot_dimension_numbers<[1], [0], [0], [1], [0, 0, 1, 1], [], []>} : vector<8x16xbf16>, vector<16x8xbf16>, vector<8x8xf32> -> vector<8x8xf32>
    %94 = vector.broadcast %90 : vector<8x1xf32> to vector<8x8xf32>
    %95 = arith.mulf %93, %94 : vector<8x8xf32>
    %96 = tpu.concatenate %59, %95 in 1 : vector<8x8xf32>, vector<8x8xf32> -> vector<8x16xf32>
    %c0_34 = arith.constant 0 : index
    %c0_35 = arith.constant 0 : index
    %97 = vector.load %arg7[%c0_34, %c0_35] : memref<1x16xf32, #tpu.memory_space<vmem>>, vector<1x16xf32>
    %98 = vector.broadcast %97 : vector<1x16xf32> to vector<8x16xf32>
    %99 = arith.addf %96, %98 : vector<8x16xf32>
    %c0_36 = arith.constant 0 : index
    %c0_37 = arith.constant 0 : index
    %100 = vector.load %arg9[%c0_36, %c0_37] : memref<8x16xf32, #tpu.memory_space<vmem>>, vector<8x16xf32>
    tpu.vector_store %arg9[%c0_36, %c0_37], %99 {strides = array<i32>} : memref<8x16xf32, #tpu.memory_space<vmem>>, vector<8x16xf32>,
    return
  }
  func.func @transform_0(%arg0: i32) -> (i32, i32) {
    %c0_i32 = arith.constant 0 : i32
    %c0_i32_0 = arith.constant 0 : i32
    %c0_i32_1 = arith.constant 0 : i32
    return %c0_i32, %c0_i32_0 : i32, i32
  }
  func.func @transform_1(%arg0: i32) -> (i32, i32) {
    %c0_i32 = arith.constant 0 : i32
    %c0_i32_0 = arith.constant 0 : i32
    %c0_i32_1 = arith.constant 0 : i32
    return %c0_i32, %c0_i32_0 : i32, i32
  }
  func.func @transform_2(%arg0: i32) -> (i32, i32) {
    %c0_i32 = arith.constant 0 : i32
    %c0_i32_0 = arith.constant 0 : i32
    %c0_i32_1 = arith.constant 0 : i32
    return %c0_i32, %c0_i32_0 : i32, i32
  }
  func.func @transform_3(%arg0: i32) -> (i32, i32) {
    %c0_i32 = arith.constant 0 : i32
    %c0_i32_0 = arith.constant 0 : i32
    %c0_i32_1 = arith.constant 0 : i32
    return %c0_i32, %c0_i32_0 : i32, i32
  }
  func.func @transform_4(%arg0: i32) -> (i32, i32) {
    %c0_i32 = arith.constant 0 : i32
    %c0_i32_0 = arith.constant 0 : i32
    %c0_i32_1 = arith.constant 0 : i32
    return %c0_i32, %c0_i32_0 : i32, i32
  }
  func.func @transform_5(%arg0: i32) -> (i32, i32) {
    %c0_i32 = arith.constant 0 : i32
    %c0_i32_0 = arith.constant 0 : i32
    %c0_i32_1 = arith.constant 0 : i32
    return %c0_i32, %c0_i32_0 : i32, i32
  }
  func.func @transform_6(%arg0: i32) -> (i32, i32) {
    %c0_i32 = arith.constant 0 : i32
    %c0_i32_0 = arith.constant 0 : i32
    %c0_i32_1 = arith.constant 0 : i32
    return %c0_i32, %c0_i32_0 : i32, i32
  }
  func.func @transform_7(%arg0: i32) -> (i32, i32) {
    %c0_i32 = arith.constant 0 : i32
    %c0_i32_0 = arith.constant 0 : i32
    return %arg0, %c0_i32 : i32, i32
  }
  func.func @transform_8(%arg0: i32) -> (i32, i32) {
    %c0_i32 = arith.constant 0 : i32
    %c0_i32_0 = arith.constant 0 : i32
    return %arg0, %c0_i32 : i32, i32
  }
}

module attributes {stable_mosaic.version = 11 : i64} {
  func.func @_gat_layer_kernel(%arg0: i32, %arg1: memref<16x16xf32, #tpu.memory_space<vmem>>, %arg2: memref<16x16xf32, #tpu.memory_space<vmem>>, %arg3: memref<16x16xf32, #tpu.memory_space<vmem>>, %arg4: memref<1x16xf32, #tpu.memory_space<vmem>>, %arg5: memref<1x16xf32, #tpu.memory_space<vmem>>, %arg6: memref<1x16xf32, #tpu.memory_space<vmem>>, %arg7: memref<1x16xf32, #tpu.memory_space<vmem>>, %arg8: memref<8x16xbf16, #tpu.memory_space<vmem>>, %arg9: memref<8x16xf32, #tpu.memory_space<vmem>>) attributes {dimension_semantics = [#tpu.dimension_semantics<parallel>], iteration_bounds = array<i64: 2>, scalar_prefetch = 0 : i64, scratch_operands = 0 : i64, tpu.core_type = #tpu.core_type<tc>, window_params = [{pipeline_mode = #tpu.pipeline_mode<synchronous>, transform_indices = @transform_0, window_bounds = array<i64: 16, 16>}, {pipeline_mode = #tpu.pipeline_mode<synchronous>, transform_indices = @transform_1, window_bounds = array<i64: 16, 16>}, {pipeline_mode = #tpu.pipeline_mode<synchronous>, transform_indices = @transform_2, window_bounds = array<i64: 16, 16>}, {pipeline_mode = #tpu.pipeline_mode<synchronous>, transform_indices = @transform_3, window_bounds = array<i64: 1, 16>}, {pipeline_mode = #tpu.pipeline_mode<synchronous>, transform_indices = @transform_4, window_bounds = array<i64: 1, 16>}, {pipeline_mode = #tpu.pipeline_mode<synchronous>, transform_indices = @transform_5, window_bounds = array<i64: 1, 16>}, {pipeline_mode = #tpu.pipeline_mode<synchronous>, transform_indices = @transform_6, window_bounds = array<i64: 1, 16>}, {transform_indices = @transform_7, window_bounds = array<i64: 8, 16>}, {transform_indices = @transform_8, window_bounds = array<i64: 8, 16>}]} {
    %c0 = arith.constant 0 : index
    %c0_0 = arith.constant 0 : index
    %0 = vector.load %arg1[%c0, %c0_0] : memref<16x16xf32, #tpu.memory_space<vmem>>, vector<16x16xf32>
    %1 = arith.truncf %0 : vector<16x16xf32> to vector<16x16xbf16>
    %c0_1 = arith.constant 0 : index
    %c0_2 = arith.constant 0 : index
    %2 = vector.load %arg2[%c0_1, %c0_2] : memref<16x16xf32, #tpu.memory_space<vmem>>, vector<16x16xf32>
    %3 = arith.truncf %2 : vector<16x16xf32> to vector<16x16xbf16>
    %c0_3 = arith.constant 0 : index
    %c0_4 = arith.constant 0 : index
    %4 = vector.load %arg3[%c0_3, %c0_4] : memref<16x16xf32, #tpu.memory_space<vmem>>, vector<16x16xf32>
    %5 = arith.truncf %4 : vector<16x16xf32> to vector<16x16xbf16>
    %cst = arith.constant dense<0.000000e+00> : vector<16x16xf32>
    %6 = tpu.matmul %1, %3, %cst {dimension_numbers = #tpu.dot_dimension_numbers<[1], [0], [0], [1], [0, 0, 1, 1], [], []>} : vector<16x16xbf16>, vector<16x16xbf16>, vector<16x16xf32> -> vector<16x16xf32>
    %c0_5 = arith.constant 0 : index
    %c0_6 = arith.constant 0 : index
    %7 = vector.load %arg4[%c0_5, %c0_6] : memref<1x16xf32, #tpu.memory_space<vmem>>, vector<1x16xf32>
    %8 = vector.broadcast %7 : vector<1x16xf32> to vector<16x16xf32>
    %9 = arith.addf %6, %8 : vector<16x16xf32>
    %c8_i32 = arith.constant 8 : i32
    %10 = arith.muli %arg0, %c8_i32 : i32
    %11 = tpu.assume_multiple %10, 8 : i32
    %12 = arith.index_cast %11 : i32 to index
    %c0_7 = arith.constant 0 : index
    %13 = vector.load %arg1[%12, %c0_7] : memref<16x16xf32, #tpu.memory_space<vmem>>, vector<8x16xf32>
    %14 = arith.truncf %13 : vector<8x16xf32> to vector<8x16xbf16>
    %cst_8 = arith.constant dense<0.000000e+00> : vector<8x16xf32>
    %15 = tpu.matmul %14, %5, %cst_8 {dimension_numbers = #tpu.dot_dimension_numbers<[1], [0], [0], [1], [0, 0, 1, 1], [], []>} : vector<8x16xbf16>, vector<16x16xbf16>, vector<8x16xf32> -> vector<8x16xf32>
    %c0_9 = arith.constant 0 : index
    %c0_10 = arith.constant 0 : index
    %16 = vector.load %arg5[%c0_9, %c0_10] : memref<1x16xf32, #tpu.memory_space<vmem>>, vector<1x16xf32>
    %17 = vector.broadcast %16 : vector<1x16xf32> to vector<8x16xf32>
    %18 = arith.addf %15, %17 : vector<8x16xf32>
    %c0_11 = arith.constant 0 : index
    %c0_12 = arith.constant 0 : index
    %19 = vector.load %arg8[%c0_11, %c0_12] : memref<8x16xbf16, #tpu.memory_space<vmem>>, vector<8x16xbf16>
    %20 = arith.extf %19 : vector<8x16xbf16> to vector<8x16xf32>
    %cst_13 = arith.constant 0.000000e+00 : f32
    %21 = vector.broadcast %cst_13 : f32 to vector<8x16xf32>
    %22 = arith.cmpf ogt, %20, %21 : vector<8x16xf32>
    %c0_14 = arith.constant 0 : index
    %c0_15 = arith.constant 0 : index
    %23 = vector.load %arg6[%c0_14, %c0_15] : memref<1x16xf32, #tpu.memory_space<vmem>>, vector<1x16xf32>
    %24 = vector.extract_strided_slice %9 {offsets = [0, 0], sizes = [16, 8], strides = [1, 1]} : vector<16x16xf32> to vector<16x8xf32>
    %25 = vector.extract_strided_slice %18 {offsets = [0, 0], sizes = [8, 8], strides = [1, 1]} : vector<8x16xf32> to vector<8x8xf32>
    %26 = vector.extract_strided_slice %23 {offsets = [0, 0], sizes = [1, 8], strides = [1, 1]} : vector<1x16xf32> to vector<1x8xf32>
    %27 = vector.shape_cast %25 : vector<8x8xf32> to vector<8x1x8xf32>
    %28 = vector.shape_cast %24 : vector<16x8xf32> to vector<1x16x8xf32>
    %29 = vector.broadcast %27 : vector<8x1x8xf32> to vector<8x16x8xf32>
    %30 = vector.broadcast %28 : vector<1x16x8xf32> to vector<8x16x8xf32>
    %31 = arith.addf %29, %30 : vector<8x16x8xf32>
    %cst_16 = arith.constant 0.000000e+00 : f32
    %32 = vector.broadcast %cst_16 : f32 to vector<8x16x8xf32>
    %33 = arith.cmpf ogt, %31, %32 : vector<8x16x8xf32>
    %cst_17 = arith.constant 2.000000e-01 : f32
    %34 = vector.broadcast %cst_17 : f32 to vector<8x16x8xf32>
    %35 = arith.mulf %34, %31 : vector<8x16x8xf32>
    %36 = arith.select %33, %31, %35 : vector<8x16x8xi1>, vector<8x16x8xf32>
    %37 = vector.shape_cast %26 : vector<1x8xf32> to vector<1x1x8xf32>
    %38 = vector.broadcast %37 : vector<1x1x8xf32> to vector<8x16x8xf32>
    %39 = arith.mulf %36, %38 : vector<8x16x8xf32>
    %cst_18 = arith.constant dense<0.000000e+00> : vector<8x16xf32>
    %40 = vector.multi_reduction <add>, %39, %cst_18 [2] : vector<8x16x8xf32> to vector<8x16xf32>
    %cst_19 = arith.constant -1.000000e+30 : f32
    %41 = vector.broadcast %cst_19 : f32 to vector<8x16xf32>
    %42 = arith.select %22, %40, %41 : vector<8x16xi1>, vector<8x16xf32>
    %cst_20 = arith.constant dense<0xFF800000> : vector<8xf32>
    %43 = vector.multi_reduction <maximumf>, %42, %cst_20 [1] : vector<8x16xf32> to vector<8xf32>
    %44 = vector.shape_cast %43 : vector<8xf32> to vector<8x1xf32>
    %45 = vector.broadcast %44 : vector<8x1xf32> to vector<8x16xf32>
    %46 = arith.subf %42, %45 : vector<8x16xf32>
    %47 = math.exp %46 : vector<8x16xf32>
    %cst_21 = arith.constant 0.000000e+00 : f32
    %48 = vector.broadcast %cst_21 : f32 to vector<8x16xf32>
    %49 = arith.select %22, %47, %48 : vector<8x16xi1>, vector<8x16xf32>
    %cst_22 = arith.constant dense<0.000000e+00> : vector<8xf32>
    %50 = vector.multi_reduction <add>, %49, %cst_22 [1] : vector<8x16xf32> to vector<8xf32>
    %51 = vector.shape_cast %50 : vector<8xf32> to vector<8x1xf32>
    %cst_23 = arith.constant 9.99999968E-21 : f32
    %52 = vector.broadcast %cst_23 : f32 to vector<8x1xf32>
    %53 = arith.maximumf %51, %52 : vector<8x1xf32>
    %54 = tpu.reciprocal %53 {approx = true} : vector<8x1xf32> -> vector<8x1xf32>
    %55 = arith.truncf %49 : vector<8x16xf32> to vector<8x16xbf16>
    %56 = arith.truncf %24 : vector<16x8xf32> to vector<16x8xbf16>
    %cst_24 = arith.constant dense<0.000000e+00> : vector<8x8xf32>
    %57 = tpu.matmul %55, %56, %cst_24 {dimension_numbers = #tpu.dot_dimension_numbers<[1], [0], [0], [1], [0, 0, 1, 1], [], []>} : vector<8x16xbf16>, vector<16x8xbf16>, vector<8x8xf32> -> vector<8x8xf32>
    %58 = vector.broadcast %54 : vector<8x1xf32> to vector<8x8xf32>
    %59 = arith.mulf %57, %58 : vector<8x8xf32>
    %60 = vector.extract_strided_slice %9 {offsets = [0, 8], sizes = [16, 8], strides = [1, 1]} : vector<16x16xf32> to vector<16x8xf32>
    %61 = vector.extract_strided_slice %18 {offsets = [0, 8], sizes = [8, 8], strides = [1, 1]} : vector<8x16xf32> to vector<8x8xf32>
    %62 = vector.extract_strided_slice %23 {offsets = [0, 8], sizes = [1, 8], strides = [1, 1]} : vector<1x16xf32> to vector<1x8xf32>
    %63 = vector.shape_cast %61 : vector<8x8xf32> to vector<8x1x8xf32>
    %64 = vector.shape_cast %60 : vector<16x8xf32> to vector<1x16x8xf32>
    %65 = vector.broadcast %63 : vector<8x1x8xf32> to vector<8x16x8xf32>
    %66 = vector.broadcast %64 : vector<1x16x8xf32> to vector<8x16x8xf32>
    %67 = arith.addf %65, %66 : vector<8x16x8xf32>
    %cst_25 = arith.constant 0.000000e+00 : f32
    %68 = vector.broadcast %cst_25 : f32 to vector<8x16x8xf32>
    %69 = arith.cmpf ogt, %67, %68 : vector<8x16x8xf32>
    %cst_26 = arith.constant 2.000000e-01 : f32
    %70 = vector.broadcast %cst_26 : f32 to vector<8x16x8xf32>
    %71 = arith.mulf %70, %67 : vector<8x16x8xf32>
    %72 = arith.select %69, %67, %71 : vector<8x16x8xi1>, vector<8x16x8xf32>
    %73 = vector.shape_cast %62 : vector<1x8xf32> to vector<1x1x8xf32>
    %74 = vector.broadcast %73 : vector<1x1x8xf32> to vector<8x16x8xf32>
    %75 = arith.mulf %72, %74 : vector<8x16x8xf32>
    %cst_27 = arith.constant dense<0.000000e+00> : vector<8x16xf32>
    %76 = vector.multi_reduction <add>, %75, %cst_27 [2] : vector<8x16x8xf32> to vector<8x16xf32>
    %cst_28 = arith.constant -1.000000e+30 : f32
    %77 = vector.broadcast %cst_28 : f32 to vector<8x16xf32>
    %78 = arith.select %22, %76, %77 : vector<8x16xi1>, vector<8x16xf32>
    %cst_29 = arith.constant dense<0xFF800000> : vector<8xf32>
    %79 = vector.multi_reduction <maximumf>, %78, %cst_29 [1] : vector<8x16xf32> to vector<8xf32>
    %80 = vector.shape_cast %79 : vector<8xf32> to vector<8x1xf32>
    %81 = vector.broadcast %80 : vector<8x1xf32> to vector<8x16xf32>
    %82 = arith.subf %78, %81 : vector<8x16xf32>
    %83 = math.exp %82 : vector<8x16xf32>
    %cst_30 = arith.constant 0.000000e+00 : f32
    %84 = vector.broadcast %cst_30 : f32 to vector<8x16xf32>
    %85 = arith.select %22, %83, %84 : vector<8x16xi1>, vector<8x16xf32>
    %cst_31 = arith.constant dense<0.000000e+00> : vector<8xf32>
    %86 = vector.multi_reduction <add>, %85, %cst_31 [1] : vector<8x16xf32> to vector<8xf32>
    %87 = vector.shape_cast %86 : vector<8xf32> to vector<8x1xf32>
    %cst_32 = arith.constant 9.99999968E-21 : f32
    %88 = vector.broadcast %cst_32 : f32 to vector<8x1xf32>
    %89 = arith.maximumf %87, %88 : vector<8x1xf32>
    %90 = tpu.reciprocal %89 {approx = true} : vector<8x1xf32> -> vector<8x1xf32>
    %91 = arith.truncf %85 : vector<8x16xf32> to vector<8x16xbf16>
    %92 = arith.truncf %60 : vector<16x8xf32> to vector<16x8xbf16>
    %cst_33 = arith.constant dense<0.000000e+00> : vector<8x8xf32>
    %93 = tpu.matmul %91, %92, %cst_33 {dimension_numbers = #tpu.dot_dimension_numbers<[1], [0], [0], [1], [0, 0, 1, 1], [], []>} : vector<8x16xbf16>, vector<16x8xbf16>, vector<8x8xf32> -> vector<8x8xf32>
    %94 = vector.broadcast %90 : vector<8x1xf32> to vector<8x8xf32>
    %95 = arith.mulf %93, %94 : vector<8x8xf32>
    %96 = tpu.concatenate %59, %95 in 1 : vector<8x8xf32>, vector<8x8xf32> -> vector<8x16xf32>
    %c0_34 = arith.constant 0 : index
    %c0_35 = arith.constant 0 : index
    %97 = vector.load %arg7[%c0_34, %c0_35] : memref<1x16xf32, #tpu.memory_space<vmem>>, vector<1x16xf32>
    %98 = vector.broadcast %97 : vector<1x16xf32> to vector<8x16xf32>
    %99 = arith.addf %96, %98 : vector<8x16xf32>
    %c0_36 = arith.constant 0 : index
    %c0_37 = arith.constant 0 : index
    %100 = vector.load %arg9[%c0_36, %c0_37] : memref<8x16xf32, #tpu.memory_space<vmem>>, vector<8x16xf32>
    tpu.vector_store %arg9[%c0_36, %c0_37], %99 {strides = array<i32>} : memref<8x16xf32, #tpu.memory_space<vmem>>, vector<8x16xf32>,
    return
  }
  func.func @transform_0(%arg0: i32) -> (i32, i32) {
    %c0_i32 = arith.constant 0 : i32
    %c0_i32_0 = arith.constant 0 : i32
    %c0_i32_1 = arith.constant 0 : i32
    return %c0_i32, %c0_i32_0 : i32, i32
  }
  func.func @transform_1(%arg0: i32) -> (i32, i32) {
    %c0_i32 = arith.constant 0 : i32
    %c0_i32_0 = arith.constant 0 : i32
    %c0_i32_1 = arith.constant 0 : i32
    return %c0_i32, %c0_i32_0 : i32, i32
  }
  func.func @transform_2(%arg0: i32) -> (i32, i32) {
    %c0_i32 = arith.constant 0 : i32
    %c0_i32_0 = arith.constant 0 : i32
    %c0_i32_1 = arith.constant 0 : i32
    return %c0_i32, %c0_i32_0 : i32, i32
  }
  func.func @transform_3(%arg0: i32) -> (i32, i32) {
    %c0_i32 = arith.constant 0 : i32
    %c0_i32_0 = arith.constant 0 : i32
    %c0_i32_1 = arith.constant 0 : i32
    return %c0_i32, %c0_i32_0 : i32, i32
  }
  func.func @transform_4(%arg0: i32) -> (i32, i32) {
    %c0_i32 = arith.constant 0 : i32
    %c0_i32_0 = arith.constant 0 : i32
    %c0_i32_1 = arith.constant 0 : i32
    return %c0_i32, %c0_i32_0 : i32, i32
  }
  func.func @transform_5(%arg0: i32) -> (i32, i32) {
    %c0_i32 = arith.constant 0 : i32
    %c0_i32_0 = arith.constant 0 : i32
    %c0_i32_1 = arith.constant 0 : i32
    return %c0_i32, %c0_i32_0 : i32, i32
  }
  func.func @transform_6(%arg0: i32) -> (i32, i32) {
    %c0_i32 = arith.constant 0 : i32
    %c0_i32_0 = arith.constant 0 : i32
    %c0_i32_1 = arith.constant 0 : i32
    return %c0_i32, %c0_i32_0 : i32, i32
  }
  func.func @transform_7(%arg0: i32) -> (i32, i32) {
    %c0_i32 = arith.constant 0 : i32
    %c0_i32_0 = arith.constant 0 : i32
    return %arg0, %c0_i32 : i32, i32
  }
  func.func @transform_8(%arg0: i32) -> (i32, i32) {
    %c0_i32 = arith.constant 0 : i32
    %c0_i32_0 = arith.constant 0 : i32
    return %arg0, %c0_i32 : i32, i32
  }
}

module attributes {stable_mosaic.version = 11 : i64} {
  func.func @_gat_layer_kernel(%arg0: i32, %arg1: memref<16x16xf32, #tpu.memory_space<vmem>>, %arg2: memref<16x16xf32, #tpu.memory_space<vmem>>, %arg3: memref<16x16xf32, #tpu.memory_space<vmem>>, %arg4: memref<1x16xf32, #tpu.memory_space<vmem>>, %arg5: memref<1x16xf32, #tpu.memory_space<vmem>>, %arg6: memref<1x16xf32, #tpu.memory_space<vmem>>, %arg7: memref<1x8xf32, #tpu.memory_space<vmem>>, %arg8: memref<8x16xbf16, #tpu.memory_space<vmem>>, %arg9: memref<8x8xf32, #tpu.memory_space<vmem>>) attributes {dimension_semantics = [#tpu.dimension_semantics<parallel>], iteration_bounds = array<i64: 2>, scalar_prefetch = 0 : i64, scratch_operands = 0 : i64, tpu.core_type = #tpu.core_type<tc>, window_params = [{pipeline_mode = #tpu.pipeline_mode<synchronous>, transform_indices = @transform_0, window_bounds = array<i64: 16, 16>}, {pipeline_mode = #tpu.pipeline_mode<synchronous>, transform_indices = @transform_1, window_bounds = array<i64: 16, 16>}, {pipeline_mode = #tpu.pipeline_mode<synchronous>, transform_indices = @transform_2, window_bounds = array<i64: 16, 16>}, {pipeline_mode = #tpu.pipeline_mode<synchronous>, transform_indices = @transform_3, window_bounds = array<i64: 1, 16>}, {pipeline_mode = #tpu.pipeline_mode<synchronous>, transform_indices = @transform_4, window_bounds = array<i64: 1, 16>}, {pipeline_mode = #tpu.pipeline_mode<synchronous>, transform_indices = @transform_5, window_bounds = array<i64: 1, 16>}, {pipeline_mode = #tpu.pipeline_mode<synchronous>, transform_indices = @transform_6, window_bounds = array<i64: 1, 8>}, {transform_indices = @transform_7, window_bounds = array<i64: 8, 16>}, {transform_indices = @transform_8, window_bounds = array<i64: 8, 8>}]} {
    %c0 = arith.constant 0 : index
    %c0_0 = arith.constant 0 : index
    %0 = vector.load %arg1[%c0, %c0_0] : memref<16x16xf32, #tpu.memory_space<vmem>>, vector<16x16xf32>
    %1 = arith.truncf %0 : vector<16x16xf32> to vector<16x16xbf16>
    %c0_1 = arith.constant 0 : index
    %c0_2 = arith.constant 0 : index
    %2 = vector.load %arg2[%c0_1, %c0_2] : memref<16x16xf32, #tpu.memory_space<vmem>>, vector<16x16xf32>
    %3 = arith.truncf %2 : vector<16x16xf32> to vector<16x16xbf16>
    %c0_3 = arith.constant 0 : index
    %c0_4 = arith.constant 0 : index
    %4 = vector.load %arg3[%c0_3, %c0_4] : memref<16x16xf32, #tpu.memory_space<vmem>>, vector<16x16xf32>
    %5 = arith.truncf %4 : vector<16x16xf32> to vector<16x16xbf16>
    %cst = arith.constant dense<0.000000e+00> : vector<16x16xf32>
    %6 = tpu.matmul %1, %3, %cst {dimension_numbers = #tpu.dot_dimension_numbers<[1], [0], [0], [1], [0, 0, 1, 1], [], []>} : vector<16x16xbf16>, vector<16x16xbf16>, vector<16x16xf32> -> vector<16x16xf32>
    %c0_5 = arith.constant 0 : index
    %c0_6 = arith.constant 0 : index
    %7 = vector.load %arg4[%c0_5, %c0_6] : memref<1x16xf32, #tpu.memory_space<vmem>>, vector<1x16xf32>
    %8 = vector.broadcast %7 : vector<1x16xf32> to vector<16x16xf32>
    %9 = arith.addf %6, %8 : vector<16x16xf32>
    %c8_i32 = arith.constant 8 : i32
    %10 = arith.muli %arg0, %c8_i32 : i32
    %11 = tpu.assume_multiple %10, 8 : i32
    %12 = arith.index_cast %11 : i32 to index
    %c0_7 = arith.constant 0 : index
    %13 = vector.load %arg1[%12, %c0_7] : memref<16x16xf32, #tpu.memory_space<vmem>>, vector<8x16xf32>
    %14 = arith.truncf %13 : vector<8x16xf32> to vector<8x16xbf16>
    %cst_8 = arith.constant dense<0.000000e+00> : vector<8x16xf32>
    %15 = tpu.matmul %14, %5, %cst_8 {dimension_numbers = #tpu.dot_dimension_numbers<[1], [0], [0], [1], [0, 0, 1, 1], [], []>} : vector<8x16xbf16>, vector<16x16xbf16>, vector<8x16xf32> -> vector<8x16xf32>
    %c0_9 = arith.constant 0 : index
    %c0_10 = arith.constant 0 : index
    %16 = vector.load %arg5[%c0_9, %c0_10] : memref<1x16xf32, #tpu.memory_space<vmem>>, vector<1x16xf32>
    %17 = vector.broadcast %16 : vector<1x16xf32> to vector<8x16xf32>
    %18 = arith.addf %15, %17 : vector<8x16xf32>
    %c0_11 = arith.constant 0 : index
    %c0_12 = arith.constant 0 : index
    %19 = vector.load %arg8[%c0_11, %c0_12] : memref<8x16xbf16, #tpu.memory_space<vmem>>, vector<8x16xbf16>
    %20 = arith.extf %19 : vector<8x16xbf16> to vector<8x16xf32>
    %cst_13 = arith.constant 0.000000e+00 : f32
    %21 = vector.broadcast %cst_13 : f32 to vector<8x16xf32>
    %22 = arith.cmpf ogt, %20, %21 : vector<8x16xf32>
    %c0_14 = arith.constant 0 : index
    %c0_15 = arith.constant 0 : index
    %23 = vector.load %arg6[%c0_14, %c0_15] : memref<1x16xf32, #tpu.memory_space<vmem>>, vector<1x16xf32>
    %24 = vector.extract_strided_slice %9 {offsets = [0, 0], sizes = [16, 8], strides = [1, 1]} : vector<16x16xf32> to vector<16x8xf32>
    %25 = vector.extract_strided_slice %18 {offsets = [0, 0], sizes = [8, 8], strides = [1, 1]} : vector<8x16xf32> to vector<8x8xf32>
    %26 = vector.extract_strided_slice %23 {offsets = [0, 0], sizes = [1, 8], strides = [1, 1]} : vector<1x16xf32> to vector<1x8xf32>
    %27 = vector.shape_cast %25 : vector<8x8xf32> to vector<8x1x8xf32>
    %28 = vector.shape_cast %24 : vector<16x8xf32> to vector<1x16x8xf32>
    %29 = vector.broadcast %27 : vector<8x1x8xf32> to vector<8x16x8xf32>
    %30 = vector.broadcast %28 : vector<1x16x8xf32> to vector<8x16x8xf32>
    %31 = arith.addf %29, %30 : vector<8x16x8xf32>
    %cst_16 = arith.constant 0.000000e+00 : f32
    %32 = vector.broadcast %cst_16 : f32 to vector<8x16x8xf32>
    %33 = arith.cmpf ogt, %31, %32 : vector<8x16x8xf32>
    %cst_17 = arith.constant 2.000000e-01 : f32
    %34 = vector.broadcast %cst_17 : f32 to vector<8x16x8xf32>
    %35 = arith.mulf %34, %31 : vector<8x16x8xf32>
    %36 = arith.select %33, %31, %35 : vector<8x16x8xi1>, vector<8x16x8xf32>
    %37 = vector.shape_cast %26 : vector<1x8xf32> to vector<1x1x8xf32>
    %38 = vector.broadcast %37 : vector<1x1x8xf32> to vector<8x16x8xf32>
    %39 = arith.mulf %36, %38 : vector<8x16x8xf32>
    %cst_18 = arith.constant dense<0.000000e+00> : vector<8x16xf32>
    %40 = vector.multi_reduction <add>, %39, %cst_18 [2] : vector<8x16x8xf32> to vector<8x16xf32>
    %cst_19 = arith.constant -1.000000e+30 : f32
    %41 = vector.broadcast %cst_19 : f32 to vector<8x16xf32>
    %42 = arith.select %22, %40, %41 : vector<8x16xi1>, vector<8x16xf32>
    %cst_20 = arith.constant dense<0xFF800000> : vector<8xf32>
    %43 = vector.multi_reduction <maximumf>, %42, %cst_20 [1] : vector<8x16xf32> to vector<8xf32>
    %44 = vector.shape_cast %43 : vector<8xf32> to vector<8x1xf32>
    %45 = vector.broadcast %44 : vector<8x1xf32> to vector<8x16xf32>
    %46 = arith.subf %42, %45 : vector<8x16xf32>
    %47 = math.exp %46 : vector<8x16xf32>
    %cst_21 = arith.constant 0.000000e+00 : f32
    %48 = vector.broadcast %cst_21 : f32 to vector<8x16xf32>
    %49 = arith.select %22, %47, %48 : vector<8x16xi1>, vector<8x16xf32>
    %cst_22 = arith.constant dense<0.000000e+00> : vector<8xf32>
    %50 = vector.multi_reduction <add>, %49, %cst_22 [1] : vector<8x16xf32> to vector<8xf32>
    %51 = vector.shape_cast %50 : vector<8xf32> to vector<8x1xf32>
    %cst_23 = arith.constant 9.99999968E-21 : f32
    %52 = vector.broadcast %cst_23 : f32 to vector<8x1xf32>
    %53 = arith.maximumf %51, %52 : vector<8x1xf32>
    %54 = tpu.reciprocal %53 {approx = true} : vector<8x1xf32> -> vector<8x1xf32>
    %55 = arith.truncf %49 : vector<8x16xf32> to vector<8x16xbf16>
    %56 = arith.truncf %24 : vector<16x8xf32> to vector<16x8xbf16>
    %cst_24 = arith.constant dense<0.000000e+00> : vector<8x8xf32>
    %57 = tpu.matmul %55, %56, %cst_24 {dimension_numbers = #tpu.dot_dimension_numbers<[1], [0], [0], [1], [0, 0, 1, 1], [], []>} : vector<8x16xbf16>, vector<16x8xbf16>, vector<8x8xf32> -> vector<8x8xf32>
    %58 = vector.broadcast %54 : vector<8x1xf32> to vector<8x8xf32>
    %59 = arith.mulf %57, %58 : vector<8x8xf32>
    %60 = vector.extract_strided_slice %9 {offsets = [0, 8], sizes = [16, 8], strides = [1, 1]} : vector<16x16xf32> to vector<16x8xf32>
    %61 = vector.extract_strided_slice %18 {offsets = [0, 8], sizes = [8, 8], strides = [1, 1]} : vector<8x16xf32> to vector<8x8xf32>
    %62 = vector.extract_strided_slice %23 {offsets = [0, 8], sizes = [1, 8], strides = [1, 1]} : vector<1x16xf32> to vector<1x8xf32>
    %63 = vector.shape_cast %61 : vector<8x8xf32> to vector<8x1x8xf32>
    %64 = vector.shape_cast %60 : vector<16x8xf32> to vector<1x16x8xf32>
    %65 = vector.broadcast %63 : vector<8x1x8xf32> to vector<8x16x8xf32>
    %66 = vector.broadcast %64 : vector<1x16x8xf32> to vector<8x16x8xf32>
    %67 = arith.addf %65, %66 : vector<8x16x8xf32>
    %cst_25 = arith.constant 0.000000e+00 : f32
    %68 = vector.broadcast %cst_25 : f32 to vector<8x16x8xf32>
    %69 = arith.cmpf ogt, %67, %68 : vector<8x16x8xf32>
    %cst_26 = arith.constant 2.000000e-01 : f32
    %70 = vector.broadcast %cst_26 : f32 to vector<8x16x8xf32>
    %71 = arith.mulf %70, %67 : vector<8x16x8xf32>
    %72 = arith.select %69, %67, %71 : vector<8x16x8xi1>, vector<8x16x8xf32>
    %73 = vector.shape_cast %62 : vector<1x8xf32> to vector<1x1x8xf32>
    %74 = vector.broadcast %73 : vector<1x1x8xf32> to vector<8x16x8xf32>
    %75 = arith.mulf %72, %74 : vector<8x16x8xf32>
    %cst_27 = arith.constant dense<0.000000e+00> : vector<8x16xf32>
    %76 = vector.multi_reduction <add>, %75, %cst_27 [2] : vector<8x16x8xf32> to vector<8x16xf32>
    %cst_28 = arith.constant -1.000000e+30 : f32
    %77 = vector.broadcast %cst_28 : f32 to vector<8x16xf32>
    %78 = arith.select %22, %76, %77 : vector<8x16xi1>, vector<8x16xf32>
    %cst_29 = arith.constant dense<0xFF800000> : vector<8xf32>
    %79 = vector.multi_reduction <maximumf>, %78, %cst_29 [1] : vector<8x16xf32> to vector<8xf32>
    %80 = vector.shape_cast %79 : vector<8xf32> to vector<8x1xf32>
    %81 = vector.broadcast %80 : vector<8x1xf32> to vector<8x16xf32>
    %82 = arith.subf %78, %81 : vector<8x16xf32>
    %83 = math.exp %82 : vector<8x16xf32>
    %cst_30 = arith.constant 0.000000e+00 : f32
    %84 = vector.broadcast %cst_30 : f32 to vector<8x16xf32>
    %85 = arith.select %22, %83, %84 : vector<8x16xi1>, vector<8x16xf32>
    %cst_31 = arith.constant dense<0.000000e+00> : vector<8xf32>
    %86 = vector.multi_reduction <add>, %85, %cst_31 [1] : vector<8x16xf32> to vector<8xf32>
    %87 = vector.shape_cast %86 : vector<8xf32> to vector<8x1xf32>
    %cst_32 = arith.constant 9.99999968E-21 : f32
    %88 = vector.broadcast %cst_32 : f32 to vector<8x1xf32>
    %89 = arith.maximumf %87, %88 : vector<8x1xf32>
    %90 = tpu.reciprocal %89 {approx = true} : vector<8x1xf32> -> vector<8x1xf32>
    %91 = arith.truncf %85 : vector<8x16xf32> to vector<8x16xbf16>
    %92 = arith.truncf %60 : vector<16x8xf32> to vector<16x8xbf16>
    %cst_33 = arith.constant dense<0.000000e+00> : vector<8x8xf32>
    %93 = tpu.matmul %91, %92, %cst_33 {dimension_numbers = #tpu.dot_dimension_numbers<[1], [0], [0], [1], [0, 0, 1, 1], [], []>} : vector<8x16xbf16>, vector<16x8xbf16>, vector<8x8xf32> -> vector<8x8xf32>
    %94 = vector.broadcast %90 : vector<8x1xf32> to vector<8x8xf32>
    %95 = arith.mulf %93, %94 : vector<8x8xf32>
    %cst_34 = arith.constant 0.000000e+00 : f32
    %96 = vector.broadcast %cst_34 : f32 to vector<8x8xf32>
    %97 = arith.addf %96, %59 : vector<8x8xf32>
    %98 = arith.addf %97, %95 : vector<8x8xf32>
    %cst_35 = arith.constant 2.000000e+00 : f32
    %99 = vector.broadcast %cst_35 : f32 to vector<8x8xf32>
    %100 = arith.divf %98, %99 : vector<8x8xf32>
    %c0_36 = arith.constant 0 : index
    %c0_37 = arith.constant 0 : index
    %101 = vector.load %arg7[%c0_36, %c0_37] : memref<1x8xf32, #tpu.memory_space<vmem>>, vector<1x8xf32>
    %102 = vector.broadcast %101 : vector<1x8xf32> to vector<8x8xf32>
    %103 = arith.addf %100, %102 : vector<8x8xf32>
    %c0_38 = arith.constant 0 : index
    %c0_39 = arith.constant 0 : index
    %104 = vector.load %arg9[%c0_38, %c0_39] : memref<8x8xf32, #tpu.memory_space<vmem>>, vector<8x8xf32>
    tpu.vector_store %arg9[%c0_38, %c0_39], %103 {strides = array<i32>} : memref<8x8xf32, #tpu.memory_space<vmem>>, vector<8x8xf32>,
    return
  }
  func.func @transform_0(%arg0: i32) -> (i32, i32) {
    %c0_i32 = arith.constant 0 : i32
    %c0_i32_0 = arith.constant 0 : i32
    %c0_i32_1 = arith.constant 0 : i32
    return %c0_i32, %c0_i32_0 : i32, i32
  }
  func.func @transform_1(%arg0: i32) -> (i32, i32) {
    %c0_i32 = arith.constant 0 : i32
    %c0_i32_0 = arith.constant 0 : i32
    %c0_i32_1 = arith.constant 0 : i32
    return %c0_i32, %c0_i32_0 : i32, i32
  }
  func.func @transform_2(%arg0: i32) -> (i32, i32) {
    %c0_i32 = arith.constant 0 : i32
    %c0_i32_0 = arith.constant 0 : i32
    %c0_i32_1 = arith.constant 0 : i32
    return %c0_i32, %c0_i32_0 : i32, i32
  }
  func.func @transform_3(%arg0: i32) -> (i32, i32) {
    %c0_i32 = arith.constant 0 : i32
    %c0_i32_0 = arith.constant 0 : i32
    %c0_i32_1 = arith.constant 0 : i32
    return %c0_i32, %c0_i32_0 : i32, i32
  }
  func.func @transform_4(%arg0: i32) -> (i32, i32) {
    %c0_i32 = arith.constant 0 : i32
    %c0_i32_0 = arith.constant 0 : i32
    %c0_i32_1 = arith.constant 0 : i32
    return %c0_i32, %c0_i32_0 : i32, i32
  }
  func.func @transform_5(%arg0: i32) -> (i32, i32) {
    %c0_i32 = arith.constant 0 : i32
    %c0_i32_0 = arith.constant 0 : i32
    %c0_i32_1 = arith.constant 0 : i32
    return %c0_i32, %c0_i32_0 : i32, i32
  }
  func.func @transform_6(%arg0: i32) -> (i32, i32) {
    %c0_i32 = arith.constant 0 : i32
    %c0_i32_0 = arith.constant 0 : i32
    %c0_i32_1 = arith.constant 0 : i32
    return %c0_i32, %c0_i32_0 : i32, i32
  }
  func.func @transform_7(%arg0: i32) -> (i32, i32) {
    %c0_i32 = arith.constant 0 : i32
    %c0_i32_0 = arith.constant 0 : i32
    return %arg0, %c0_i32 : i32, i32
  }
  func.func @transform_8(%arg0: i32) -> (i32, i32) {
    %c0_i32 = arith.constant 0 : i32
    %c0_i32_0 = arith.constant 0 : i32
    return %arg0, %c0_i32 : i32, i32
  }
}

module attributes {stable_mosaic.version = 11 : i64} {
  func.func @_linear_kernel(%arg0: i32, %arg1: memref<2x8xf32, #tpu.memory_space<vmem>>, %arg2: memref<8x2xf32, #tpu.memory_space<vmem>>, %arg3: memref<1x2xf32, #tpu.memory_space<vmem>>, %arg4: memref<2x2xf32, #tpu.memory_space<vmem>>) attributes {dimension_semantics = [#tpu.dimension_semantics<arbitrary>], iteration_bounds = array<i64: 1>, scalar_prefetch = 0 : i64, scratch_operands = 0 : i64, tpu.core_type = #tpu.core_type<tc>, window_params = [{pipeline_mode = #tpu.pipeline_mode<synchronous>, transform_indices = @transform_0, window_bounds = array<i64: 2, 8>}, {pipeline_mode = #tpu.pipeline_mode<synchronous>, transform_indices = @transform_1, window_bounds = array<i64: 8, 2>}, {pipeline_mode = #tpu.pipeline_mode<synchronous>, transform_indices = @transform_2, window_bounds = array<i64: 1, 2>}, {pipeline_mode = #tpu.pipeline_mode<synchronous>, transform_indices = @transform_3, window_bounds = array<i64: 2, 2>}]} {
    %c0 = arith.constant 0 : index
    %c0_0 = arith.constant 0 : index
    %0 = vector.load %arg1[%c0, %c0_0] : memref<2x8xf32, #tpu.memory_space<vmem>>, vector<2x8xf32>
    %c0_1 = arith.constant 0 : index
    %c0_2 = arith.constant 0 : index
    %1 = vector.load %arg2[%c0_1, %c0_2] : memref<8x2xf32, #tpu.memory_space<vmem>>, vector<8x2xf32>
    %cst = arith.constant dense<0.000000e+00> : vector<2x2xf32>
    %2 = tpu.matmul %0, %1, %cst {dimension_numbers = #tpu.dot_dimension_numbers<[1], [0], [0], [1], [0, 0, 1, 1], [], []>} : vector<2x8xf32>, vector<8x2xf32>, vector<2x2xf32> -> vector<2x2xf32>
    %c0_3 = arith.constant 0 : index
    %c0_4 = arith.constant 0 : index
    %3 = vector.load %arg3[%c0_3, %c0_4] : memref<1x2xf32, #tpu.memory_space<vmem>>, vector<1x2xf32>
    %4 = vector.broadcast %3 : vector<1x2xf32> to vector<2x2xf32>
    %5 = arith.addf %2, %4 : vector<2x2xf32>
    %c0_5 = arith.constant 0 : index
    %c0_6 = arith.constant 0 : index
    %6 = vector.load %arg4[%c0_5, %c0_6] : memref<2x2xf32, #tpu.memory_space<vmem>>, vector<2x2xf32>
    tpu.vector_store %arg4[%c0_5, %c0_6], %5 {strides = array<i32>} : memref<2x2xf32, #tpu.memory_space<vmem>>, vector<2x2xf32>,
    return
  }
  func.func @transform_0(%arg0: i32) -> (i32, i32) {
    %c0_i32 = arith.constant 0 : i32
    %c0_i32_0 = arith.constant 0 : i32
    %c0_i32_1 = arith.constant 0 : i32
    return %c0_i32, %c0_i32_0 : i32, i32
  }
  func.func @transform_1(%arg0: i32) -> (i32, i32) {
    %c0_i32 = arith.constant 0 : i32
    %c0_i32_0 = arith.constant 0 : i32
    %c0_i32_1 = arith.constant 0 : i32
    return %c0_i32, %c0_i32_0 : i32, i32
  }
  func.func @transform_2(%arg0: i32) -> (i32, i32) {
    %c0_i32 = arith.constant 0 : i32
    %c0_i32_0 = arith.constant 0 : i32
    %c0_i32_1 = arith.constant 0 : i32
    return %c0_i32, %c0_i32_0 : i32, i32
  }
  func.func @transform_3(%arg0: i32) -> (i32, i32) {
    %c0_i32 = arith.constant 0 : i32
    %c0_i32_0 = arith.constant 0 : i32
    %c0_i32_1 = arith.constant 0 : i32
    return %c0_i32, %c0_i32_0 : i32, i32
  }
}

</mosaic_0001>

<llo_original>
// kernel: sub.3
$region0: #{sub.3}
  #allocation0 [shape = 's32[1]{0}', space=sflag, size = 0x4, scoped, tag = 'scoped memory for sub.3']
  %s0 = inlined_call_operand.vmem [shape: f32[16,16], index: 0, kind: input, shape index: {}]
  %s1 = inlined_call_operand.vmem [shape: f32[16,16], index: 1, kind: input, shape index: {}]
  %s2 = inlined_call_operand.vmem [shape: f32[16,16], index: 2, kind: output, shape index: {}]
  %v3 = vld [vmem:[%s0] sm:$0xff]
  %v4 = vld [vmem:[%s1] sm:$0xff]
  %5 = xla_tuple %v3, %v4
  %6 = xla_tuple %5
  %v7 = vsub.f32 %v3, %v4
  %8 = xla_tuple %v7
  %9 = vst [vmem:[%s2] sm:$0xff] %v7
  %s10 = scalar_lea.vmem %s0, 8
  %v11 = vld [vmem:[%s10] sm:$0xff]
  %s12 = scalar_lea.vmem %s1, 8
  %v13 = vld [vmem:[%s12] sm:$0xff]
  %14 = xla_tuple %v11, %v13
  %15 = xla_tuple %14
  %v16 = vsub.f32 %v11, %v13
  %17 = xla_tuple %v16
  %s18 = scalar_lea.vmem %s2, 8
  %19 = vst [vmem:[%s18] sm:$0xff] %v16

// kernel: sub.5
$region0: #{sub.5}
  #allocation0 [shape = 's32[1]{0}', space=sflag, size = 0x4, scoped, tag = 'scoped memory for sub.5']
  %s0 = inlined_call_operand.vmem [shape: f32[16,8], index: 0, kind: input, shape index: {}]
  %s1 = inlined_call_operand.vmem [shape: f32[16,8], index: 1, kind: input, shape index: {}]
  %s2 = inlined_call_operand.vmem [shape: f32[16,8], index: 2, kind: output, shape index: {}]
  %v3 = vld [vmem:[%s0] sm:$0xff]
  %v4 = vld [vmem:[%s1] sm:$0xff]
  %5 = xla_tuple %v3, %v4
  %6 = xla_tuple %5
  %v7 = vsub.f32 %v3, %v4
  %8 = xla_tuple %v7
  %9 = vst [vmem:[%s2] sm:$0xff] %v7
  %s10 = scalar_lea.vmem %s0, 8
  %v11 = vld [vmem:[%s10] sm:$0xff]
  %s12 = scalar_lea.vmem %s1, 8
  %v13 = vld [vmem:[%s12] sm:$0xff]
  %14 = xla_tuple %v11, %v13
  %15 = xla_tuple %14
  %v16 = vsub.f32 %v11, %v13
  %17 = xla_tuple %v16
  %s18 = scalar_lea.vmem %s2, 8
  %19 = vst [vmem:[%s18] sm:$0xff] %v16

// kernel: _lambda_.7
$region0: #{_lambda_.7}
  #allocation0 [shape = 'u32[]', space=smem, size = 0x4, offset = 0x4, fixed_abs, tag = 'smem constant byte address 0x4 - core index']
  #allocation1 [shape = 'u32[144,128]{1,0:T(1,128)}', space=vmem, size = 0x12000, scoped, tag = 'internal scratch']
  %s0 = inlined_call_operand.vmem [shape: f32[2,8], index: 0, kind: input, shape index: {}]
  %s1 = inlined_call_operand.vmem [shape: f32[8,2], index: 1, kind: input, shape index: {}]
  %s2 = inlined_call_operand.vmem [shape: f32[1,2], index: 2, kind: input, shape index: {}]
  %s3 = inlined_call_operand.hbm [shape: f32[2,2], index: 3, kind: output, shape index: {}]
  %s4 = sld [smem:[#allocation0]]
  $region22: #{_lambda_.7} parent=0
    _
  %s6 = ssub.s32 1, %s4
  %s7 = scalar_select 0, %s6, %s4
  $region1: #{_lambda_.7} parent=0
    #allocation2 [shape = 'u8[1024]{0}', space=vmem, size = 0x400, scoped, tag = 'output window, operand 0, single buffered']
    #allocation3 [shape = 's32[1]{0}', space=sflag, size = 0x4, scoped, tag = 'scoped memory for _lambda_.7']
    %8 = vsyncpa [#allocation3], 0
    // Predicated region
    $region2: #{_lambda_.7} parent=1 // pred_check
      _
    $region3: #{_lambda_.7} parent=1 // pred_check_branch
      %10 = sbr.rel (0) target = $region5
    $region4: #{_lambda_.7} parent=1 // pred_region
      _
    $region5: #{_lambda_.7} parent=1 // pred_fallthru
      _
    // Predicated region
    $region6: #{_lambda_.7} parent=1 // pred_check
      _
    $region7: #{_lambda_.7} parent=1 // pred_check_branch
      %12 = sbr.rel (0) target = $region9
    $region8: #{_lambda_.7} parent=1 // pred_region
      _
    $region9: #{_lambda_.7} parent=1 // pred_fallthru
      _
    // Predicated region
    $region10: #{_lambda_.7} parent=1 // pred_check
      _
    $region11: #{_lambda_.7} parent=1 // pred_check_branch
      %14 = sbr.rel (0) target = $region13
    $region12: #{_lambda_.7} parent=1 // pred_region
      _
    $region13: #{_lambda_.7} parent=1 // pred_fallthru
      _
    %v15 = vld [vmem:[%s0] sm:$0x3]
    %v16 = vld [vmem:[%s1] sm:$0xff]
    %v17 = vld [vmem:[%s2] sm:$0x1]
    %v19 = vlaneseq
    %v20 = vshrl.u32 %v19, 7
    %v21 = vsub.s32 0, %v20
    %v22 = vrot.slane %v17, %v21
    %vm24 = vcmask 64512
    %v26 = vsel %vm24, %v15, 0
    %28 = vmatprep.subr.mxu0 0.0
    %29 = vmatpush1.msra.mxu0 %v16
    %30 = vmatprep.subr.mxu0 0.0
    %31 = vmatpush1.msra.mxu0 0.0
    %32 = vmatprep.subr.mxu0 0.0
    %33 = vmatpush1.msra.mxu0 0.0
    %34 = vmatprep.subr.mxu0 0.0
    %35 = vmatpush1.msra.mxu0 0.0
    %36 = vmatprep.subr.mxu0 0.0
    %37 = vmatpush1.msra.mxu0 0.0
    %38 = vmatprep.subr.mxu0 0.0
    %39 = vmatpush1.msra.mxu0 0.0
    %40 = vmatprep.subr.mxu0 0.0
    %41 = vmatpush1.msra.mxu0 0.0
    %42 = vmatprep.subr.mxu0 0.0
    %43 = vmatpush1.msra.mxu0 0.0
    %44 = vmatprep.subr.mxu0 0.0
    %45 = vmatpush1.msra.mxu0 0.0
    %46 = vmatprep.subr.mxu0 0.0
    %47 = vmatpush1.msra.mxu0 0.0
    %48 = vmatprep.subr.mxu0 0.0
    %49 = vmatpush1.msra.mxu0 0.0
    %50 = vmatprep.subr.mxu0 0.0
    %51 = vmatpush1.msra.mxu0 0.0
    %52 = vmatprep.subr.mxu0 0.0
    %53 = vmatpush1.msra.mxu0 0.0
    %54 = vmatprep.subr.mxu0 0.0
    %55 = vmatpush1.msra.mxu0 0.0
    %56 = vmatprep.subr.mxu0 0.0
    %57 = vmatpush1.msra.mxu0 0.0
    %58 = vmatprep.subr.mxu0 0.0
    %59 = vmatpush1.msra.mxu0 0.0
    %60 = vmatprep.subr.mxu0 0.0
    %61 = vmatpush1.msra.mxu0 0.0
    %62 = vmatprep.subr.mxu0 0.0
    %63 = vmatpush1.msra.mxu0 0.0
    %64 = vmatprep.subr.mxu0 0.0
    %65 = vmatpush1.msra.mxu0 0.0
    %66 = vmatprep.subr.mxu0 0.0
    %67 = vmatpush1.msra.mxu0 0.0
    %68 = vmatprep.subr.mxu0 0.0
    %69 = vmatpush1.msra.mxu0 0.0
    %70 = vmatprep.subr.mxu0 0.0
    %71 = vmatpush1.msra.mxu0 0.0
    %72 = vmatprep.subr.mxu0 0.0
    %73 = vmatpush1.msra.mxu0 0.0
    %74 = vmatprep.subr.mxu0 0.0
    %75 = vmatpush1.msra.mxu0 0.0
    %76 = vmatprep.subr.mxu0 0.0
    %77 = vmatpush1.msra.mxu0 0.0
    %78 = vmatprep.subr.mxu0 0.0
    %79 = vmatpush1.msra.mxu0 0.0
    %80 = vmatprep.subr.mxu0 0.0
    %81 = vmatpush1.msra.mxu0 0.0
    %82 = vmatprep.subr.mxu0 0.0
    %83 = vmatpush1.msra.mxu0 0.0
    %84 = vmatprep.subr.mxu0 0.0
    %85 = vmatpush1.msra.mxu0 0.0
    %86 = vmatprep.subr.mxu0 0.0
    %87 = vmatpush1.msra.mxu0 0.0
    %88 = vmatprep.subr.mxu0 0.0
    %89 = vmatpush1.msra.mxu0 0.0
    %90 = vmatprep.subr.mxu0 0.0
    %91 = vmatpush1.msra.mxu0 0.0
    %92 = vmatprep.mubr.f32.mxu0 0.0
    %93 = vmatmul.mubr.f32.gmra.mrb[0].mxu0 %v26
    %v94 = vpop.f32.mrb[0].mxu0
    %v95 = vadd.f32 %v22, %v94
    %v96 = vpop.f32.mrb[0].mxu0
    %97 = vdwg.mxu0
    %vm98 = vcmask 9216
    %99 = vst.msk [vmem:[#allocation2] sm:$0x3] %vm98, %v95
    // Predicated region
    $region14: #{_lambda_.7} parent=1 // pred_check
      _
    $region15: #{_lambda_.7} parent=1 // pred_check_branch
      %101 = sbr.rel (0) target = $region17
    $region16: #{_lambda_.7} parent=1 // pred_region
      %s103 = ssub.s32 32, 32
      %104 = vsyncadd [#allocation3], %s103
      %s106 = sshll.u32 [#allocation2], 4
      %s107 = int_to_ptr.vmem [resolvable:$true] %s106
      %109 = dma.vmem_to_hbm [thread:$0]  %s107, 32, %s3, [#allocation3]
    $region17: #{_lambda_.7} parent=1 // pred_fallthru
      _
    // Predicated region
    $region18: #{_lambda_.7} parent=1 // pred_check
      _
    $region19: #{_lambda_.7} parent=1 // pred_check_branch
      %111 = sbr.rel (0) target = $region21
    $region20: #{_lambda_.7} parent=1 // pred_region
      %112 = dma.done [#allocation3], 32
    $region21: #{_lambda_.7} parent=1 // pred_fallthru
      _
    %113 = vsyncpa [#allocation3], 1

// kernel: _lambda_.5
$region0: #{_lambda_.5}
  #allocation0 [shape = 'u32[]', space=smem, size = 0x4, offset = 0x4, fixed_abs, tag = 'smem constant byte address 0x4 - core index']
  #allocation1 [shape = 'u32[144,128]{1,0:T(1,128)}', space=vmem, size = 0x12000, scoped, tag = 'internal scratch']
  %s0 = inlined_call_operand.vmem [shape: f32[16,16], index: 0, kind: input, shape index: {}]
  %s1 = inlined_call_operand.vmem [shape: f32[16,16], index: 1, kind: input, shape index: {}]
  %s2 = inlined_call_operand.vmem [shape: f32[16,16], index: 2, kind: input, shape index: {}]
  %s3 = inlined_call_operand.vmem [shape: f32[1,16], index: 3, kind: input, shape index: {}, may-alias: {3,4,6}]
  %s4 = inlined_call_operand.vmem [shape: f32[1,16], index: 4, kind: input, shape index: {}, may-alias: {3,4,6}]
  %s5 = inlined_call_operand.vmem [shape: f32[1,16], index: 5, kind: input, shape index: {}]
  %s6 = inlined_call_operand.vmem [shape: f32[1,16], index: 6, kind: input, shape index: {}, may-alias: {3,4,6}]
  %s7 = inlined_call_operand.vmem [shape: bf16[16,16], index: 7, kind: input, shape index: {}]
  %s8 = inlined_call_operand.vmem [shape: f32[16,16], index: 8, kind: output, shape index: {}]
  %s9 = sld [smem:[#allocation0]]
  $region65: #{_lambda_.5} parent=0
    _
  %s11 = ssub.s32 1, %s9
  %s12 = scalar_select 0, %s11, %s9
  loop: start=0, step=1, limit=4
  $region2: #{_lambda_.5} parent=0 // loop_pre_header
    _
  $region3: #{_lambda_.5} parent=0 // loop_header
    %s14 = sphi 0, %s18
    %p15 = scmp.ge.s32.totalorder %s14, 4
    %s22 = sphi 0, %s22
    %s24 = sphi 0, %s22
    %s25 = sphi 0, %s24
    %s39 = sphi 0, %s25
    %s43 = sphi 0, %s43
    %s45 = sphi 0, %s43
    %s46 = sphi 0, %s45
    %s60 = sphi 0, %s46
    %s64 = sphi 0, %s64
    %s66 = sphi 0, %s64
    %s67 = sphi 0, %s66
    %s81 = sphi 0, %s67
    %s85 = sphi 0, %s85
    %s87 = sphi 0, %s85
    %s88 = sphi 0, %s87
    %s102 = sphi 0, %s88
    %s106 = sphi 0, %s106
    %s108 = sphi 0, %s106
    %s109 = sphi 0, %s108
    %s123 = sphi 0, %s109
    %s127 = sphi 0, %s127
    %s129 = sphi 0, %s127
    %s130 = sphi 0, %s129
    %s144 = sphi 0, %s130
    %s148 = sphi 0, %s148
    %s150 = sphi 0, %s148
    %s151 = sphi 0, %s150
    %s165 = sphi 0, %s151
    %s171 = sphi 0, %s173
    %s174 = sphi 0, %s171
    %s175 = sphi 0, %s174
    %s191 = sphi 0, %s175
    %s197 = sphi 0, %s199
    %s200 = sphi 0, %s197
    %s201 = sphi 0, %s200
    %s217 = sphi 0, %s201
  $region4: #{_lambda_.5} parent=0 // loop_header_branch
    %17 = sbr.rel (%p15) target = $region8
  $region5: #{_lambda_.5} parent=0 // loop_body
    %s19 = ssub.s32 %s14, 1
    %s20 = ssub.s32 %s14, 2
    %s21 = sadd.s32 %s14, 1
    %s23 = sadd.s32 %s22, 1
    %p26 = scmp.eq.s32.totalorder %s14, 1
    %p27 = scmp.ne.s32.totalorder %s22, %s24
    %p28 = scmp.eq.s32.totalorder %s14, 0
    %p29 = por %p27, %p28
    %p30 = scmp.ne.s32.totalorder %s22, %s24
    %p31 = scmp.eq.s32.totalorder %s19, 1
    %p32 = por %p30, %p31
    %p33 = scmp.ne.s32.totalorder %s24, %s25
    %p34 = scmp.eq.s32.totalorder %s19, 0
    %p35 = por %p33, %p34
    %p36 = scmp.ne.s32.totalorder %s24, %s25
    %p37 = scmp.eq.s32.totalorder %s20, 1
    %p38 = por %p36, %p37
    %p40 = scmp.ne.s32.totalorder %s25, %s39
    %p41 = scmp.eq.s32.totalorder %s20, 0
    %p42 = por %p40, %p41
    %s44 = sadd.s32 %s43, 1
    %p47 = scmp.eq.s32.totalorder %s14, 1
    %p48 = scmp.ne.s32.totalorder %s43, %s45
    %p49 = scmp.eq.s32.totalorder %s14, 0
    %p50 = por %p48, %p49
    %p51 = scmp.ne.s32.totalorder %s43, %s45
    %p52 = scmp.eq.s32.totalorder %s19, 1
    %p53 = por %p51, %p52
    %p54 = scmp.ne.s32.totalorder %s45, %s46
    %p55 = scmp.eq.s32.totalorder %s19, 0
    %p56 = por %p54, %p55
    %p57 = scmp.ne.s32.totalorder %s45, %s46
    %p58 = scmp.eq.s32.totalorder %s20, 1
    %p59 = por %p57, %p58
    %p61 = scmp.ne.s32.totalorder %s46, %s60
    %p62 = scmp.eq.s32.totalorder %s20, 0
    %p63 = por %p61, %p62
    %s65 = sadd.s32 %s64, 1
    %p68 = scmp.eq.s32.totalorder %s14, 1
    %p69 = scmp.ne.s32.totalorder %s64, %s66
    %p70 = scmp.eq.s32.totalorder %s14, 0
    %p71 = por %p69, %p70
    %p72 = scmp.ne.s32.totalorder %s64, %s66
    %p73 = scmp.eq.s32.totalorder %s19, 1
    %p74 = por %p72, %p73
    %p75 = scmp.ne.s32.totalorder %s66, %s67
    %p76 = scmp.eq.s32.totalorder %s19, 0
    %p77 = por %p75, %p76
    %p78 = scmp.ne.s32.totalorder %s66, %s67
    %p79 = scmp.eq.s32.totalorder %s20, 1
    %p80 = por %p78, %p79
    %p82 = scmp.ne.s32.totalorder %s67, %s81
    %p83 = scmp.eq.s32.totalorder %s20, 0
    %p84 = por %p82, %p83
    %s86 = sadd.s32 %s85, 1
    %p89 = scmp.eq.s32.totalorder %s14, 1
    %p90 = scmp.ne.s32.totalorder %s85, %s87
    %p91 = scmp.eq.s32.totalorder %s14, 0
    %p92 = por %p90, %p91
    %p93 = scmp.ne.s32.totalorder %s85, %s87
    %p94 = scmp.eq.s32.totalorder %s19, 1
    %p95 = por %p93, %p94
    %p96 = scmp.ne.s32.totalorder %s87, %s88
    %p97 = scmp.eq.s32.totalorder %s19, 0
    %p98 = por %p96, %p97
    %p99 = scmp.ne.s32.totalorder %s87, %s88
    %p100 = scmp.eq.s32.totalorder %s20, 1
    %p101 = por %p99, %p100
    %p103 = scmp.ne.s32.totalorder %s88, %s102
    %p104 = scmp.eq.s32.totalorder %s20, 0
    %p105 = por %p103, %p104
    %s107 = sadd.s32 %s106, 1
    %p110 = scmp.eq.s32.totalorder %s14, 1
    %p111 = scmp.ne.s32.totalorder %s106, %s108
    %p112 = scmp.eq.s32.totalorder %s14, 0
    %p113 = por %p111, %p112
    %p114 = scmp.ne.s32.totalorder %s106, %s108
    %p115 = scmp.eq.s32.totalorder %s19, 1
    %p116 = por %p114, %p115
    %p117 = scmp.ne.s32.totalorder %s108, %s109
    %p118 = scmp.eq.s32.totalorder %s19, 0
    %p119 = por %p117, %p118
    %p120 = scmp.ne.s32.totalorder %s108, %s109
    %p121 = scmp.eq.s32.totalorder %s20, 1
    %p122 = por %p120, %p121
    %p124 = scmp.ne.s32.totalorder %s109, %s123
    %p125 = scmp.eq.s32.totalorder %s20, 0
    %p126 = por %p124, %p125
    %s128 = sadd.s32 %s127, 1
    %p131 = scmp.eq.s32.totalorder %s14, 1
    %p132 = scmp.ne.s32.totalorder %s127, %s129
    %p133 = scmp.eq.s32.totalorder %s14, 0
    %p134 = por %p132, %p133
    %p135 = scmp.ne.s32.totalorder %s127, %s129
    %p136 = scmp.eq.s32.totalorder %s19, 1
    %p137 = por %p135, %p136
    %p138 = scmp.ne.s32.totalorder %s129, %s130
    %p139 = scmp.eq.s32.totalorder %s19, 0
    %p140 = por %p138, %p139
    %p141 = scmp.ne.s32.totalorder %s129, %s130
    %p142 = scmp.eq.s32.totalorder %s20, 1
    %p143 = por %p141, %p142
    %p145 = scmp.ne.s32.totalorder %s130, %s144
    %p146 = scmp.eq.s32.totalorder %s20, 0
    %p147 = por %p145, %p146
    %s149 = sadd.s32 %s148, 1
    %p152 = scmp.eq.s32.totalorder %s14, 1
    %p153 = scmp.ne.s32.totalorder %s148, %s150
    %p154 = scmp.eq.s32.totalorder %s14, 0
    %p155 = por %p153, %p154
    %p156 = scmp.ne.s32.totalorder %s148, %s150
    %p157 = scmp.eq.s32.totalorder %s19, 1
    %p158 = por %p156, %p157
    %p159 = scmp.ne.s32.totalorder %s150, %s151
    %p160 = scmp.eq.s32.totalorder %s19, 0
    %p161 = por %p159, %p160
    %p162 = scmp.ne.s32.totalorder %s150, %s151
    %p163 = scmp.eq.s32.totalorder %s20, 1
    %p164 = por %p162, %p163
    %p166 = scmp.ne.s32.totalorder %s151, %s165
    %p167 = scmp.eq.s32.totalorder %s20, 0
    %p168 = por %p166, %p167
    %s169 = ssub.s32 %s14, %s21
    %p170 = scmp.eq.s32.totalorder %s169, 0
    %s172 = sadd.s32 %s171, 1
    %s173 = scalar_select %p170, %s171, %s172
    %p176 = pneg %p170
    %p177 = scmp.eq.s32.totalorder %s14, 1
    %p178 = por %p176, %p177
    %p179 = scmp.ne.s32.totalorder %s171, %s174
    %p180 = scmp.eq.s32.totalorder %s14, 0
    %p181 = por %p179, %p180
    %p182 = scmp.ne.s32.totalorder %s171, %s174
    %p183 = scmp.eq.s32.totalorder %s19, 1
    %p184 = por %p182, %p183
    %p185 = scmp.ne.s32.totalorder %s174, %s175
    %p186 = scmp.eq.s32.totalorder %s19, 0
    %p187 = por %p185, %p186
    %p188 = scmp.ne.s32.totalorder %s174, %s175
    %p189 = scmp.eq.s32.totalorder %s20, 1
    %p190 = por %p188, %p189
    %p192 = scmp.ne.s32.totalorder %s175, %s191
    %p193 = scmp.eq.s32.totalorder %s20, 0
    %p194 = por %p192, %p193
    %s195 = ssub.s32 %s14, %s21
    %p196 = scmp.eq.s32.totalorder %s195, 0
    %s198 = sadd.s32 %s197, 1
    %s199 = scalar_select %p196, %s197, %s198
    %p202 = pneg %p196
    %p203 = scmp.eq.s32.totalorder %s14, 1
    %p204 = por %p202, %p203
    %p205 = scmp.ne.s32.totalorder %s197, %s200
    %p206 = scmp.eq.s32.totalorder %s14, 0
    %p207 = por %p205, %p206
    %p208 = scmp.ne.s32.totalorder %s197, %s200
    %p209 = scmp.eq.s32.totalorder %s19, 1
    %p210 = por %p208, %p209
    %p211 = scmp.ne.s32.totalorder %s200, %s201
    %p212 = scmp.eq.s32.totalorder %s19, 0
    %p213 = por %p211, %p212
    %p214 = scmp.ne.s32.totalorder %s200, %s201
    %p215 = scmp.eq.s32.totalorder %s20, 1
    %p216 = por %p214, %p215
    %p218 = scmp.ne.s32.totalorder %s201, %s217
    %p219 = scmp.eq.s32.totalorder %s20, 0
    %p220 = por %p218, %p219
    %p221 = scmp.le.s32.totalorder 1, %s14
    %p222 = scmp.lt.s32.totalorder %s14, 3
    %p223 = pnand %p221, %p222
    %p224 = pneg %p223
    // Predicated region
    $region9: #{_lambda_.5} parent=5 // pred_check
      _
    $region10: #{_lambda_.5} parent=5 // pred_check_branch
      %226 = sbr.rel (%p223) target = $region12
    $region11: #{_lambda_.5} parent=5 // pred_region
      %s227 = ssub.s32 %s14, 1
      // Predicated region
      $region13: #{_lambda_.5} parent=11 // pred_check
        %p228 = pneg %p35
      $region14: #{_lambda_.5} parent=11 // pred_check_branch
        %230 = sbr.rel (%p228) target = $region16
      $region15: #{_lambda_.5} parent=11 // pred_region
        _
      $region16: #{_lambda_.5} parent=11 // pred_fallthru
        _
      // Predicated region
      $region17: #{_lambda_.5} parent=11 // pred_check
        %p231 = pneg %p56
      $region18: #{_lambda_.5} parent=11 // pred_check_branch
        %233 = sbr.rel (%p231) target = $region20
      $region19: #{_lambda_.5} parent=11 // pred_region
        _
      $region20: #{_lambda_.5} parent=11 // pred_fallthru
        _
      // Predicated region
      $region21: #{_lambda_.5} parent=11 // pred_check
        %p234 = pneg %p77
      $region22: #{_lambda_.5} parent=11 // pred_check_branch
        %236 = sbr.rel (%p234) target = $region24
      $region23: #{_lambda_.5} parent=11 // pred_region
        _
      $region24: #{_lambda_.5} parent=11 // pred_fallthru
        _
      // Predicated region
      $region25: #{_lambda_.5} parent=11 // pred_check
        %p237 = pneg %p98
      $region26: #{_lambda_.5} parent=11 // pred_check_branch
        %239 = sbr.rel (%p237) target = $region28
      $region27: #{_lambda_.5} parent=11 // pred_region
        _
      $region28: #{_lambda_.5} parent=11 // pred_fallthru
        _
      // Predicated region
      $region29: #{_lambda_.5} parent=11 // pred_check
        %p240 = pneg %p119
      $region30: #{_lambda_.5} parent=11 // pred_check_branch
        %242 = sbr.rel (%p240) target = $region32
      $region31: #{_lambda_.5} parent=11 // pred_region
        _
      $region32: #{_lambda_.5} parent=11 // pred_fallthru
        _
      // Predicated region
      $region33: #{_lambda_.5} parent=11 // pred_check
        %p243 = pneg %p140
      $region34: #{_lambda_.5} parent=11 // pred_check_branch
        %245 = sbr.rel (%p243) target = $region36
      $region35: #{_lambda_.5} parent=11 // pred_region
        _
      $region36: #{_lambda_.5} parent=11 // pred_fallthru
        _
      // Predicated region
      $region37: #{_lambda_.5} parent=11 // pred_check
        %p246 = pneg %p161
      $region38: #{_lambda_.5} parent=11 // pred_check_branch
        %248 = sbr.rel (%p246) target = $region40
      $region39: #{_lambda_.5} parent=11 // pred_region
        _
      $region40: #{_lambda_.5} parent=11 // pred_fallthru
        _
    $region12: #{_lambda_.5} parent=5 // pred_fallthru
      _
    %p249 = scmp.lt.s32.totalorder %s14, 2
    // Predicated region
    $region41: #{_lambda_.5} parent=5 // pred_check
      %p250 = pneg %p249
    $region42: #{_lambda_.5} parent=5 // pred_check_branch
      %252 = sbr.rel (%p250) target = $region44
    $region43: #{_lambda_.5} parent=5 // pred_region
      // Predicated region
      $region45: #{_lambda_.5} parent=43 // pred_check
        %p253 = pneg %p181
      $region46: #{_lambda_.5} parent=43 // pred_check_branch
        %255 = sbr.rel (%p253) target = $region48
      $region47: #{_lambda_.5} parent=43 // pred_region
        %p256 = scmp.lt.s32.totalorder %s14, 1
        %s257 = scalar_select %p256, %s14, 1
        %s258 = smul.addr %s257, 4
        %s259 = scalar_lea.vmem %s7, %s258
      $region48: #{_lambda_.5} parent=43 // pred_fallthru
        _
    $region44: #{_lambda_.5} parent=5 // pred_fallthru
      _
    %p260 = scmp.le.s32.totalorder 1, %s14
    %p261 = scmp.lt.s32.totalorder %s14, 3
    %p262 = pnand %p260, %p261
    %p263 = pneg %p262
    // Predicated region
    $region49: #{_lambda_.5} parent=5 // pred_check
      _
    $region50: #{_lambda_.5} parent=5 // pred_check_branch
      %265 = sbr.rel (%p262) target = $region52
    $region51: #{_lambda_.5} parent=5 // pred_region
      %s266 = ssub.s32 %s14, 1
      %p267 = pneg %p35
      %p268 = pneg %p32
      %p269 = pneg %p56
      %p270 = pneg %p53
      %p271 = pneg %p77
      %p272 = pneg %p74
      %p273 = pneg %p98
      %p274 = pneg %p95
      %p275 = pneg %p119
      %p276 = pneg %p116
      %p277 = pneg %p140
      %p278 = pneg %p137
      %p279 = pneg %p161
      %p280 = pneg %p158
      %p281 = scmp.lt.s32.totalorder %s19, 1
      %s282 = scalar_select %p281, %s19, 1
      %s283 = smul.addr %s282, 4
      %s284 = scalar_lea.vmem %s7, %s283
      %p285 = pneg %p187
      %p286 = pneg %p184
      %p287 = pneg %p213
      %p288 = pneg %p210
      %p289 = scmp.lt.s32.totalorder %s19, 1
      %s290 = scalar_select %p289, %s19, 1
      %s291 = smul.addr %s290, 8
      %s292 = scalar_lea.vmem %s8, %s291
      %p293 = scmp.lt.s32.totalorder %s19, 1
      %s294 = scalar_select %p293, %s19, 1
      %s295 = smul.addr %s294, 4
      %s296 = scalar_lea.vmem %s7, %s295
      %p297 = scmp.lt.s32.totalorder %s19, 1
      %s298 = scalar_select %p297, %s19, 1
      %s299 = smul.addr %s298, 8
      %s300 = scalar_lea.vmem %s8, %s299
      %v302 = vld [vmem:[%s0] sm:$0xff]
      %v303 = vld [vmem:[%s0 + $0x8] sm:$0xff]
      %v304 = vpack.c.bf16 %v303, %v302
      %v305 = vld [vmem:[%s1] sm:$0xff]
      %v306 = vld [vmem:[%s1 + $0x8] sm:$0xff]
      %v307 = vpack.c.bf16 %v306, %v305
      %v308 = vld [vmem:[%s2] sm:$0xff]
      %v309 = vld [vmem:[%s2 + $0x8] sm:$0xff]
      %v310 = vpack.c.bf16 %v309, %v308
      %v311 = vld [vmem:[%s3] sm:$0x1]
      %v313 = vlaneseq
      %v314 = vshrl.u32 %v313, 7
      %v315 = vsub.s32 0, %v314
      %v316 = vrot.slane %v311, %v315
      %vm318 = vcmask 130048
      %v320 = vsel %vm318, %v304, 0
      %322 = vmatprep.subr.bf16.mxu0 0
      %323 = vmatpush1.bf16.msra.mxu0 %v307
      %324 = vmatprep.subr.bf16.mxu0 0
      %325 = vmatpush1.bf16.msra.mxu0 0
      %326 = vmatprep.subr.bf16.mxu0 0
      %327 = vmatpush1.bf16.msra.mxu0 0
      %328 = vmatprep.subr.bf16.mxu0 0
      %329 = vmatpush1.bf16.msra.mxu0 0
      %330 = vmatprep.subr.bf16.mxu0 0
      %331 = vmatpush1.bf16.msra.mxu0 0
      %332 = vmatprep.subr.bf16.mxu0 0
      %333 = vmatpush1.bf16.msra.mxu0 0
      %334 = vmatprep.subr.bf16.mxu0 0
      %335 = vmatpush1.bf16.msra.mxu0 0
      %336 = vmatprep.subr.bf16.mxu0 0
      %337 = vmatpush1.bf16.msra.mxu0 0
      %338 = vmatprep.subr.bf16.mxu0 0
      %339 = vmatpush1.bf16.msra.mxu0 0
      %340 = vmatprep.subr.bf16.mxu0 0
      %341 = vmatpush1.bf16.msra.mxu0 0
      %342 = vmatprep.subr.bf16.mxu0 0
      %343 = vmatpush1.bf16.msra.mxu0 0
      %344 = vmatprep.subr.bf16.mxu0 0
      %345 = vmatpush1.bf16.msra.mxu0 0
      %346 = vmatprep.subr.bf16.mxu0 0
      %347 = vmatpush1.bf16.msra.mxu0 0
      %348 = vmatprep.subr.bf16.mxu0 0
      %349 = vmatpush1.bf16.msra.mxu0 0
      %350 = vmatprep.subr.bf16.mxu0 0
      %351 = vmatpush1.bf16.msra.mxu0 0
      %352 = vmatprep.subr.bf16.mxu0 0
      %353 = vmatpush1.bf16.msra.mxu0 0
      %354 = vmatprep.mubr.bf16.mxu0 0
      %355 = vmatmul.mubr.bf16.gmra.mrb[0].mxu0 %v320
      %v356 = vpop.f32.mrb[0].mxu0
      %v357 = vadd.f32 %v316, %v356
      %v358 = vpop.f32.mrb[0].mxu0
      %v359 = vpop.f32.mrb[0].mxu0
      %v360 = vadd.f32 %v316, %v359
      %v361 = vpop.f32.mrb[0].mxu0
      %362 = vdwg.mxu0
      %s363 = smul.u32 %s19, 8
      %s364 = scalar_lea.vmem %s0, %s363
      %v365 = vld [vmem:[%s364] sm:$0xff]
      %v366 = vpack.c.bf16 %v365, %v365
      %v367 = vld [vmem:[%s4] sm:$0x1]
      %v369 = vlaneseq
      %v370 = vshrl.u32 %v369, 7
      %v371 = vsub.s32 0, %v370
      %v372 = vrot.slane %v367, %v371
      %v375 = vsel %vm318, %v366, 0
      %377 = vmatprep.subr.bf16.mxu0 0
      %378 = vmatpush1.bf16.msra.mxu0 %v310
      %379 = vmatprep.subr.bf16.mxu0 0
      %380 = vmatpush1.bf16.msra.mxu0 0
      %381 = vmatprep.subr.bf16.mxu0 0
      %382 = vmatpush1.bf16.msra.mxu0 0
      %383 = vmatprep.subr.bf16.mxu0 0
      %384 = vmatpush1.bf16.msra.mxu0 0
      %385 = vmatprep.subr.bf16.mxu0 0
      %386 = vmatpush1.bf16.msra.mxu0 0
      %387 = vmatprep.subr.bf16.mxu0 0
      %388 = vmatpush1.bf16.msra.mxu0 0
      %389 = vmatprep.subr.bf16.mxu0 0
      %390 = vmatpush1.bf16.msra.mxu0 0
      %391 = vmatprep.subr.bf16.mxu0 0
      %392 = vmatpush1.bf16.msra.mxu0 0
      %393 = vmatprep.subr.bf16.mxu0 0
      %394 = vmatpush1.bf16.msra.mxu0 0
      %395 = vmatprep.subr.bf16.mxu0 0
      %396 = vmatpush1.bf16.msra.mxu0 0
      %397 = vmatprep.subr.bf16.mxu0 0
      %398 = vmatpush1.bf16.msra.mxu0 0
      %399 = vmatprep.subr.bf16.mxu0 0
      %400 = vmatpush1.bf16.msra.mxu0 0
      %401 = vmatprep.subr.bf16.mxu0 0
      %402 = vmatpush1.bf16.msra.mxu0 0
      %403 = vmatprep.subr.bf16.mxu0 0
      %404 = vmatpush1.bf16.msra.mxu0 0
      %405 = vmatprep.subr.bf16.mxu0 0
      %406 = vmatpush1.bf16.msra.mxu0 0
      %407 = vmatprep.subr.bf16.mxu0 0
      %408 = vmatpush1.bf16.msra.mxu0 0
      %409 = vmatprep.mubr.bf16.mxu0 0
      %410 = vmatmul.mubr.bf16.gmra.mrb[0].mxu0 %v375
      %v411 = vpop.f32.mrb[0].mxu0
      %v412 = vadd.f32 %v372, %v411
      %v413 = vpop.f32.mrb[0].mxu0
      %v414 = vpop.f32.mrb[0].mxu0
      %v415 = vpop.f32.mrb[0].mxu0
      %416 = vdwg.mxu0
      %v417 = vld [vmem:[%s296] sm:$0xf]
      %v418 = vunpack.c.l.bf16 %v417
      %vm419 = vcmp.gt.f32.partialorder %v418, 0.0
      %v420 = vld [vmem:[%s5] sm:$0x1]
      %v422 = vcombine.high %v412, %v412
      %v424 = vunpack.c.l.s4 1966171168
      %v425 = vunpack.c.0.s8 %v424
      %v426 = vlaneseq
      %v427 = vshrl.u32 %v426, 7
      %v428 = vsub.s32 %v425, %v427
      %v429 = vrot.slane %v412, %v428
      %v431 = vunpack.c.l.s4 1966171168
      %v432 = vunpack.c.0.s8 %v431
      %v433 = vlaneseq
      %v434 = vshrl.u32 %v433, 7
      %v435 = vsub.s32 %v432, %v434
      %v436 = vrot.slane %v422, %v435
      %v437 = vcombine.high %v429, %v429
      %v438 = vcombine.high %v436, %v436
      %v440 = vunpack.c.l.s4 1966171168
      %v441 = vunpack.c.0.s8 %v440
      %v442 = vlaneseq
      %v443 = vshrl.u32 %v442, 7
      %v444 = vsub.s32 %v441, %v443
      %v445 = vrot.slane %v429, %v444
      %v447 = vunpack.c.l.s4 1966171168
      %v448 = vunpack.c.0.s8 %v447
      %v449 = vlaneseq
      %v450 = vshrl.u32 %v449, 7
      %v451 = vsub.s32 %v448, %v450
      %v452 = vrot.slane %v436, %v451
      %v454 = vunpack.c.l.s4 1966171168
      %v455 = vunpack.c.0.s8 %v454
      %v456 = vlaneseq
      %v457 = vshrl.u32 %v456, 7
      %v458 = vsub.s32 %v455, %v457
      %v459 = vrot.slane %v437, %v458
      %v461 = vunpack.c.l.s4 1966171168
      %v462 = vunpack.c.0.s8 %v461
      %v463 = vlaneseq
      %v464 = vshrl.u32 %v463, 7
      %v465 = vsub.s32 %v462, %v464
      %v466 = vrot.slane %v438, %v465
      %v467 = vcombine.high %v445, %v445
      %v468 = vcombine.high %v452, %v452
      %v469 = vcombine.high %v459, %v459
      %v470 = vcombine.high %v466, %v466
      %v471 = vlaneseq
      %v472 = vshrl.u32 %v471, 7
      %v473 = vsub.s32 0, %v472
      %v474 = vrot.slane %v445, %v473
      %v475 = vlaneseq
      %v476 = vshrl.u32 %v475, 7
      %v477 = vsub.s32 0, %v476
      %v478 = vrot.slane %v459, %v477
      %v479 = vlaneseq
      %v480 = vshrl.u32 %v479, 7
      %v481 = vsub.s32 0, %v480
      %v482 = vrot.slane %v467, %v481
      %v483 = vlaneseq
      %v484 = vshrl.u32 %v483, 7
      %v485 = vsub.s32 0, %v484
      %v486 = vrot.slane %v469, %v485
      %v487 = vlaneseq
      %v488 = vshrl.u32 %v487, 7
      %v489 = vsub.s32 0, %v488
      %v490 = vrot.slane %v452, %v489
      %v491 = vlaneseq
      %v492 = vshrl.u32 %v491, 7
      %v493 = vsub.s32 0, %v492
      %v494 = vrot.slane %v466, %v493
      %v495 = vlaneseq
      %v496 = vshrl.u32 %v495, 7
      %v497 = vsub.s32 0, %v496
      %v498 = vrot.slane %v468, %v497
      %v499 = vlaneseq
      %v500 = vshrl.u32 %v499, 7
      %v501 = vsub.s32 0, %v500
      %v502 = vrot.slane %v470, %v501
      %v511 = vadd.f32 %v474, %v357
      %v512 = vadd.f32 %v474, %v360
      %v513 = vadd.f32 %v478, %v357
      %v514 = vadd.f32 %v478, %v360
      %v515 = vadd.f32 %v482, %v357
      %v516 = vadd.f32 %v482, %v360
      %v517 = vadd.f32 %v486, %v357
      %v518 = vadd.f32 %v486, %v360
      %v519 = vadd.f32 %v490, %v357
      %v520 = vadd.f32 %v490, %v360
      %v521 = vadd.f32 %v494, %v357
      %v522 = vadd.f32 %v494, %v360
      %v523 = vadd.f32 %v498, %v357
      %v524 = vadd.f32 %v498, %v360
      %v525 = vadd.f32 %v502, %v357
      %v526 = vadd.f32 %v502, %v360
      %vm527 = vcmp.gt.f32.partialorder %v511, 0.0
      %vm528 = vcmp.gt.f32.partialorder %v512, 0.0
      %vm529 = vcmp.gt.f32.partialorder %v513, 0.0
      %vm530 = vcmp.gt.f32.partialorder %v514, 0.0
      %vm531 = vcmp.gt.f32.partialorder %v515, 0.0
      %vm532 = vcmp.gt.f32.partialorder %v516, 0.0
      %vm533 = vcmp.gt.f32.partialorder %v517, 0.0
      %vm534 = vcmp.gt.f32.partialorder %v518, 0.0
      %vm535 = vcmp.gt.f32.partialorder %v519, 0.0
      %vm536 = vcmp.gt.f32.partialorder %v520, 0.0
      %vm537 = vcmp.gt.f32.partialorder %v521, 0.0
      %vm538 = vcmp.gt.f32.partialorder %v522, 0.0
      %vm539 = vcmp.gt.f32.partialorder %v523, 0.0
      %vm540 = vcmp.gt.f32.partialorder %v524, 0.0
      %vm541 = vcmp.gt.f32.partialorder %v525, 0.0
      %vm542 = vcmp.gt.f32.partialorder %v526, 0.0
      %v543 = vmul.f32 %v511, 0.2
      %v544 = vmul.f32 %v512, 0.2
      %v545 = vmul.f32 %v513, 0.2
      %v546 = vmul.f32 %v514, 0.2
      %v547 = vmul.f32 %v515, 0.2
      %v548 = vmul.f32 %v516, 0.2
      %v549 = vmul.f32 %v517, 0.2
      %v550 = vmul.f32 %v518, 0.2
      %v551 = vmul.f32 %v519, 0.2
      %v552 = vmul.f32 %v520, 0.2
      %v553 = vmul.f32 %v521, 0.2
      %v554 = vmul.f32 %v522, 0.2
      %v555 = vmul.f32 %v523, 0.2
      %v556 = vmul.f32 %v524, 0.2
      %v557 = vmul.f32 %v525, 0.2
      %v558 = vmul.f32 %v526, 0.2
      %v559 = vsel %vm527, %v511, %v543
      %v560 = vsel %vm528, %v512, %v544
      %v561 = vsel %vm529, %v513, %v545
      %v562 = vsel %vm530, %v514, %v546
      %v563 = vsel %vm531, %v515, %v547
      %v564 = vsel %vm532, %v516, %v548
      %v565 = vsel %vm533, %v517, %v549
      %v566 = vsel %vm534, %v518, %v550
      %v567 = vsel %vm535, %v519, %v551
      %v568 = vsel %vm536, %v520, %v552
      %v569 = vsel %vm537, %v521, %v553
      %v570 = vsel %vm538, %v522, %v554
      %v571 = vsel %vm539, %v523, %v555
      %v572 = vsel %vm540, %v524, %v556
      %v573 = vsel %vm541, %v525, %v557
      %v574 = vsel %vm542, %v526, %v558
      %v576 = vlaneseq
      %v577 = vshrl.u32 %v576, 7
      %v578 = vsub.s32 0, %v577
      %v579 = vrot.slane %v420, %v578
      %v581 = vmul.f32 %v559, %v579
      %v582 = vmul.f32 %v560, %v579
      %v583 = vmul.f32 %v561, %v579
      %v584 = vmul.f32 %v562, %v579
      %v585 = vmul.f32 %v563, %v579
      %v586 = vmul.f32 %v564, %v579
      %v587 = vmul.f32 %v565, %v579
      %v588 = vmul.f32 %v566, %v579
      %v589 = vmul.f32 %v567, %v579
      %v590 = vmul.f32 %v568, %v579
      %v591 = vmul.f32 %v569, %v579
      %v592 = vmul.f32 %v570, %v579
      %v593 = vmul.f32 %v571, %v579
      %v594 = vmul.f32 %v572, %v579
      %v595 = vmul.f32 %v573, %v579
      %v596 = vmul.f32 %v574, %v579
      %vm597 = vcmask 64512
      %v598 = vsel %vm597, %v581, 0.0
      %599 = vadd.xlane.f32.xlu0 %v598
      %v600 = vpop.xlane.xlu0 %599
      %v601 = vsel %vm597, %v582, 0.0
      %602 = vadd.xlane.f32.xlu0 %v601
      %v603 = vpop.xlane.xlu0 %602
      %v604 = vsel %vm597, %v583, 0.0
      %605 = vadd.xlane.f32.xlu0 %v604
      %v606 = vpop.xlane.xlu0 %605
      %v607 = vsel %vm597, %v584, 0.0
      %608 = vadd.xlane.f32.xlu0 %v607
      %v609 = vpop.xlane.xlu0 %608
      %v610 = vsel %vm597, %v585, 0.0
      %611 = vadd.xlane.f32.xlu0 %v610
      %v612 = vpop.xlane.xlu0 %611
      %v613 = vsel %vm597, %v586, 0.0
      %614 = vadd.xlane.f32.xlu0 %v613
      %v615 = vpop.xlane.xlu0 %614
      %v616 = vsel %vm597, %v587, 0.0
      %617 = vadd.xlane.f32.xlu0 %v616
      %v618 = vpop.xlane.xlu0 %617
      %v619 = vsel %vm597, %v588, 0.0
      %620 = vadd.xlane.f32.xlu0 %v619
      %v621 = vpop.xlane.xlu0 %620
      %v622 = vsel %vm597, %v589, 0.0
      %623 = vadd.xlane.f32.xlu0 %v622
      %v624 = vpop.xlane.xlu0 %623
      %v625 = vsel %vm597, %v590, 0.0
      %626 = vadd.xlane.f32.xlu0 %v625
      %v627 = vpop.xlane.xlu0 %626
      %v628 = vsel %vm597, %v591, 0.0
      %629 = vadd.xlane.f32.xlu0 %v628
      %v630 = vpop.xlane.xlu0 %629
      %v631 = vsel %vm597, %v592, 0.0
      %632 = vadd.xlane.f32.xlu0 %v631
      %v633 = vpop.xlane.xlu0 %632
      %v634 = vsel %vm597, %v593, 0.0
      %635 = vadd.xlane.f32.xlu0 %v634
      %v636 = vpop.xlane.xlu0 %635
      %v637 = vsel %vm597, %v594, 0.0
      %638 = vadd.xlane.f32.xlu0 %v637
      %v639 = vpop.xlane.xlu0 %638
      %v640 = vsel %vm597, %v595, 0.0
      %641 = vadd.xlane.f32.xlu0 %v640
      %v642 = vpop.xlane.xlu0 %641
      %v643 = vsel %vm597, %v596, 0.0
      %644 = vadd.xlane.f32.xlu0 %v643
      %v645 = vpop.xlane.xlu0 %644
      %v662 = vlaneseq
      %v663 = vand.u32 %v662, 127
      %v664 = vlaneseq
      %v665 = vshrl.u32 %v664, 7
      %v666 = vsub.s32 %v663, %v665
      %v667 = vrot.slane %v600, %v666
      %v668 = vadd.s32 %v663, 4294967288
      %v669 = vlaneseq
      %v670 = vshrl.u32 %v669, 7
      %v671 = vsub.s32 %v668, %v670
      %v672 = vrot.slane %v603, %v671
      %vm673 = vcmask 130112
      %v674 = vsel %vm673, %v672, %v667
      %v675 = vlaneseq
      %v676 = vshrl.u32 %v675, 7
      %v677 = vsub.s32 %v663, %v676
      %v678 = vrot.slane %v606, %v677
      %v679 = vlaneseq
      %v680 = vshrl.u32 %v679, 7
      %v681 = vsub.s32 %v668, %v680
      %v682 = vrot.slane %v609, %v681
      %v683 = vsel %vm673, %v682, %v678
      %v684 = vlaneseq
      %v685 = vshrl.u32 %v684, 7
      %v686 = vsub.s32 %v663, %v685
      %v687 = vrot.slane %v612, %v686
      %v688 = vlaneseq
      %v689 = vshrl.u32 %v688, 7
      %v690 = vsub.s32 %v668, %v689
      %v691 = vrot.slane %v615, %v690
      %v692 = vsel %vm673, %v691, %v687
      %v693 = vlaneseq
      %v694 = vshrl.u32 %v693, 7
      %v695 = vsub.s32 %v663, %v694
      %v696 = vrot.slane %v618, %v695
      %v697 = vlaneseq
      %v698 = vshrl.u32 %v697, 7
      %v699 = vsub.s32 %v668, %v698
      %v700 = vrot.slane %v621, %v699
      %v701 = vsel %vm673, %v700, %v696
      %v702 = vlaneseq
      %v703 = vshrl.u32 %v702, 7
      %v704 = vsub.s32 %v663, %v703
      %v705 = vrot.slane %v624, %v704
      %v706 = vlaneseq
      %v707 = vshrl.u32 %v706, 7
      %v708 = vsub.s32 %v668, %v707
      %v709 = vrot.slane %v627, %v708
      %v710 = vsel %vm673, %v709, %v705
      %v711 = vlaneseq
      %v712 = vshrl.u32 %v711, 7
      %v713 = vsub.s32 %v663, %v712
      %v714 = vrot.slane %v630, %v713
      %v715 = vlaneseq
      %v716 = vshrl.u32 %v715, 7
      %v717 = vsub.s32 %v668, %v716
      %v718 = vrot.slane %v633, %v717
      %v719 = vsel %vm673, %v718, %v714
      %v720 = vlaneseq
      %v721 = vshrl.u32 %v720, 7
      %v722 = vsub.s32 %v663, %v721
      %v723 = vrot.slane %v636, %v722
      %v724 = vlaneseq
      %v725 = vshrl.u32 %v724, 7
      %v726 = vsub.s32 %v668, %v725
      %v727 = vrot.slane %v639, %v726
      %v728 = vsel %vm673, %v727, %v723
      %v729 = vlaneseq
      %v730 = vshrl.u32 %v729, 7
      %v731 = vsub.s32 %v663, %v730
      %v732 = vrot.slane %v642, %v731
      %v733 = vlaneseq
      %v734 = vshrl.u32 %v733, 7
      %v735 = vsub.s32 %v668, %v734
      %v736 = vrot.slane %v645, %v735
      %v737 = vsel %vm673, %v736, %v732
      %vm738 = vcmask 1041409
      %v739 = vsel %vm738, %v683, %v674
      %vm740 = vcmask 1042434
      %v741 = vsel %vm740, %v692, %v739
      %vm742 = vcmask 1043459
      %v743 = vsel %vm742, %v701, %v741
      %vm744 = vcmask 1044484
      %v745 = vsel %vm744, %v710, %v743
      %vm746 = vcmask 1045509
      %v747 = vsel %vm746, %v719, %v745
      %vm748 = vcmask 1046534
      %v749 = vsel %vm748, %v728, %v747
      %vm750 = vcmask 1047559
      %v751 = vsel %vm750, %v737, %v749
      %v753 = vsel %vm419, %v751, -1e+30
      %v754 = vsel %vm318, %v753, -inf
      %755 = vmax.xlane.f32.xlu0 %v754
      %v756 = vpop.xlane.xlu0 %755
      %v757 = vsub.f32 %v753, %v756
      %v758 = vmul.f32 %v757, 1.442695
      %v759 = vpow.pop %v758
      %v760 = vsel %vm419, %v759, 0.0
      %v761 = vsel %vm318, %v760, 0.0
      %762 = vadd.xlane.f32.xlu0 %v761
      %v763 = vpop.xlane.xlu0 %762
      %v764 = vmax.f32 %v763, 1e-20
      %v765 = vrcp.pop %v764
      %v766 = vpack.c.bf16 %v760, %v760
      %v767 = vpack.c.bf16 %v360, %v357
      %v769 = vsel %vm318, %v766, 0
      %771 = vmatprep.subr.bf16.mxu0 0
      %772 = vmatpush1.bf16.msra.mxu0 %v767
      %773 = vmatprep.subr.bf16.mxu0 0
      %774 = vmatpush1.bf16.msra.mxu0 0
      %775 = vmatprep.subr.bf16.mxu0 0
      %776 = vmatpush1.bf16.msra.mxu0 0
      %777 = vmatprep.subr.bf16.mxu0 0
      %778 = vmatpush1.bf16.msra.mxu0 0
      %779 = vmatprep.subr.bf16.mxu0 0
      %780 = vmatpush1.bf16.msra.mxu0 0
      %781 = vmatprep.subr.bf16.mxu0 0
      %782 = vmatpush1.bf16.msra.mxu0 0
      %783 = vmatprep.subr.bf16.mxu0 0
      %784 = vmatpush1.bf16.msra.mxu0 0
      %785 = vmatprep.subr.bf16.mxu0 0
      %786 = vmatpush1.bf16.msra.mxu0 0
      %787 = vmatprep.subr.bf16.mxu0 0
      %788 = vmatpush1.bf16.msra.mxu0 0
      %789 = vmatprep.subr.bf16.mxu0 0
      %790 = vmatpush1.bf16.msra.mxu0 0
      %791 = vmatprep.subr.bf16.mxu0 0
      %792 = vmatpush1.bf16.msra.mxu0 0
      %793 = vmatprep.subr.bf16.mxu0 0
      %794 = vmatpush1.bf16.msra.mxu0 0
      %795 = vmatprep.subr.bf16.mxu0 0
      %796 = vmatpush1.bf16.msra.mxu0 0
      %797 = vmatprep.subr.bf16.mxu0 0
      %798 = vmatpush1.bf16.msra.mxu0 0
      %799 = vmatprep.subr.bf16.mxu0 0
      %800 = vmatpush1.bf16.msra.mxu0 0
      %801 = vmatprep.subr.bf16.mxu0 0
      %802 = vmatpush1.bf16.msra.mxu0 0
      %803 = vmatprep.mubr.bf16.mxu0 0
      %804 = vmatmul.mubr.bf16.gmra.mrb[0].mxu0 %v769
      %v805 = vpop.f32.mrb[0].mxu0
      %v806 = vadd.f32 0.0, %v805
      %v807 = vpop.f32.mrb[0].mxu0
      %v808 = vpop.f32.mrb[0].mxu0
      %v809 = vpop.f32.mrb[0].mxu0
      %810 = vdwg.mxu0
      %v811 = vmul.f32 %v806, %v765
      %828 = vrot.lane.b32.xlu0 %v581, 120
      %v829 = vpop.permute.xlu0 %828
      %830 = vrot.lane.b32.xlu0 %v582, 120
      %v831 = vpop.permute.xlu0 %830
      %832 = vrot.lane.b32.xlu0 %v583, 120
      %v833 = vpop.permute.xlu0 %832
      %834 = vrot.lane.b32.xlu0 %v584, 120
      %v835 = vpop.permute.xlu0 %834
      %836 = vrot.lane.b32.xlu0 %v585, 120
      %v837 = vpop.permute.xlu0 %836
      %838 = vrot.lane.b32.xlu0 %v586, 120
      %v839 = vpop.permute.xlu0 %838
      %840 = vrot.lane.b32.xlu0 %v587, 120
      %v841 = vpop.permute.xlu0 %840
      %842 = vrot.lane.b32.xlu0 %v588, 120
      %v843 = vpop.permute.xlu0 %842
      %844 = vrot.lane.b32.xlu0 %v589, 120
      %v845 = vpop.permute.xlu0 %844
      %846 = vrot.lane.b32.xlu0 %v590, 120
      %v847 = vpop.permute.xlu0 %846
      %848 = vrot.lane.b32.xlu0 %v591, 120
      %v849 = vpop.permute.xlu0 %848
      %850 = vrot.lane.b32.xlu0 %v592, 120
      %v851 = vpop.permute.xlu0 %850
      %852 = vrot.lane.b32.xlu0 %v593, 120
      %v853 = vpop.permute.xlu0 %852
      %854 = vrot.lane.b32.xlu0 %v594, 120
      %v855 = vpop.permute.xlu0 %854
      %856 = vrot.lane.b32.xlu0 %v595, 120
      %v857 = vpop.permute.xlu0 %856
      %858 = vrot.lane.b32.xlu0 %v596, 120
      %v859 = vpop.permute.xlu0 %858
      %v876 = vsel %vm597, %v829, 0.0
      %877 = vadd.xlane.f32.xlu0 %v876
      %v878 = vpop.xlane.xlu0 %877
      %v879 = vsel %vm597, %v831, 0.0
      %880 = vadd.xlane.f32.xlu0 %v879
      %v881 = vpop.xlane.xlu0 %880
      %v882 = vsel %vm597, %v833, 0.0
      %883 = vadd.xlane.f32.xlu0 %v882
      %v884 = vpop.xlane.xlu0 %883
      %v885 = vsel %vm597, %v835, 0.0
      %886 = vadd.xlane.f32.xlu0 %v885
      %v887 = vpop.xlane.xlu0 %886
      %v888 = vsel %vm597, %v837, 0.0
      %889 = vadd.xlane.f32.xlu0 %v888
      %v890 = vpop.xlane.xlu0 %889
      %v891 = vsel %vm597, %v839, 0.0
      %892 = vadd.xlane.f32.xlu0 %v891
      %v893 = vpop.xlane.xlu0 %892
      %v894 = vsel %vm597, %v841, 0.0
      %895 = vadd.xlane.f32.xlu0 %v894
      %v896 = vpop.xlane.xlu0 %895
      %v897 = vsel %vm597, %v843, 0.0
      %898 = vadd.xlane.f32.xlu0 %v897
      %v899 = vpop.xlane.xlu0 %898
      %v900 = vsel %vm597, %v845, 0.0
      %901 = vadd.xlane.f32.xlu0 %v900
      %v902 = vpop.xlane.xlu0 %901
      %v903 = vsel %vm597, %v847, 0.0
      %904 = vadd.xlane.f32.xlu0 %v903
      %v905 = vpop.xlane.xlu0 %904
      %v906 = vsel %vm597, %v849, 0.0
      %907 = vadd.xlane.f32.xlu0 %v906
      %v908 = vpop.xlane.xlu0 %907
      %v909 = vsel %vm597, %v851, 0.0
      %910 = vadd.xlane.f32.xlu0 %v909
      %v911 = vpop.xlane.xlu0 %910
      %v912 = vsel %vm597, %v853, 0.0
      %913 = vadd.xlane.f32.xlu0 %v912
      %v914 = vpop.xlane.xlu0 %913
      %v915 = vsel %vm597, %v855, 0.0
      %916 = vadd.xlane.f32.xlu0 %v915
      %v917 = vpop.xlane.xlu0 %916
      %v918 = vsel %vm597, %v857, 0.0
      %919 = vadd.xlane.f32.xlu0 %v918
      %v920 = vpop.xlane.xlu0 %919
      %v921 = vsel %vm597, %v859, 0.0
      %922 = vadd.xlane.f32.xlu0 %v921
      %v923 = vpop.xlane.xlu0 %922
      %v940 = vlaneseq
      %v941 = vshrl.u32 %v940, 7
      %v942 = vsub.s32 %v663, %v941
      %v943 = vrot.slane %v878, %v942
      %v944 = vlaneseq
      %v945 = vshrl.u32 %v944, 7
      %v946 = vsub.s32 %v668, %v945
      %v947 = vrot.slane %v881, %v946
      %v948 = vsel %vm673, %v947, %v943
      %v949 = vlaneseq
      %v950 = vshrl.u32 %v949, 7
      %v951 = vsub.s32 %v663, %v950
      %v952 = vrot.slane %v884, %v951
      %v953 = vlaneseq
      %v954 = vshrl.u32 %v953, 7
      %v955 = vsub.s32 %v668, %v954
      %v956 = vrot.slane %v887, %v955
      %v957 = vsel %vm673, %v956, %v952
      %v958 = vlaneseq
      %v959 = vshrl.u32 %v958, 7
      %v960 = vsub.s32 %v663, %v959
      %v961 = vrot.slane %v890, %v960
      %v962 = vlaneseq
      %v963 = vshrl.u32 %v962, 7
      %v964 = vsub.s32 %v668, %v963
      %v965 = vrot.slane %v893, %v964
      %v966 = vsel %vm673, %v965, %v961
      %v967 = vlaneseq
      %v968 = vshrl.u32 %v967, 7
      %v969 = vsub.s32 %v663, %v968
      %v970 = vrot.slane %v896, %v969
      %v971 = vlaneseq
      %v972 = vshrl.u32 %v971, 7
      %v973 = vsub.s32 %v668, %v972
      %v974 = vrot.slane %v899, %v973
      %v975 = vsel %vm673, %v974, %v970
      %v976 = vlaneseq
      %v977 = vshrl.u32 %v976, 7
      %v978 = vsub.s32 %v663, %v977
      %v979 = vrot.slane %v902, %v978
      %v980 = vlaneseq
      %v981 = vshrl.u32 %v980, 7
      %v982 = vsub.s32 %v668, %v981
      %v983 = vrot.slane %v905, %v982
      %v984 = vsel %vm673, %v983, %v979
      %v985 = vlaneseq
      %v986 = vshrl.u32 %v985, 7
      %v987 = vsub.s32 %v663, %v986
      %v988 = vrot.slane %v908, %v987
      %v989 = vlaneseq
      %v990 = vshrl.u32 %v989, 7
      %v991 = vsub.s32 %v668, %v990
      %v992 = vrot.slane %v911, %v991
      %v993 = vsel %vm673, %v992, %v988
      %v994 = vlaneseq
      %v995 = vshrl.u32 %v994, 7
      %v996 = vsub.s32 %v663, %v995
      %v997 = vrot.slane %v914, %v996
      %v998 = vlaneseq
      %v999 = vshrl.u32 %v998, 7
      %v1000 = vsub.s32 %v668, %v999
      %v1001 = vrot.slane %v917, %v1000
      %v1002 = vsel %vm673, %v1001, %v997
      %v1003 = vlaneseq
      %v1004 = vshrl.u32 %v1003, 7
      %v1005 = vsub.s32 %v663, %v1004
      %v1006 = vrot.slane %v920, %v1005
      %v1007 = vlaneseq
      %v1008 = vshrl.u32 %v1007, 7
      %v1009 = vsub.s32 %v668, %v1008
      %v1010 = vrot.slane %v923, %v1009
      %v1011 = vsel %vm673, %v1010, %v1006
      %v1012 = vsel %vm738, %v957, %v948
      %v1013 = vsel %vm740, %v966, %v1012
      %v1014 = vsel %vm742, %v975, %v1013
      %v1015 = vsel %vm744, %v984, %v1014
      %v1016 = vsel %vm746, %v993, %v1015
      %v1017 = vsel %vm748, %v1002, %v1016
      %v1018 = vsel %vm750, %v1011, %v1017
      %v1020 = vsel %vm419, %v1018, -1e+30
      %v1021 = vsel %vm318, %v1020, -inf
      %1022 = vmax.xlane.f32.xlu0 %v1021
      %v1023 = vpop.xlane.xlu0 %1022
      %v1024 = vsub.f32 %v1020, %v1023
      %v1025 = vmul.f32 %v1024, 1.442695
      %v1026 = vpow.pop %v1025
      %v1027 = vsel %vm419, %v1026, 0.0
      %v1028 = vsel %vm318, %v1027, 0.0
      %1029 = vadd.xlane.f32.xlu0 %v1028
      %v1030 = vpop.xlane.xlu0 %1029
      %v1031 = vmax.f32 %v1030, 1e-20
      %v1032 = vrcp.pop %v1031
      %v1033 = vpack.c.bf16 %v1027, %v1027
      %1035 = vrot.lane.b32.xlu0 %v767, 120
      %v1036 = vpop.permute.xlu0 %1035
      %v1039 = vsel %vm318, %v1033, 0
      %1041 = vmatprep.subr.bf16.mxu0 0
      %1042 = vmatpush1.bf16.msra.mxu0 %v1036
      %1043 = vmatprep.subr.bf16.mxu0 0
      %1044 = vmatpush1.bf16.msra.mxu0 0
      %1045 = vmatprep.subr.bf16.mxu0 0
      %1046 = vmatpush1.bf16.msra.mxu0 0
      %1047 = vmatprep.subr.bf16.mxu0 0
      %1048 = vmatpush1.bf16.msra.mxu0 0
      %1049 = vmatprep.subr.bf16.mxu0 0
      %1050 = vmatpush1.bf16.msra.mxu0 0
      %1051 = vmatprep.subr.bf16.mxu0 0
      %1052 = vmatpush1.bf16.msra.mxu0 0
      %1053 = vmatprep.subr.bf16.mxu0 0
      %1054 = vmatpush1.bf16.msra.mxu0 0
      %1055 = vmatprep.subr.bf16.mxu0 0
      %1056 = vmatpush1.bf16.msra.mxu0 0
      %1057 = vmatprep.subr.bf16.mxu0 0
      %1058 = vmatpush1.bf16.msra.mxu0 0
      %1059 = vmatprep.subr.bf16.mxu0 0
      %1060 = vmatpush1.bf16.msra.mxu0 0
      %1061 = vmatprep.subr.bf16.mxu0 0
      %1062 = vmatpush1.bf16.msra.mxu0 0
      %1063 = vmatprep.subr.bf16.mxu0 0
      %1064 = vmatpush1.bf16.msra.mxu0 0
      %1065 = vmatprep.subr.bf16.mxu0 0
      %1066 = vmatpush1.bf16.msra.mxu0 0
      %1067 = vmatprep.subr.bf16.mxu0 0
      %1068 = vmatpush1.bf16.msra.mxu0 0
      %1069 = vmatprep.subr.bf16.mxu0 0
      %1070 = vmatpush1.bf16.msra.mxu0 0
      %1071 = vmatprep.subr.bf16.mxu0 0
      %1072 = vmatpush1.bf16.msra.mxu0 0
      %1073 = vmatprep.mubr.bf16.mxu0 0
      %1074 = vmatmul.mubr.bf16.gmra.mrb[0].mxu0 %v1039
      %v1075 = vpop.f32.mrb[0].mxu0
      %v1076 = vadd.f32 0.0, %v1075
      %v1077 = vpop.f32.mrb[0].mxu0
      %v1078 = vpop.f32.mrb[0].mxu0
      %v1079 = vpop.f32.mrb[0].mxu0
      %1080 = vdwg.mxu0
      %v1081 = vmul.f32 %v1076, %v1032
      %1083 = vrot.lane.b32.xlu0 %v1081, 8
      %v1084 = vpop.permute.xlu0 %1083
      %v1086 = vsel %vm597, %v811, %v1084
      %v1087 = vld [vmem:[%s6] sm:$0x1]
      %v1089 = vlaneseq
      %v1090 = vshrl.u32 %v1089, 7
      %v1091 = vsub.s32 0, %v1090
      %v1092 = vrot.slane %v1087, %v1091
      %v1094 = vadd.f32 %v1086, %v1092
      %1095 = vst.msk [vmem:[%s300] sm:$0xff] %vm318, %v1094
      %p1096 = scmp.lt.s32.totalorder %s19, 1
      %s1097 = scalar_select %p1096, %s19, 1
      %s1098 = smul.addr %s1097, 8
      %s1099 = scalar_lea.vmem %s8, %s1098
      // Predicated region
      $region53: #{_lambda_.5} parent=51 // pred_check
        %p1100 = pneg %p210
      $region54: #{_lambda_.5} parent=51 // pred_check_branch
        %1102 = sbr.rel (%p1100) target = $region56
      $region55: #{_lambda_.5} parent=51 // pred_region
        _
      $region56: #{_lambda_.5} parent=51 // pred_fallthru
        _
    $region52: #{_lambda_.5} parent=5 // pred_fallthru
      _
    %p1103 = scmp.le.s32.totalorder 2, %s14
    // Predicated region
    $region57: #{_lambda_.5} parent=5 // pred_check
      %p1104 = pneg %p1103
    $region58: #{_lambda_.5} parent=5 // pred_check_branch
      %1106 = sbr.rel (%p1104) target = $region60
    $region59: #{_lambda_.5} parent=5 // pred_region
      %s1107 = ssub.s32 %s14, 2
      // Predicated region
      $region61: #{_lambda_.5} parent=59 // pred_check
        %p1108 = pneg %p216
      $region62: #{_lambda_.5} parent=59 // pred_check_branch
        %1110 = sbr.rel (%p1108) target = $region64
      $region63: #{_lambda_.5} parent=59 // pred_region
        %p1111 = scmp.lt.s32.totalorder %s20, 1
        %s1112 = scalar_select %p1111, %s20, 1
        %s1113 = smul.addr %s1112, 8
        %s1114 = scalar_lea.vmem %s8, %s1113
      $region64: #{_lambda_.5} parent=59 // pred_fallthru
        _
    $region60: #{_lambda_.5} parent=5 // pred_fallthru
      _
  $region6: #{_lambda_.5} parent=0 // loop_footer
    %s18 = sadd.s32 1, %s14
  $region7: #{_lambda_.5} parent=0 // loop_footer_branch
    %13 = sbr.rel target = $region3
  $region8: #{_lambda_.5} parent=0 // loop_exit
    _

// kernel: _lambda_.4
$region0: #{_lambda_.4}
  #allocation0 [shape = 'u32[]', space=smem, size = 0x4, offset = 0x4, fixed_abs, tag = 'smem constant byte address 0x4 - core index']
  #allocation1 [shape = 'u32[144,128]{1,0:T(1,128)}', space=vmem, size = 0x12000, scoped, tag = 'internal scratch']
  %s0 = inlined_call_operand.vmem [shape: f32[16,4], index: 0, kind: input, shape index: {}]
  %s1 = inlined_call_operand.vmem [shape: f32[4,16], index: 1, kind: input, shape index: {}]
  %s2 = inlined_call_operand.vmem [shape: f32[4,16], index: 2, kind: input, shape index: {}]
  %s3 = inlined_call_operand.vmem [shape: f32[1,16], index: 3, kind: input, shape index: {}, may-alias: {3,4,6}]
  %s4 = inlined_call_operand.vmem [shape: f32[1,16], index: 4, kind: input, shape index: {}, may-alias: {3,4,6}]
  %s5 = inlined_call_operand.vmem [shape: f32[1,16], index: 5, kind: input, shape index: {}]
  %s6 = inlined_call_operand.vmem [shape: f32[1,16], index: 6, kind: input, shape index: {}, may-alias: {3,4,6}]
  %s7 = inlined_call_operand.vmem [shape: bf16[16,16], index: 7, kind: input, shape index: {}]
  %s8 = inlined_call_operand.vmem [shape: f32[16,16], index: 8, kind: output, shape index: {}]
  %s9 = sld [smem:[#allocation0]]
  $region65: #{_lambda_.4} parent=0
    _
  %s11 = ssub.s32 1, %s9
  %s12 = scalar_select 0, %s11, %s9
  loop: start=0, step=1, limit=4
  $region2: #{_lambda_.4} parent=0 // loop_pre_header
    _
  $region3: #{_lambda_.4} parent=0 // loop_header
    %s14 = sphi 0, %s18
    %p15 = scmp.ge.s32.totalorder %s14, 4
    %s22 = sphi 0, %s22
    %s24 = sphi 0, %s22
    %s25 = sphi 0, %s24
    %s39 = sphi 0, %s25
    %s43 = sphi 0, %s43
    %s45 = sphi 0, %s43
    %s46 = sphi 0, %s45
    %s60 = sphi 0, %s46
    %s64 = sphi 0, %s64
    %s66 = sphi 0, %s64
    %s67 = sphi 0, %s66
    %s81 = sphi 0, %s67
    %s85 = sphi 0, %s85
    %s87 = sphi 0, %s85
    %s88 = sphi 0, %s87
    %s102 = sphi 0, %s88
    %s106 = sphi 0, %s106
    %s108 = sphi 0, %s106
    %s109 = sphi 0, %s108
    %s123 = sphi 0, %s109
    %s127 = sphi 0, %s127
    %s129 = sphi 0, %s127
    %s130 = sphi 0, %s129
    %s144 = sphi 0, %s130
    %s148 = sphi 0, %s148
    %s150 = sphi 0, %s148
    %s151 = sphi 0, %s150
    %s165 = sphi 0, %s151
    %s171 = sphi 0, %s173
    %s174 = sphi 0, %s171
    %s175 = sphi 0, %s174
    %s191 = sphi 0, %s175
    %s197 = sphi 0, %s199
    %s200 = sphi 0, %s197
    %s201 = sphi 0, %s200
    %s217 = sphi 0, %s201
  $region4: #{_lambda_.4} parent=0 // loop_header_branch
    %17 = sbr.rel (%p15) target = $region8
  $region5: #{_lambda_.4} parent=0 // loop_body
    %s19 = ssub.s32 %s14, 1
    %s20 = ssub.s32 %s14, 2
    %s21 = sadd.s32 %s14, 1
    %s23 = sadd.s32 %s22, 1
    %p26 = scmp.eq.s32.totalorder %s14, 1
    %p27 = scmp.ne.s32.totalorder %s22, %s24
    %p28 = scmp.eq.s32.totalorder %s14, 0
    %p29 = por %p27, %p28
    %p30 = scmp.ne.s32.totalorder %s22, %s24
    %p31 = scmp.eq.s32.totalorder %s19, 1
    %p32 = por %p30, %p31
    %p33 = scmp.ne.s32.totalorder %s24, %s25
    %p34 = scmp.eq.s32.totalorder %s19, 0
    %p35 = por %p33, %p34
    %p36 = scmp.ne.s32.totalorder %s24, %s25
    %p37 = scmp.eq.s32.totalorder %s20, 1
    %p38 = por %p36, %p37
    %p40 = scmp.ne.s32.totalorder %s25, %s39
    %p41 = scmp.eq.s32.totalorder %s20, 0
    %p42 = por %p40, %p41
    %s44 = sadd.s32 %s43, 1
    %p47 = scmp.eq.s32.totalorder %s14, 1
    %p48 = scmp.ne.s32.totalorder %s43, %s45
    %p49 = scmp.eq.s32.totalorder %s14, 0
    %p50 = por %p48, %p49
    %p51 = scmp.ne.s32.totalorder %s43, %s45
    %p52 = scmp.eq.s32.totalorder %s19, 1
    %p53 = por %p51, %p52
    %p54 = scmp.ne.s32.totalorder %s45, %s46
    %p55 = scmp.eq.s32.totalorder %s19, 0
    %p56 = por %p54, %p55
    %p57 = scmp.ne.s32.totalorder %s45, %s46
    %p58 = scmp.eq.s32.totalorder %s20, 1
    %p59 = por %p57, %p58
    %p61 = scmp.ne.s32.totalorder %s46, %s60
    %p62 = scmp.eq.s32.totalorder %s20, 0
    %p63 = por %p61, %p62
    %s65 = sadd.s32 %s64, 1
    %p68 = scmp.eq.s32.totalorder %s14, 1
    %p69 = scmp.ne.s32.totalorder %s64, %s66
    %p70 = scmp.eq.s32.totalorder %s14, 0
    %p71 = por %p69, %p70
    %p72 = scmp.ne.s32.totalorder %s64, %s66
    %p73 = scmp.eq.s32.totalorder %s19, 1
    %p74 = por %p72, %p73
    %p75 = scmp.ne.s32.totalorder %s66, %s67
    %p76 = scmp.eq.s32.totalorder %s19, 0
    %p77 = por %p75, %p76
    %p78 = scmp.ne.s32.totalorder %s66, %s67
    %p79 = scmp.eq.s32.totalorder %s20, 1
    %p80 = por %p78, %p79
    %p82 = scmp.ne.s32.totalorder %s67, %s81
    %p83 = scmp.eq.s32.totalorder %s20, 0
    %p84 = por %p82, %p83
    %s86 = sadd.s32 %s85, 1
    %p89 = scmp.eq.s32.totalorder %s14, 1
    %p90 = scmp.ne.s32.totalorder %s85, %s87
    %p91 = scmp.eq.s32.totalorder %s14, 0
    %p92 = por %p90, %p91
    %p93 = scmp.ne.s32.totalorder %s85, %s87
    %p94 = scmp.eq.s32.totalorder %s19, 1
    %p95 = por %p93, %p94
    %p96 = scmp.ne.s32.totalorder %s87, %s88
    %p97 = scmp.eq.s32.totalorder %s19, 0
    %p98 = por %p96, %p97
    %p99 = scmp.ne.s32.totalorder %s87, %s88
    %p100 = scmp.eq.s32.totalorder %s20, 1
    %p101 = por %p99, %p100
    %p103 = scmp.ne.s32.totalorder %s88, %s102
    %p104 = scmp.eq.s32.totalorder %s20, 0
    %p105 = por %p103, %p104
    %s107 = sadd.s32 %s106, 1
    %p110 = scmp.eq.s32.totalorder %s14, 1
    %p111 = scmp.ne.s32.totalorder %s106, %s108
    %p112 = scmp.eq.s32.totalorder %s14, 0
    %p113 = por %p111, %p112
    %p114 = scmp.ne.s32.totalorder %s106, %s108
    %p115 = scmp.eq.s32.totalorder %s19, 1
    %p116 = por %p114, %p115
    %p117 = scmp.ne.s32.totalorder %s108, %s109
    %p118 = scmp.eq.s32.totalorder %s19, 0
    %p119 = por %p117, %p118
    %p120 = scmp.ne.s32.totalorder %s108, %s109
    %p121 = scmp.eq.s32.totalorder %s20, 1
    %p122 = por %p120, %p121
    %p124 = scmp.ne.s32.totalorder %s109, %s123
    %p125 = scmp.eq.s32.totalorder %s20, 0
    %p126 = por %p124, %p125
    %s128 = sadd.s32 %s127, 1
    %p131 = scmp.eq.s32.totalorder %s14, 1
    %p132 = scmp.ne.s32.totalorder %s127, %s129
    %p133 = scmp.eq.s32.totalorder %s14, 0
    %p134 = por %p132, %p133
    %p135 = scmp.ne.s32.totalorder %s127, %s129
    %p136 = scmp.eq.s32.totalorder %s19, 1
    %p137 = por %p135, %p136
    %p138 = scmp.ne.s32.totalorder %s129, %s130
    %p139 = scmp.eq.s32.totalorder %s19, 0
    %p140 = por %p138, %p139
    %p141 = scmp.ne.s32.totalorder %s129, %s130
    %p142 = scmp.eq.s32.totalorder %s20, 1
    %p143 = por %p141, %p142
    %p145 = scmp.ne.s32.totalorder %s130, %s144
    %p146 = scmp.eq.s32.totalorder %s20, 0
    %p147 = por %p145, %p146
    %s149 = sadd.s32 %s148, 1
    %p152 = scmp.eq.s32.totalorder %s14, 1
    %p153 = scmp.ne.s32.totalorder %s148, %s150
    %p154 = scmp.eq.s32.totalorder %s14, 0
    %p155 = por %p153, %p154
    %p156 = scmp.ne.s32.totalorder %s148, %s150
    %p157 = scmp.eq.s32.totalorder %s19, 1
    %p158 = por %p156, %p157
    %p159 = scmp.ne.s32.totalorder %s150, %s151
    %p160 = scmp.eq.s32.totalorder %s19, 0
    %p161 = por %p159, %p160
    %p162 = scmp.ne.s32.totalorder %s150, %s151
    %p163 = scmp.eq.s32.totalorder %s20, 1
    %p164 = por %p162, %p163
    %p166 = scmp.ne.s32.totalorder %s151, %s165
    %p167 = scmp.eq.s32.totalorder %s20, 0
    %p168 = por %p166, %p167
    %s169 = ssub.s32 %s14, %s21
    %p170 = scmp.eq.s32.totalorder %s169, 0
    %s172 = sadd.s32 %s171, 1
    %s173 = scalar_select %p170, %s171, %s172
    %p176 = pneg %p170
    %p177 = scmp.eq.s32.totalorder %s14, 1
    %p178 = por %p176, %p177
    %p179 = scmp.ne.s32.totalorder %s171, %s174
    %p180 = scmp.eq.s32.totalorder %s14, 0
    %p181 = por %p179, %p180
    %p182 = scmp.ne.s32.totalorder %s171, %s174
    %p183 = scmp.eq.s32.totalorder %s19, 1
    %p184 = por %p182, %p183
    %p185 = scmp.ne.s32.totalorder %s174, %s175
    %p186 = scmp.eq.s32.totalorder %s19, 0
    %p187 = por %p185, %p186
    %p188 = scmp.ne.s32.totalorder %s174, %s175
    %p189 = scmp.eq.s32.totalorder %s20, 1
    %p190 = por %p188, %p189
    %p192 = scmp.ne.s32.totalorder %s175, %s191
    %p193 = scmp.eq.s32.totalorder %s20, 0
    %p194 = por %p192, %p193
    %s195 = ssub.s32 %s14, %s21
    %p196 = scmp.eq.s32.totalorder %s195, 0
    %s198 = sadd.s32 %s197, 1
    %s199 = scalar_select %p196, %s197, %s198
    %p202 = pneg %p196
    %p203 = scmp.eq.s32.totalorder %s14, 1
    %p204 = por %p202, %p203
    %p205 = scmp.ne.s32.totalorder %s197, %s200
    %p206 = scmp.eq.s32.totalorder %s14, 0
    %p207 = por %p205, %p206
    %p208 = scmp.ne.s32.totalorder %s197, %s200
    %p209 = scmp.eq.s32.totalorder %s19, 1
    %p210 = por %p208, %p209
    %p211 = scmp.ne.s32.totalorder %s200, %s201
    %p212 = scmp.eq.s32.totalorder %s19, 0
    %p213 = por %p211, %p212
    %p214 = scmp.ne.s32.totalorder %s200, %s201
    %p215 = scmp.eq.s32.totalorder %s20, 1
    %p216 = por %p214, %p215
    %p218 = scmp.ne.s32.totalorder %s201, %s217
    %p219 = scmp.eq.s32.totalorder %s20, 0
    %p220 = por %p218, %p219
    %p221 = scmp.le.s32.totalorder 1, %s14
    %p222 = scmp.lt.s32.totalorder %s14, 3
    %p223 = pnand %p221, %p222
    %p224 = pneg %p223
    // Predicated region
    $region9: #{_lambda_.4} parent=5 // pred_check
      _
    $region10: #{_lambda_.4} parent=5 // pred_check_branch
      %226 = sbr.rel (%p223) target = $region12
    $region11: #{_lambda_.4} parent=5 // pred_region
      %s227 = ssub.s32 %s14, 1
      // Predicated region
      $region13: #{_lambda_.4} parent=11 // pred_check
        %p228 = pneg %p35
      $region14: #{_lambda_.4} parent=11 // pred_check_branch
        %230 = sbr.rel (%p228) target = $region16
      $region15: #{_lambda_.4} parent=11 // pred_region
        _
      $region16: #{_lambda_.4} parent=11 // pred_fallthru
        _
      // Predicated region
      $region17: #{_lambda_.4} parent=11 // pred_check
        %p231 = pneg %p56
      $region18: #{_lambda_.4} parent=11 // pred_check_branch
        %233 = sbr.rel (%p231) target = $region20
      $region19: #{_lambda_.4} parent=11 // pred_region
        _
      $region20: #{_lambda_.4} parent=11 // pred_fallthru
        _
      // Predicated region
      $region21: #{_lambda_.4} parent=11 // pred_check
        %p234 = pneg %p77
      $region22: #{_lambda_.4} parent=11 // pred_check_branch
        %236 = sbr.rel (%p234) target = $region24
      $region23: #{_lambda_.4} parent=11 // pred_region
        _
      $region24: #{_lambda_.4} parent=11 // pred_fallthru
        _
      // Predicated region
      $region25: #{_lambda_.4} parent=11 // pred_check
        %p237 = pneg %p98
      $region26: #{_lambda_.4} parent=11 // pred_check_branch
        %239 = sbr.rel (%p237) target = $region28
      $region27: #{_lambda_.4} parent=11 // pred_region
        _
      $region28: #{_lambda_.4} parent=11 // pred_fallthru
        _
      // Predicated region
      $region29: #{_lambda_.4} parent=11 // pred_check
        %p240 = pneg %p119
      $region30: #{_lambda_.4} parent=11 // pred_check_branch
        %242 = sbr.rel (%p240) target = $region32
      $region31: #{_lambda_.4} parent=11 // pred_region
        _
      $region32: #{_lambda_.4} parent=11 // pred_fallthru
        _
      // Predicated region
      $region33: #{_lambda_.4} parent=11 // pred_check
        %p243 = pneg %p140
      $region34: #{_lambda_.4} parent=11 // pred_check_branch
        %245 = sbr.rel (%p243) target = $region36
      $region35: #{_lambda_.4} parent=11 // pred_region
        _
      $region36: #{_lambda_.4} parent=11 // pred_fallthru
        _
      // Predicated region
      $region37: #{_lambda_.4} parent=11 // pred_check
        %p246 = pneg %p161
      $region38: #{_lambda_.4} parent=11 // pred_check_branch
        %248 = sbr.rel (%p246) target = $region40
      $region39: #{_lambda_.4} parent=11 // pred_region
        _
      $region40: #{_lambda_.4} parent=11 // pred_fallthru
        _
    $region12: #{_lambda_.4} parent=5 // pred_fallthru
      _
    %p249 = scmp.lt.s32.totalorder %s14, 2
    // Predicated region
    $region41: #{_lambda_.4} parent=5 // pred_check
      %p250 = pneg %p249
    $region42: #{_lambda_.4} parent=5 // pred_check_branch
      %252 = sbr.rel (%p250) target = $region44
    $region43: #{_lambda_.4} parent=5 // pred_region
      // Predicated region
      $region45: #{_lambda_.4} parent=43 // pred_check
        %p253 = pneg %p181
      $region46: #{_lambda_.4} parent=43 // pred_check_branch
        %255 = sbr.rel (%p253) target = $region48
      $region47: #{_lambda_.4} parent=43 // pred_region
        %p256 = scmp.lt.s32.totalorder %s14, 1
        %s257 = scalar_select %p256, %s14, 1
        %s258 = smul.addr %s257, 4
        %s259 = scalar_lea.vmem %s7, %s258
      $region48: #{_lambda_.4} parent=43 // pred_fallthru
        _
    $region44: #{_lambda_.4} parent=5 // pred_fallthru
      _
    %p260 = scmp.le.s32.totalorder 1, %s14
    %p261 = scmp.lt.s32.totalorder %s14, 3
    %p262 = pnand %p260, %p261
    %p263 = pneg %p262
    // Predicated region
    $region49: #{_lambda_.4} parent=5 // pred_check
      _
    $region50: #{_lambda_.4} parent=5 // pred_check_branch
      %265 = sbr.rel (%p262) target = $region52
    $region51: #{_lambda_.4} parent=5 // pred_region
      %s266 = ssub.s32 %s14, 1
      %p267 = pneg %p35
      %p268 = pneg %p32
      %p269 = pneg %p56
      %p270 = pneg %p53
      %p271 = pneg %p77
      %p272 = pneg %p74
      %p273 = pneg %p98
      %p274 = pneg %p95
      %p275 = pneg %p119
      %p276 = pneg %p116
      %p277 = pneg %p140
      %p278 = pneg %p137
      %p279 = pneg %p161
      %p280 = pneg %p158
      %p281 = scmp.lt.s32.totalorder %s19, 1
      %s282 = scalar_select %p281, %s19, 1
      %s283 = smul.addr %s282, 4
      %s284 = scalar_lea.vmem %s7, %s283
      %p285 = pneg %p187
      %p286 = pneg %p184
      %p287 = pneg %p213
      %p288 = pneg %p210
      %p289 = scmp.lt.s32.totalorder %s19, 1
      %s290 = scalar_select %p289, %s19, 1
      %s291 = smul.addr %s290, 8
      %s292 = scalar_lea.vmem %s8, %s291
      %p293 = scmp.lt.s32.totalorder %s19, 1
      %s294 = scalar_select %p293, %s19, 1
      %s295 = smul.addr %s294, 4
      %s296 = scalar_lea.vmem %s7, %s295
      %p297 = scmp.lt.s32.totalorder %s19, 1
      %s298 = scalar_select %p297, %s19, 1
      %s299 = smul.addr %s298, 8
      %s300 = scalar_lea.vmem %s8, %s299
      %v302 = vld [vmem:[%s0] sm:$0xff]
      %v303 = vld [vmem:[%s0 + $0x8] sm:$0xff]
      %v304 = vpack.c.bf16 %v303, %v302
      %v305 = vld [vmem:[%s1] sm:$0xf]
      %v306 = vpack.c.bf16 %v305, %v305
      %v307 = vld [vmem:[%s2] sm:$0xf]
      %v308 = vpack.c.bf16 %v307, %v307
      %v309 = vld [vmem:[%s3] sm:$0x1]
      %v311 = vlaneseq
      %v312 = vshrl.u32 %v311, 7
      %v313 = vsub.s32 0, %v312
      %v314 = vrot.slane %v309, %v313
      %vm316 = vcmask 31744
      %v318 = vsel %vm316, %v304, 0
      %vm320 = vcmask 1041408
      %v322 = vsel %vm320, %v306, 0
      %324 = vmatprep.subr.bf16.mxu0 0
      %325 = vmatpush1.bf16.msra.mxu0 %v322
      %326 = vmatprep.subr.bf16.mxu0 0
      %327 = vmatpush1.bf16.msra.mxu0 0
      %328 = vmatprep.subr.bf16.mxu0 0
      %329 = vmatpush1.bf16.msra.mxu0 0
      %330 = vmatprep.subr.bf16.mxu0 0
      %331 = vmatpush1.bf16.msra.mxu0 0
      %332 = vmatprep.subr.bf16.mxu0 0
      %333 = vmatpush1.bf16.msra.mxu0 0
      %334 = vmatprep.subr.bf16.mxu0 0
      %335 = vmatpush1.bf16.msra.mxu0 0
      %336 = vmatprep.subr.bf16.mxu0 0
      %337 = vmatpush1.bf16.msra.mxu0 0
      %338 = vmatprep.subr.bf16.mxu0 0
      %339 = vmatpush1.bf16.msra.mxu0 0
      %340 = vmatprep.subr.bf16.mxu0 0
      %341 = vmatpush1.bf16.msra.mxu0 0
      %342 = vmatprep.subr.bf16.mxu0 0
      %343 = vmatpush1.bf16.msra.mxu0 0
      %344 = vmatprep.subr.bf16.mxu0 0
      %345 = vmatpush1.bf16.msra.mxu0 0
      %346 = vmatprep.subr.bf16.mxu0 0
      %347 = vmatpush1.bf16.msra.mxu0 0
      %348 = vmatprep.subr.bf16.mxu0 0
      %349 = vmatpush1.bf16.msra.mxu0 0
      %350 = vmatprep.subr.bf16.mxu0 0
      %351 = vmatpush1.bf16.msra.mxu0 0
      %352 = vmatprep.subr.bf16.mxu0 0
      %353 = vmatpush1.bf16.msra.mxu0 0
      %354 = vmatprep.subr.bf16.mxu0 0
      %355 = vmatpush1.bf16.msra.mxu0 0
      %356 = vmatprep.mubr.bf16.mxu0 0
      %357 = vmatmul.mubr.bf16.gmra.mrb[0].mxu0 %v318
      %v358 = vpop.f32.mrb[0].mxu0
      %v359 = vadd.f32 %v314, %v358
      %v360 = vpop.f32.mrb[0].mxu0
      %v361 = vpop.f32.mrb[0].mxu0
      %v362 = vadd.f32 %v314, %v361
      %v363 = vpop.f32.mrb[0].mxu0
      %364 = vdwg.mxu0
      %s365 = smul.u32 %s19, 8
      %s366 = scalar_lea.vmem %s0, %s365
      %v367 = vld [vmem:[%s366] sm:$0xff]
      %v368 = vpack.c.bf16 %v367, %v367
      %v369 = vld [vmem:[%s4] sm:$0x1]
      %v371 = vlaneseq
      %v372 = vshrl.u32 %v371, 7
      %v373 = vsub.s32 0, %v372
      %v374 = vrot.slane %v369, %v373
      %v377 = vsel %vm316, %v368, 0
      %v380 = vsel %vm320, %v308, 0
      %382 = vmatprep.subr.bf16.mxu0 0
      %383 = vmatpush1.bf16.msra.mxu0 %v380
      %384 = vmatprep.subr.bf16.mxu0 0
      %385 = vmatpush1.bf16.msra.mxu0 0
      %386 = vmatprep.subr.bf16.mxu0 0
      %387 = vmatpush1.bf16.msra.mxu0 0
      %388 = vmatprep.subr.bf16.mxu0 0
      %389 = vmatpush1.bf16.msra.mxu0 0
      %390 = vmatprep.subr.bf16.mxu0 0
      %391 = vmatpush1.bf16.msra.mxu0 0
      %392 = vmatprep.subr.bf16.mxu0 0
      %393 = vmatpush1.bf16.msra.mxu0 0
      %394 = vmatprep.subr.bf16.mxu0 0
      %395 = vmatpush1.bf16.msra.mxu0 0
      %396 = vmatprep.subr.bf16.mxu0 0
      %397 = vmatpush1.bf16.msra.mxu0 0
      %398 = vmatprep.subr.bf16.mxu0 0
      %399 = vmatpush1.bf16.msra.mxu0 0
      %400 = vmatprep.subr.bf16.mxu0 0
      %401 = vmatpush1.bf16.msra.mxu0 0
      %402 = vmatprep.subr.bf16.mxu0 0
      %403 = vmatpush1.bf16.msra.mxu0 0
      %404 = vmatprep.subr.bf16.mxu0 0
      %405 = vmatpush1.bf16.msra.mxu0 0
      %406 = vmatprep.subr.bf16.mxu0 0
      %407 = vmatpush1.bf16.msra.mxu0 0
      %408 = vmatprep.subr.bf16.mxu0 0
      %409 = vmatpush1.bf16.msra.mxu0 0
      %410 = vmatprep.subr.bf16.mxu0 0
      %411 = vmatpush1.bf16.msra.mxu0 0
      %412 = vmatprep.subr.bf16.mxu0 0
      %413 = vmatpush1.bf16.msra.mxu0 0
      %414 = vmatprep.mubr.bf16.mxu0 0
      %415 = vmatmul.mubr.bf16.gmra.mrb[0].mxu0 %v377
      %v416 = vpop.f32.mrb[0].mxu0
      %v417 = vadd.f32 %v374, %v416
      %v418 = vpop.f32.mrb[0].mxu0
      %v419 = vpop.f32.mrb[0].mxu0
      %v420 = vpop.f32.mrb[0].mxu0
      %421 = vdwg.mxu0
      %v422 = vld [vmem:[%s296] sm:$0xf]
      %v423 = vunpack.c.l.bf16 %v422
      %vm424 = vcmp.gt.f32.partialorder %v423, 0.0
      %v425 = vld [vmem:[%s5] sm:$0x1]
      %v427 = vcombine.high %v417, %v417
      %v429 = vunpack.c.l.s4 1966171168
      %v430 = vunpack.c.0.s8 %v429
      %v431 = vlaneseq
      %v432 = vshrl.u32 %v431, 7
      %v433 = vsub.s32 %v430, %v432
      %v434 = vrot.slane %v417, %v433
      %v436 = vunpack.c.l.s4 1966171168
      %v437 = vunpack.c.0.s8 %v436
      %v438 = vlaneseq
      %v439 = vshrl.u32 %v438, 7
      %v440 = vsub.s32 %v437, %v439
      %v441 = vrot.slane %v427, %v440
      %v442 = vcombine.high %v434, %v434
      %v443 = vcombine.high %v441, %v441
      %v445 = vunpack.c.l.s4 1966171168
      %v446 = vunpack.c.0.s8 %v445
      %v447 = vlaneseq
      %v448 = vshrl.u32 %v447, 7
      %v449 = vsub.s32 %v446, %v448
      %v450 = vrot.slane %v434, %v449
      %v452 = vunpack.c.l.s4 1966171168
      %v453 = vunpack.c.0.s8 %v452
      %v454 = vlaneseq
      %v455 = vshrl.u32 %v454, 7
      %v456 = vsub.s32 %v453, %v455
      %v457 = vrot.slane %v441, %v456
      %v459 = vunpack.c.l.s4 1966171168
      %v460 = vunpack.c.0.s8 %v459
      %v461 = vlaneseq
      %v462 = vshrl.u32 %v461, 7
      %v463 = vsub.s32 %v460, %v462
      %v464 = vrot.slane %v442, %v463
      %v466 = vunpack.c.l.s4 1966171168
      %v467 = vunpack.c.0.s8 %v466
      %v468 = vlaneseq
      %v469 = vshrl.u32 %v468, 7
      %v470 = vsub.s32 %v467, %v469
      %v471 = vrot.slane %v443, %v470
      %v472 = vcombine.high %v450, %v450
      %v473 = vcombine.high %v457, %v457
      %v474 = vcombine.high %v464, %v464
      %v475 = vcombine.high %v471, %v471
      %v476 = vlaneseq
      %v477 = vshrl.u32 %v476, 7
      %v478 = vsub.s32 0, %v477
      %v479 = vrot.slane %v450, %v478
      %v480 = vlaneseq
      %v481 = vshrl.u32 %v480, 7
      %v482 = vsub.s32 0, %v481
      %v483 = vrot.slane %v464, %v482
      %v484 = vlaneseq
      %v485 = vshrl.u32 %v484, 7
      %v486 = vsub.s32 0, %v485
      %v487 = vrot.slane %v472, %v486
      %v488 = vlaneseq
      %v489 = vshrl.u32 %v488, 7
      %v490 = vsub.s32 0, %v489
      %v491 = vrot.slane %v474, %v490
      %v492 = vlaneseq
      %v493 = vshrl.u32 %v492, 7
      %v494 = vsub.s32 0, %v493
      %v495 = vrot.slane %v457, %v494
      %v496 = vlaneseq
      %v497 = vshrl.u32 %v496, 7
      %v498 = vsub.s32 0, %v497
      %v499 = vrot.slane %v471, %v498
      %v500 = vlaneseq
      %v501 = vshrl.u32 %v500, 7
      %v502 = vsub.s32 0, %v501
      %v503 = vrot.slane %v473, %v502
      %v504 = vlaneseq
      %v505 = vshrl.u32 %v504, 7
      %v506 = vsub.s32 0, %v505
      %v507 = vrot.slane %v475, %v506
      %v516 = vadd.f32 %v479, %v359
      %v517 = vadd.f32 %v479, %v362
      %v518 = vadd.f32 %v483, %v359
      %v519 = vadd.f32 %v483, %v362
      %v520 = vadd.f32 %v487, %v359
      %v521 = vadd.f32 %v487, %v362
      %v522 = vadd.f32 %v491, %v359
      %v523 = vadd.f32 %v491, %v362
      %v524 = vadd.f32 %v495, %v359
      %v525 = vadd.f32 %v495, %v362
      %v526 = vadd.f32 %v499, %v359
      %v527 = vadd.f32 %v499, %v362
      %v528 = vadd.f32 %v503, %v359
      %v529 = vadd.f32 %v503, %v362
      %v530 = vadd.f32 %v507, %v359
      %v531 = vadd.f32 %v507, %v362
      %vm532 = vcmp.gt.f32.partialorder %v516, 0.0
      %vm533 = vcmp.gt.f32.partialorder %v517, 0.0
      %vm534 = vcmp.gt.f32.partialorder %v518, 0.0
      %vm535 = vcmp.gt.f32.partialorder %v519, 0.0
      %vm536 = vcmp.gt.f32.partialorder %v520, 0.0
      %vm537 = vcmp.gt.f32.partialorder %v521, 0.0
      %vm538 = vcmp.gt.f32.partialorder %v522, 0.0
      %vm539 = vcmp.gt.f32.partialorder %v523, 0.0
      %vm540 = vcmp.gt.f32.partialorder %v524, 0.0
      %vm541 = vcmp.gt.f32.partialorder %v525, 0.0
      %vm542 = vcmp.gt.f32.partialorder %v526, 0.0
      %vm543 = vcmp.gt.f32.partialorder %v527, 0.0
      %vm544 = vcmp.gt.f32.partialorder %v528, 0.0
      %vm545 = vcmp.gt.f32.partialorder %v529, 0.0
      %vm546 = vcmp.gt.f32.partialorder %v530, 0.0
      %vm547 = vcmp.gt.f32.partialorder %v531, 0.0
      %v548 = vmul.f32 %v516, 0.2
      %v549 = vmul.f32 %v517, 0.2
      %v550 = vmul.f32 %v518, 0.2
      %v551 = vmul.f32 %v519, 0.2
      %v552 = vmul.f32 %v520, 0.2
      %v553 = vmul.f32 %v521, 0.2
      %v554 = vmul.f32 %v522, 0.2
      %v555 = vmul.f32 %v523, 0.2
      %v556 = vmul.f32 %v524, 0.2
      %v557 = vmul.f32 %v525, 0.2
      %v558 = vmul.f32 %v526, 0.2
      %v559 = vmul.f32 %v527, 0.2
      %v560 = vmul.f32 %v528, 0.2
      %v561 = vmul.f32 %v529, 0.2
      %v562 = vmul.f32 %v530, 0.2
      %v563 = vmul.f32 %v531, 0.2
      %v564 = vsel %vm532, %v516, %v548
      %v565 = vsel %vm533, %v517, %v549
      %v566 = vsel %vm534, %v518, %v550
      %v567 = vsel %vm535, %v519, %v551
      %v568 = vsel %vm536, %v520, %v552
      %v569 = vsel %vm537, %v521, %v553
      %v570 = vsel %vm538, %v522, %v554
      %v571 = vsel %vm539, %v523, %v555
      %v572 = vsel %vm540, %v524, %v556
      %v573 = vsel %vm541, %v525, %v557
      %v574 = vsel %vm542, %v526, %v558
      %v575 = vsel %vm543, %v527, %v559
      %v576 = vsel %vm544, %v528, %v560
      %v577 = vsel %vm545, %v529, %v561
      %v578 = vsel %vm546, %v530, %v562
      %v579 = vsel %vm547, %v531, %v563
      %v581 = vlaneseq
      %v582 = vshrl.u32 %v581, 7
      %v583 = vsub.s32 0, %v582
      %v584 = vrot.slane %v425, %v583
      %v586 = vmul.f32 %v564, %v584
      %v587 = vmul.f32 %v565, %v584
      %v588 = vmul.f32 %v566, %v584
      %v589 = vmul.f32 %v567, %v584
      %v590 = vmul.f32 %v568, %v584
      %v591 = vmul.f32 %v569, %v584
      %v592 = vmul.f32 %v570, %v584
      %v593 = vmul.f32 %v571, %v584
      %v594 = vmul.f32 %v572, %v584
      %v595 = vmul.f32 %v573, %v584
      %v596 = vmul.f32 %v574, %v584
      %v597 = vmul.f32 %v575, %v584
      %v598 = vmul.f32 %v576, %v584
      %v599 = vmul.f32 %v577, %v584
      %v600 = vmul.f32 %v578, %v584
      %v601 = vmul.f32 %v579, %v584
      %vm602 = vcmask 64512
      %v603 = vsel %vm602, %v586, 0.0
      %604 = vadd.xlane.f32.xlu0 %v603
      %v605 = vpop.xlane.xlu0 %604
      %v606 = vsel %vm602, %v587, 0.0
      %607 = vadd.xlane.f32.xlu0 %v606
      %v608 = vpop.xlane.xlu0 %607
      %v609 = vsel %vm602, %v588, 0.0
      %610 = vadd.xlane.f32.xlu0 %v609
      %v611 = vpop.xlane.xlu0 %610
      %v612 = vsel %vm602, %v589, 0.0
      %613 = vadd.xlane.f32.xlu0 %v612
      %v614 = vpop.xlane.xlu0 %613
      %v615 = vsel %vm602, %v590, 0.0
      %616 = vadd.xlane.f32.xlu0 %v615
      %v617 = vpop.xlane.xlu0 %616
      %v618 = vsel %vm602, %v591, 0.0
      %619 = vadd.xlane.f32.xlu0 %v618
      %v620 = vpop.xlane.xlu0 %619
      %v621 = vsel %vm602, %v592, 0.0
      %622 = vadd.xlane.f32.xlu0 %v621
      %v623 = vpop.xlane.xlu0 %622
      %v624 = vsel %vm602, %v593, 0.0
      %625 = vadd.xlane.f32.xlu0 %v624
      %v626 = vpop.xlane.xlu0 %625
      %v627 = vsel %vm602, %v594, 0.0
      %628 = vadd.xlane.f32.xlu0 %v627
      %v629 = vpop.xlane.xlu0 %628
      %v630 = vsel %vm602, %v595, 0.0
      %631 = vadd.xlane.f32.xlu0 %v630
      %v632 = vpop.xlane.xlu0 %631
      %v633 = vsel %vm602, %v596, 0.0
      %634 = vadd.xlane.f32.xlu0 %v633
      %v635 = vpop.xlane.xlu0 %634
      %v636 = vsel %vm602, %v597, 0.0
      %637 = vadd.xlane.f32.xlu0 %v636
      %v638 = vpop.xlane.xlu0 %637
      %v639 = vsel %vm602, %v598, 0.0
      %640 = vadd.xlane.f32.xlu0 %v639
      %v641 = vpop.xlane.xlu0 %640
      %v642 = vsel %vm602, %v599, 0.0
      %643 = vadd.xlane.f32.xlu0 %v642
      %v644 = vpop.xlane.xlu0 %643
      %v645 = vsel %vm602, %v600, 0.0
      %646 = vadd.xlane.f32.xlu0 %v645
      %v647 = vpop.xlane.xlu0 %646
      %v648 = vsel %vm602, %v601, 0.0
      %649 = vadd.xlane.f32.xlu0 %v648
      %v650 = vpop.xlane.xlu0 %649
      %v667 = vlaneseq
      %v668 = vand.u32 %v667, 127
      %v669 = vlaneseq
      %v670 = vshrl.u32 %v669, 7
      %v671 = vsub.s32 %v668, %v670
      %v672 = vrot.slane %v605, %v671
      %v673 = vadd.s32 %v668, 4294967288
      %v674 = vlaneseq
      %v675 = vshrl.u32 %v674, 7
      %v676 = vsub.s32 %v673, %v675
      %v677 = vrot.slane %v608, %v676
      %vm678 = vcmask 130112
      %v679 = vsel %vm678, %v677, %v672
      %v680 = vlaneseq
      %v681 = vshrl.u32 %v680, 7
      %v682 = vsub.s32 %v668, %v681
      %v683 = vrot.slane %v611, %v682
      %v684 = vlaneseq
      %v685 = vshrl.u32 %v684, 7
      %v686 = vsub.s32 %v673, %v685
      %v687 = vrot.slane %v614, %v686
      %v688 = vsel %vm678, %v687, %v683
      %v689 = vlaneseq
      %v690 = vshrl.u32 %v689, 7
      %v691 = vsub.s32 %v668, %v690
      %v692 = vrot.slane %v617, %v691
      %v693 = vlaneseq
      %v694 = vshrl.u32 %v693, 7
      %v695 = vsub.s32 %v673, %v694
      %v696 = vrot.slane %v620, %v695
      %v697 = vsel %vm678, %v696, %v692
      %v698 = vlaneseq
      %v699 = vshrl.u32 %v698, 7
      %v700 = vsub.s32 %v668, %v699
      %v701 = vrot.slane %v623, %v700
      %v702 = vlaneseq
      %v703 = vshrl.u32 %v702, 7
      %v704 = vsub.s32 %v673, %v703
      %v705 = vrot.slane %v626, %v704
      %v706 = vsel %vm678, %v705, %v701
      %v707 = vlaneseq
      %v708 = vshrl.u32 %v707, 7
      %v709 = vsub.s32 %v668, %v708
      %v710 = vrot.slane %v629, %v709
      %v711 = vlaneseq
      %v712 = vshrl.u32 %v711, 7
      %v713 = vsub.s32 %v673, %v712
      %v714 = vrot.slane %v632, %v713
      %v715 = vsel %vm678, %v714, %v710
      %v716 = vlaneseq
      %v717 = vshrl.u32 %v716, 7
      %v718 = vsub.s32 %v668, %v717
      %v719 = vrot.slane %v635, %v718
      %v720 = vlaneseq
      %v721 = vshrl.u32 %v720, 7
      %v722 = vsub.s32 %v673, %v721
      %v723 = vrot.slane %v638, %v722
      %v724 = vsel %vm678, %v723, %v719
      %v725 = vlaneseq
      %v726 = vshrl.u32 %v725, 7
      %v727 = vsub.s32 %v668, %v726
      %v728 = vrot.slane %v641, %v727
      %v729 = vlaneseq
      %v730 = vshrl.u32 %v729, 7
      %v731 = vsub.s32 %v673, %v730
      %v732 = vrot.slane %v644, %v731
      %v733 = vsel %vm678, %v732, %v728
      %v734 = vlaneseq
      %v735 = vshrl.u32 %v734, 7
      %v736 = vsub.s32 %v668, %v735
      %v737 = vrot.slane %v647, %v736
      %v738 = vlaneseq
      %v739 = vshrl.u32 %v738, 7
      %v740 = vsub.s32 %v673, %v739
      %v741 = vrot.slane %v650, %v740
      %v742 = vsel %vm678, %v741, %v737
      %vm743 = vcmask 1041409
      %v744 = vsel %vm743, %v688, %v679
      %vm745 = vcmask 1042434
      %v746 = vsel %vm745, %v697, %v744
      %vm747 = vcmask 1043459
      %v748 = vsel %vm747, %v706, %v746
      %vm749 = vcmask 1044484
      %v750 = vsel %vm749, %v715, %v748
      %vm751 = vcmask 1045509
      %v752 = vsel %vm751, %v724, %v750
      %vm753 = vcmask 1046534
      %v754 = vsel %vm753, %v733, %v752
      %vm755 = vcmask 1047559
      %v756 = vsel %vm755, %v742, %v754
      %v758 = vsel %vm424, %v756, -1e+30
      %vm759 = vcmask 130048
      %v760 = vsel %vm759, %v758, -inf
      %761 = vmax.xlane.f32.xlu0 %v760
      %v762 = vpop.xlane.xlu0 %761
      %v763 = vsub.f32 %v758, %v762
      %v764 = vmul.f32 %v763, 1.442695
      %v765 = vpow.pop %v764
      %v766 = vsel %vm424, %v765, 0.0
      %v767 = vsel %vm759, %v766, 0.0
      %768 = vadd.xlane.f32.xlu0 %v767
      %v769 = vpop.xlane.xlu0 %768
      %v770 = vmax.f32 %v769, 1e-20
      %v771 = vrcp.pop %v770
      %v772 = vpack.c.bf16 %v766, %v766
      %v773 = vpack.c.bf16 %v362, %v359
      %v775 = vsel %vm759, %v772, 0
      %777 = vmatprep.subr.bf16.mxu0 0
      %778 = vmatpush1.bf16.msra.mxu0 %v773
      %779 = vmatprep.subr.bf16.mxu0 0
      %780 = vmatpush1.bf16.msra.mxu0 0
      %781 = vmatprep.subr.bf16.mxu0 0
      %782 = vmatpush1.bf16.msra.mxu0 0
      %783 = vmatprep.subr.bf16.mxu0 0
      %784 = vmatpush1.bf16.msra.mxu0 0
      %785 = vmatprep.subr.bf16.mxu0 0
      %786 = vmatpush1.bf16.msra.mxu0 0
      %787 = vmatprep.subr.bf16.mxu0 0
      %788 = vmatpush1.bf16.msra.mxu0 0
      %789 = vmatprep.subr.bf16.mxu0 0
      %790 = vmatpush1.bf16.msra.mxu0 0
      %791 = vmatprep.subr.bf16.mxu0 0
      %792 = vmatpush1.bf16.msra.mxu0 0
      %793 = vmatprep.subr.bf16.mxu0 0
      %794 = vmatpush1.bf16.msra.mxu0 0
      %795 = vmatprep.subr.bf16.mxu0 0
      %796 = vmatpush1.bf16.msra.mxu0 0
      %797 = vmatprep.subr.bf16.mxu0 0
      %798 = vmatpush1.bf16.msra.mxu0 0
      %799 = vmatprep.subr.bf16.mxu0 0
      %800 = vmatpush1.bf16.msra.mxu0 0
      %801 = vmatprep.subr.bf16.mxu0 0
      %802 = vmatpush1.bf16.msra.mxu0 0
      %803 = vmatprep.subr.bf16.mxu0 0
      %804 = vmatpush1.bf16.msra.mxu0 0
      %805 = vmatprep.subr.bf16.mxu0 0
      %806 = vmatpush1.bf16.msra.mxu0 0
      %807 = vmatprep.subr.bf16.mxu0 0
      %808 = vmatpush1.bf16.msra.mxu0 0
      %809 = vmatprep.mubr.bf16.mxu0 0
      %810 = vmatmul.mubr.bf16.gmra.mrb[0].mxu0 %v775
      %v811 = vpop.f32.mrb[0].mxu0
      %v812 = vadd.f32 0.0, %v811
      %v813 = vpop.f32.mrb[0].mxu0
      %v814 = vpop.f32.mrb[0].mxu0
      %v815 = vpop.f32.mrb[0].mxu0
      %816 = vdwg.mxu0
      %v817 = vmul.f32 %v812, %v771
      %834 = vrot.lane.b32.xlu0 %v586, 120
      %v835 = vpop.permute.xlu0 %834
      %836 = vrot.lane.b32.xlu0 %v587, 120
      %v837 = vpop.permute.xlu0 %836
      %838 = vrot.lane.b32.xlu0 %v588, 120
      %v839 = vpop.permute.xlu0 %838
      %840 = vrot.lane.b32.xlu0 %v589, 120
      %v841 = vpop.permute.xlu0 %840
      %842 = vrot.lane.b32.xlu0 %v590, 120
      %v843 = vpop.permute.xlu0 %842
      %844 = vrot.lane.b32.xlu0 %v591, 120
      %v845 = vpop.permute.xlu0 %844
      %846 = vrot.lane.b32.xlu0 %v592, 120
      %v847 = vpop.permute.xlu0 %846
      %848 = vrot.lane.b32.xlu0 %v593, 120
      %v849 = vpop.permute.xlu0 %848
      %850 = vrot.lane.b32.xlu0 %v594, 120
      %v851 = vpop.permute.xlu0 %850
      %852 = vrot.lane.b32.xlu0 %v595, 120
      %v853 = vpop.permute.xlu0 %852
      %854 = vrot.lane.b32.xlu0 %v596, 120
      %v855 = vpop.permute.xlu0 %854
      %856 = vrot.lane.b32.xlu0 %v597, 120
      %v857 = vpop.permute.xlu0 %856
      %858 = vrot.lane.b32.xlu0 %v598, 120
      %v859 = vpop.permute.xlu0 %858
      %860 = vrot.lane.b32.xlu0 %v599, 120
      %v861 = vpop.permute.xlu0 %860
      %862 = vrot.lane.b32.xlu0 %v600, 120
      %v863 = vpop.permute.xlu0 %862
      %864 = vrot.lane.b32.xlu0 %v601, 120
      %v865 = vpop.permute.xlu0 %864
      %v882 = vsel %vm602, %v835, 0.0
      %883 = vadd.xlane.f32.xlu0 %v882
      %v884 = vpop.xlane.xlu0 %883
      %v885 = vsel %vm602, %v837, 0.0
      %886 = vadd.xlane.f32.xlu0 %v885
      %v887 = vpop.xlane.xlu0 %886
      %v888 = vsel %vm602, %v839, 0.0
      %889 = vadd.xlane.f32.xlu0 %v888
      %v890 = vpop.xlane.xlu0 %889
      %v891 = vsel %vm602, %v841, 0.0
      %892 = vadd.xlane.f32.xlu0 %v891
      %v893 = vpop.xlane.xlu0 %892
      %v894 = vsel %vm602, %v843, 0.0
      %895 = vadd.xlane.f32.xlu0 %v894
      %v896 = vpop.xlane.xlu0 %895
      %v897 = vsel %vm602, %v845, 0.0
      %898 = vadd.xlane.f32.xlu0 %v897
      %v899 = vpop.xlane.xlu0 %898
      %v900 = vsel %vm602, %v847, 0.0
      %901 = vadd.xlane.f32.xlu0 %v900
      %v902 = vpop.xlane.xlu0 %901
      %v903 = vsel %vm602, %v849, 0.0
      %904 = vadd.xlane.f32.xlu0 %v903
      %v905 = vpop.xlane.xlu0 %904
      %v906 = vsel %vm602, %v851, 0.0
      %907 = vadd.xlane.f32.xlu0 %v906
      %v908 = vpop.xlane.xlu0 %907
      %v909 = vsel %vm602, %v853, 0.0
      %910 = vadd.xlane.f32.xlu0 %v909
      %v911 = vpop.xlane.xlu0 %910
      %v912 = vsel %vm602, %v855, 0.0
      %913 = vadd.xlane.f32.xlu0 %v912
      %v914 = vpop.xlane.xlu0 %913
      %v915 = vsel %vm602, %v857, 0.0
      %916 = vadd.xlane.f32.xlu0 %v915
      %v917 = vpop.xlane.xlu0 %916
      %v918 = vsel %vm602, %v859, 0.0
      %919 = vadd.xlane.f32.xlu0 %v918
      %v920 = vpop.xlane.xlu0 %919
      %v921 = vsel %vm602, %v861, 0.0
      %922 = vadd.xlane.f32.xlu0 %v921
      %v923 = vpop.xlane.xlu0 %922
      %v924 = vsel %vm602, %v863, 0.0
      %925 = vadd.xlane.f32.xlu0 %v924
      %v926 = vpop.xlane.xlu0 %925
      %v927 = vsel %vm602, %v865, 0.0
      %928 = vadd.xlane.f32.xlu0 %v927
      %v929 = vpop.xlane.xlu0 %928
      %v946 = vlaneseq
      %v947 = vshrl.u32 %v946, 7
      %v948 = vsub.s32 %v668, %v947
      %v949 = vrot.slane %v884, %v948
      %v950 = vlaneseq
      %v951 = vshrl.u32 %v950, 7
      %v952 = vsub.s32 %v673, %v951
      %v953 = vrot.slane %v887, %v952
      %v954 = vsel %vm678, %v953, %v949
      %v955 = vlaneseq
      %v956 = vshrl.u32 %v955, 7
      %v957 = vsub.s32 %v668, %v956
      %v958 = vrot.slane %v890, %v957
      %v959 = vlaneseq
      %v960 = vshrl.u32 %v959, 7
      %v961 = vsub.s32 %v673, %v960
      %v962 = vrot.slane %v893, %v961
      %v963 = vsel %vm678, %v962, %v958
      %v964 = vlaneseq
      %v965 = vshrl.u32 %v964, 7
      %v966 = vsub.s32 %v668, %v965
      %v967 = vrot.slane %v896, %v966
      %v968 = vlaneseq
      %v969 = vshrl.u32 %v968, 7
      %v970 = vsub.s32 %v673, %v969
      %v971 = vrot.slane %v899, %v970
      %v972 = vsel %vm678, %v971, %v967
      %v973 = vlaneseq
      %v974 = vshrl.u32 %v973, 7
      %v975 = vsub.s32 %v668, %v974
      %v976 = vrot.slane %v902, %v975
      %v977 = vlaneseq
      %v978 = vshrl.u32 %v977, 7
      %v979 = vsub.s32 %v673, %v978
      %v980 = vrot.slane %v905, %v979
      %v981 = vsel %vm678, %v980, %v976
      %v982 = vlaneseq
      %v983 = vshrl.u32 %v982, 7
      %v984 = vsub.s32 %v668, %v983
      %v985 = vrot.slane %v908, %v984
      %v986 = vlaneseq
      %v987 = vshrl.u32 %v986, 7
      %v988 = vsub.s32 %v673, %v987
      %v989 = vrot.slane %v911, %v988
      %v990 = vsel %vm678, %v989, %v985
      %v991 = vlaneseq
      %v992 = vshrl.u32 %v991, 7
      %v993 = vsub.s32 %v668, %v992
      %v994 = vrot.slane %v914, %v993
      %v995 = vlaneseq
      %v996 = vshrl.u32 %v995, 7
      %v997 = vsub.s32 %v673, %v996
      %v998 = vrot.slane %v917, %v997
      %v999 = vsel %vm678, %v998, %v994
      %v1000 = vlaneseq
      %v1001 = vshrl.u32 %v1000, 7
      %v1002 = vsub.s32 %v668, %v1001
      %v1003 = vrot.slane %v920, %v1002
      %v1004 = vlaneseq
      %v1005 = vshrl.u32 %v1004, 7
      %v1006 = vsub.s32 %v673, %v1005
      %v1007 = vrot.slane %v923, %v1006
      %v1008 = vsel %vm678, %v1007, %v1003
      %v1009 = vlaneseq
      %v1010 = vshrl.u32 %v1009, 7
      %v1011 = vsub.s32 %v668, %v1010
      %v1012 = vrot.slane %v926, %v1011
      %v1013 = vlaneseq
      %v1014 = vshrl.u32 %v1013, 7
      %v1015 = vsub.s32 %v673, %v1014
      %v1016 = vrot.slane %v929, %v1015
      %v1017 = vsel %vm678, %v1016, %v1012
      %v1018 = vsel %vm743, %v963, %v954
      %v1019 = vsel %vm745, %v972, %v1018
      %v1020 = vsel %vm747, %v981, %v1019
      %v1021 = vsel %vm749, %v990, %v1020
      %v1022 = vsel %vm751, %v999, %v1021
      %v1023 = vsel %vm753, %v1008, %v1022
      %v1024 = vsel %vm755, %v1017, %v1023
      %v1026 = vsel %vm424, %v1024, -1e+30
      %v1027 = vsel %vm759, %v1026, -inf
      %1028 = vmax.xlane.f32.xlu0 %v1027
      %v1029 = vpop.xlane.xlu0 %1028
      %v1030 = vsub.f32 %v1026, %v1029
      %v1031 = vmul.f32 %v1030, 1.442695
      %v1032 = vpow.pop %v1031
      %v1033 = vsel %vm424, %v1032, 0.0
      %v1034 = vsel %vm759, %v1033, 0.0
      %1035 = vadd.xlane.f32.xlu0 %v1034
      %v1036 = vpop.xlane.xlu0 %1035
      %v1037 = vmax.f32 %v1036, 1e-20
      %v1038 = vrcp.pop %v1037
      %v1039 = vpack.c.bf16 %v1033, %v1033
      %1041 = vrot.lane.b32.xlu0 %v773, 120
      %v1042 = vpop.permute.xlu0 %1041
      %v1045 = vsel %vm759, %v1039, 0
      %1047 = vmatprep.subr.bf16.mxu0 0
      %1048 = vmatpush1.bf16.msra.mxu0 %v1042
      %1049 = vmatprep.subr.bf16.mxu0 0
      %1050 = vmatpush1.bf16.msra.mxu0 0
      %1051 = vmatprep.subr.bf16.mxu0 0
      %1052 = vmatpush1.bf16.msra.mxu0 0
      %1053 = vmatprep.subr.bf16.mxu0 0
      %1054 = vmatpush1.bf16.msra.mxu0 0
      %1055 = vmatprep.subr.bf16.mxu0 0
      %1056 = vmatpush1.bf16.msra.mxu0 0
      %1057 = vmatprep.subr.bf16.mxu0 0
      %1058 = vmatpush1.bf16.msra.mxu0 0
      %1059 = vmatprep.subr.bf16.mxu0 0
      %1060 = vmatpush1.bf16.msra.mxu0 0
      %1061 = vmatprep.subr.bf16.mxu0 0
      %1062 = vmatpush1.bf16.msra.mxu0 0
      %1063 = vmatprep.subr.bf16.mxu0 0
      %1064 = vmatpush1.bf16.msra.mxu0 0
      %1065 = vmatprep.subr.bf16.mxu0 0
      %1066 = vmatpush1.bf16.msra.mxu0 0
      %1067 = vmatprep.subr.bf16.mxu0 0
      %1068 = vmatpush1.bf16.msra.mxu0 0
      %1069 = vmatprep.subr.bf16.mxu0 0
      %1070 = vmatpush1.bf16.msra.mxu0 0
      %1071 = vmatprep.subr.bf16.mxu0 0
      %1072 = vmatpush1.bf16.msra.mxu0 0
      %1073 = vmatprep.subr.bf16.mxu0 0
      %1074 = vmatpush1.bf16.msra.mxu0 0
      %1075 = vmatprep.subr.bf16.mxu0 0
      %1076 = vmatpush1.bf16.msra.mxu0 0
      %1077 = vmatprep.subr.bf16.mxu0 0
      %1078 = vmatpush1.bf16.msra.mxu0 0
      %1079 = vmatprep.mubr.bf16.mxu0 0
      %1080 = vmatmul.mubr.bf16.gmra.mrb[0].mxu0 %v1045
      %v1081 = vpop.f32.mrb[0].mxu0
      %v1082 = vadd.f32 0.0, %v1081
      %v1083 = vpop.f32.mrb[0].mxu0
      %v1084 = vpop.f32.mrb[0].mxu0
      %v1085 = vpop.f32.mrb[0].mxu0
      %1086 = vdwg.mxu0
      %v1087 = vmul.f32 %v1082, %v1038
      %1089 = vrot.lane.b32.xlu0 %v1087, 8
      %v1090 = vpop.permute.xlu0 %1089
      %v1092 = vsel %vm602, %v817, %v1090
      %v1093 = vld [vmem:[%s6] sm:$0x1]
      %v1095 = vlaneseq
      %v1096 = vshrl.u32 %v1095, 7
      %v1097 = vsub.s32 0, %v1096
      %v1098 = vrot.slane %v1093, %v1097
      %v1100 = vadd.f32 %v1092, %v1098
      %1101 = vst.msk [vmem:[%s300] sm:$0xff] %vm759, %v1100
      %p1102 = scmp.lt.s32.totalorder %s19, 1
      %s1103 = scalar_select %p1102, %s19, 1
      %s1104 = smul.addr %s1103, 8
      %s1105 = scalar_lea.vmem %s8, %s1104
      // Predicated region
      $region53: #{_lambda_.4} parent=51 // pred_check
        %p1106 = pneg %p210
      $region54: #{_lambda_.4} parent=51 // pred_check_branch
        %1108 = sbr.rel (%p1106) target = $region56
      $region55: #{_lambda_.4} parent=51 // pred_region
        _
      $region56: #{_lambda_.4} parent=51 // pred_fallthru
        _
    $region52: #{_lambda_.4} parent=5 // pred_fallthru
      _
    %p1109 = scmp.le.s32.totalorder 2, %s14
    // Predicated region
    $region57: #{_lambda_.4} parent=5 // pred_check
      %p1110 = pneg %p1109
    $region58: #{_lambda_.4} parent=5 // pred_check_branch
      %1112 = sbr.rel (%p1110) target = $region60
    $region59: #{_lambda_.4} parent=5 // pred_region
      %s1113 = ssub.s32 %s14, 2
      // Predicated region
      $region61: #{_lambda_.4} parent=59 // pred_check
        %p1114 = pneg %p216
      $region62: #{_lambda_.4} parent=59 // pred_check_branch
        %1116 = sbr.rel (%p1114) target = $region64
      $region63: #{_lambda_.4} parent=59 // pred_region
        %p1117 = scmp.lt.s32.totalorder %s20, 1
        %s1118 = scalar_select %p1117, %s20, 1
        %s1119 = smul.addr %s1118, 8
        %s1120 = scalar_lea.vmem %s8, %s1119
      $region64: #{_lambda_.4} parent=59 // pred_fallthru
        _
    $region60: #{_lambda_.4} parent=5 // pred_fallthru
      _
  $region6: #{_lambda_.4} parent=0 // loop_footer
    %s18 = sadd.s32 1, %s14
  $region7: #{_lambda_.4} parent=0 // loop_footer_branch
    %13 = sbr.rel target = $region3
  $region8: #{_lambda_.4} parent=0 // loop_exit
    _

// kernel: _lambda_.6
$region0: #{_lambda_.6}
  #allocation0 [shape = 'u32[]', space=smem, size = 0x4, offset = 0x4, fixed_abs, tag = 'smem constant byte address 0x4 - core index']
  #allocation1 [shape = 'u32[144,128]{1,0:T(1,128)}', space=vmem, size = 0x12000, scoped, tag = 'internal scratch']
  %s0 = inlined_call_operand.vmem [shape: f32[16,16], index: 0, kind: input, shape index: {}]
  %s1 = inlined_call_operand.vmem [shape: f32[16,16], index: 1, kind: input, shape index: {}]
  %s2 = inlined_call_operand.vmem [shape: f32[16,16], index: 2, kind: input, shape index: {}]
  %s3 = inlined_call_operand.vmem [shape: f32[1,16], index: 3, kind: input, shape index: {}, may-alias: {3,4}]
  %s4 = inlined_call_operand.vmem [shape: f32[1,16], index: 4, kind: input, shape index: {}, may-alias: {3,4}]
  %s5 = inlined_call_operand.vmem [shape: f32[1,16], index: 5, kind: input, shape index: {}]
  %s6 = inlined_call_operand.vmem [shape: f32[1,8], index: 6, kind: input, shape index: {}]
  %s7 = inlined_call_operand.vmem [shape: bf16[16,16], index: 7, kind: input, shape index: {}]
  %s8 = inlined_call_operand.vmem [shape: f32[16,8], index: 8, kind: output, shape index: {}]
  %s9 = sld [smem:[#allocation0]]
  $region65: #{_lambda_.6} parent=0
    _
  %s11 = ssub.s32 1, %s9
  %s12 = scalar_select 0, %s11, %s9
  loop: start=0, step=1, limit=4
  $region2: #{_lambda_.6} parent=0 // loop_pre_header
    _
  $region3: #{_lambda_.6} parent=0 // loop_header
    %s14 = sphi 0, %s18
    %p15 = scmp.ge.s32.totalorder %s14, 4
    %s22 = sphi 0, %s22
    %s24 = sphi 0, %s22
    %s25 = sphi 0, %s24
    %s39 = sphi 0, %s25
    %s43 = sphi 0, %s43
    %s45 = sphi 0, %s43
    %s46 = sphi 0, %s45
    %s60 = sphi 0, %s46
    %s64 = sphi 0, %s64
    %s66 = sphi 0, %s64
    %s67 = sphi 0, %s66
    %s81 = sphi 0, %s67
    %s85 = sphi 0, %s85
    %s87 = sphi 0, %s85
    %s88 = sphi 0, %s87
    %s102 = sphi 0, %s88
    %s106 = sphi 0, %s106
    %s108 = sphi 0, %s106
    %s109 = sphi 0, %s108
    %s123 = sphi 0, %s109
    %s127 = sphi 0, %s127
    %s129 = sphi 0, %s127
    %s130 = sphi 0, %s129
    %s144 = sphi 0, %s130
    %s148 = sphi 0, %s148
    %s150 = sphi 0, %s148
    %s151 = sphi 0, %s150
    %s165 = sphi 0, %s151
    %s171 = sphi 0, %s173
    %s174 = sphi 0, %s171
    %s175 = sphi 0, %s174
    %s191 = sphi 0, %s175
    %s197 = sphi 0, %s199
    %s200 = sphi 0, %s197
    %s201 = sphi 0, %s200
    %s217 = sphi 0, %s201
  $region4: #{_lambda_.6} parent=0 // loop_header_branch
    %17 = sbr.rel (%p15) target = $region8
  $region5: #{_lambda_.6} parent=0 // loop_body
    %s19 = ssub.s32 %s14, 1
    %s20 = ssub.s32 %s14, 2
    %s21 = sadd.s32 %s14, 1
    %s23 = sadd.s32 %s22, 1
    %p26 = scmp.eq.s32.totalorder %s14, 1
    %p27 = scmp.ne.s32.totalorder %s22, %s24
    %p28 = scmp.eq.s32.totalorder %s14, 0
    %p29 = por %p27, %p28
    %p30 = scmp.ne.s32.totalorder %s22, %s24
    %p31 = scmp.eq.s32.totalorder %s19, 1
    %p32 = por %p30, %p31
    %p33 = scmp.ne.s32.totalorder %s24, %s25
    %p34 = scmp.eq.s32.totalorder %s19, 0
    %p35 = por %p33, %p34
    %p36 = scmp.ne.s32.totalorder %s24, %s25
    %p37 = scmp.eq.s32.totalorder %s20, 1
    %p38 = por %p36, %p37
    %p40 = scmp.ne.s32.totalorder %s25, %s39
    %p41 = scmp.eq.s32.totalorder %s20, 0
    %p42 = por %p40, %p41
    %s44 = sadd.s32 %s43, 1
    %p47 = scmp.eq.s32.totalorder %s14, 1
    %p48 = scmp.ne.s32.totalorder %s43, %s45
    %p49 = scmp.eq.s32.totalorder %s14, 0
    %p50 = por %p48, %p49
    %p51 = scmp.ne.s32.totalorder %s43, %s45
    %p52 = scmp.eq.s32.totalorder %s19, 1
    %p53 = por %p51, %p52
    %p54 = scmp.ne.s32.totalorder %s45, %s46
    %p55 = scmp.eq.s32.totalorder %s19, 0
    %p56 = por %p54, %p55
    %p57 = scmp.ne.s32.totalorder %s45, %s46
    %p58 = scmp.eq.s32.totalorder %s20, 1
    %p59 = por %p57, %p58
    %p61 = scmp.ne.s32.totalorder %s46, %s60
    %p62 = scmp.eq.s32.totalorder %s20, 0
    %p63 = por %p61, %p62
    %s65 = sadd.s32 %s64, 1
    %p68 = scmp.eq.s32.totalorder %s14, 1
    %p69 = scmp.ne.s32.totalorder %s64, %s66
    %p70 = scmp.eq.s32.totalorder %s14, 0
    %p71 = por %p69, %p70
    %p72 = scmp.ne.s32.totalorder %s64, %s66
    %p73 = scmp.eq.s32.totalorder %s19, 1
    %p74 = por %p72, %p73
    %p75 = scmp.ne.s32.totalorder %s66, %s67
    %p76 = scmp.eq.s32.totalorder %s19, 0
    %p77 = por %p75, %p76
    %p78 = scmp.ne.s32.totalorder %s66, %s67
    %p79 = scmp.eq.s32.totalorder %s20, 1
    %p80 = por %p78, %p79
    %p82 = scmp.ne.s32.totalorder %s67, %s81
    %p83 = scmp.eq.s32.totalorder %s20, 0
    %p84 = por %p82, %p83
    %s86 = sadd.s32 %s85, 1
    %p89 = scmp.eq.s32.totalorder %s14, 1
    %p90 = scmp.ne.s32.totalorder %s85, %s87
    %p91 = scmp.eq.s32.totalorder %s14, 0
    %p92 = por %p90, %p91
    %p93 = scmp.ne.s32.totalorder %s85, %s87
    %p94 = scmp.eq.s32.totalorder %s19, 1
    %p95 = por %p93, %p94
    %p96 = scmp.ne.s32.totalorder %s87, %s88
    %p97 = scmp.eq.s32.totalorder %s19, 0
    %p98 = por %p96, %p97
    %p99 = scmp.ne.s32.totalorder %s87, %s88
    %p100 = scmp.eq.s32.totalorder %s20, 1
    %p101 = por %p99, %p100
    %p103 = scmp.ne.s32.totalorder %s88, %s102
    %p104 = scmp.eq.s32.totalorder %s20, 0
    %p105 = por %p103, %p104
    %s107 = sadd.s32 %s106, 1
    %p110 = scmp.eq.s32.totalorder %s14, 1
    %p111 = scmp.ne.s32.totalorder %s106, %s108
    %p112 = scmp.eq.s32.totalorder %s14, 0
    %p113 = por %p111, %p112
    %p114 = scmp.ne.s32.totalorder %s106, %s108
    %p115 = scmp.eq.s32.totalorder %s19, 1
    %p116 = por %p114, %p115
    %p117 = scmp.ne.s32.totalorder %s108, %s109
    %p118 = scmp.eq.s32.totalorder %s19, 0
    %p119 = por %p117, %p118
    %p120 = scmp.ne.s32.totalorder %s108, %s109
    %p121 = scmp.eq.s32.totalorder %s20, 1
    %p122 = por %p120, %p121
    %p124 = scmp.ne.s32.totalorder %s109, %s123
    %p125 = scmp.eq.s32.totalorder %s20, 0
    %p126 = por %p124, %p125
    %s128 = sadd.s32 %s127, 1
    %p131 = scmp.eq.s32.totalorder %s14, 1
    %p132 = scmp.ne.s32.totalorder %s127, %s129
    %p133 = scmp.eq.s32.totalorder %s14, 0
    %p134 = por %p132, %p133
    %p135 = scmp.ne.s32.totalorder %s127, %s129
    %p136 = scmp.eq.s32.totalorder %s19, 1
    %p137 = por %p135, %p136
    %p138 = scmp.ne.s32.totalorder %s129, %s130
    %p139 = scmp.eq.s32.totalorder %s19, 0
    %p140 = por %p138, %p139
    %p141 = scmp.ne.s32.totalorder %s129, %s130
    %p142 = scmp.eq.s32.totalorder %s20, 1
    %p143 = por %p141, %p142
    %p145 = scmp.ne.s32.totalorder %s130, %s144
    %p146 = scmp.eq.s32.totalorder %s20, 0
    %p147 = por %p145, %p146
    %s149 = sadd.s32 %s148, 1
    %p152 = scmp.eq.s32.totalorder %s14, 1
    %p153 = scmp.ne.s32.totalorder %s148, %s150
    %p154 = scmp.eq.s32.totalorder %s14, 0
    %p155 = por %p153, %p154
    %p156 = scmp.ne.s32.totalorder %s148, %s150
    %p157 = scmp.eq.s32.totalorder %s19, 1
    %p158 = por %p156, %p157
    %p159 = scmp.ne.s32.totalorder %s150, %s151
    %p160 = scmp.eq.s32.totalorder %s19, 0
    %p161 = por %p159, %p160
    %p162 = scmp.ne.s32.totalorder %s150, %s151
    %p163 = scmp.eq.s32.totalorder %s20, 1
    %p164 = por %p162, %p163
    %p166 = scmp.ne.s32.totalorder %s151, %s165
    %p167 = scmp.eq.s32.totalorder %s20, 0
    %p168 = por %p166, %p167
    %s169 = ssub.s32 %s14, %s21
    %p170 = scmp.eq.s32.totalorder %s169, 0
    %s172 = sadd.s32 %s171, 1
    %s173 = scalar_select %p170, %s171, %s172
    %p176 = pneg %p170
    %p177 = scmp.eq.s32.totalorder %s14, 1
    %p178 = por %p176, %p177
    %p179 = scmp.ne.s32.totalorder %s171, %s174
    %p180 = scmp.eq.s32.totalorder %s14, 0
    %p181 = por %p179, %p180
    %p182 = scmp.ne.s32.totalorder %s171, %s174
    %p183 = scmp.eq.s32.totalorder %s19, 1
    %p184 = por %p182, %p183
    %p185 = scmp.ne.s32.totalorder %s174, %s175
    %p186 = scmp.eq.s32.totalorder %s19, 0
    %p187 = por %p185, %p186
    %p188 = scmp.ne.s32.totalorder %s174, %s175
    %p189 = scmp.eq.s32.totalorder %s20, 1
    %p190 = por %p188, %p189
    %p192 = scmp.ne.s32.totalorder %s175, %s191
    %p193 = scmp.eq.s32.totalorder %s20, 0
    %p194 = por %p192, %p193
    %s195 = ssub.s32 %s14, %s21
    %p196 = scmp.eq.s32.totalorder %s195, 0
    %s198 = sadd.s32 %s197, 1
    %s199 = scalar_select %p196, %s197, %s198
    %p202 = pneg %p196
    %p203 = scmp.eq.s32.totalorder %s14, 1
    %p204 = por %p202, %p203
    %p205 = scmp.ne.s32.totalorder %s197, %s200
    %p206 = scmp.eq.s32.totalorder %s14, 0
    %p207 = por %p205, %p206
    %p208 = scmp.ne.s32.totalorder %s197, %s200
    %p209 = scmp.eq.s32.totalorder %s19, 1
    %p210 = por %p208, %p209
    %p211 = scmp.ne.s32.totalorder %s200, %s201
    %p212 = scmp.eq.s32.totalorder %s19, 0
    %p213 = por %p211, %p212
    %p214 = scmp.ne.s32.totalorder %s200, %s201
    %p215 = scmp.eq.s32.totalorder %s20, 1
    %p216 = por %p214, %p215
    %p218 = scmp.ne.s32.totalorder %s201, %s217
    %p219 = scmp.eq.s32.totalorder %s20, 0
    %p220 = por %p218, %p219
    %p221 = scmp.le.s32.totalorder 1, %s14
    %p222 = scmp.lt.s32.totalorder %s14, 3
    %p223 = pnand %p221, %p222
    %p224 = pneg %p223
    // Predicated region
    $region9: #{_lambda_.6} parent=5 // pred_check
      _
    $region10: #{_lambda_.6} parent=5 // pred_check_branch
      %226 = sbr.rel (%p223) target = $region12
    $region11: #{_lambda_.6} parent=5 // pred_region
      %s227 = ssub.s32 %s14, 1
      // Predicated region
      $region13: #{_lambda_.6} parent=11 // pred_check
        %p228 = pneg %p35
      $region14: #{_lambda_.6} parent=11 // pred_check_branch
        %230 = sbr.rel (%p228) target = $region16
      $region15: #{_lambda_.6} parent=11 // pred_region
        _
      $region16: #{_lambda_.6} parent=11 // pred_fallthru
        _
      // Predicated region
      $region17: #{_lambda_.6} parent=11 // pred_check
        %p231 = pneg %p56
      $region18: #{_lambda_.6} parent=11 // pred_check_branch
        %233 = sbr.rel (%p231) target = $region20
      $region19: #{_lambda_.6} parent=11 // pred_region
        _
      $region20: #{_lambda_.6} parent=11 // pred_fallthru
        _
      // Predicated region
      $region21: #{_lambda_.6} parent=11 // pred_check
        %p234 = pneg %p77
      $region22: #{_lambda_.6} parent=11 // pred_check_branch
        %236 = sbr.rel (%p234) target = $region24
      $region23: #{_lambda_.6} parent=11 // pred_region
        _
      $region24: #{_lambda_.6} parent=11 // pred_fallthru
        _
      // Predicated region
      $region25: #{_lambda_.6} parent=11 // pred_check
        %p237 = pneg %p98
      $region26: #{_lambda_.6} parent=11 // pred_check_branch
        %239 = sbr.rel (%p237) target = $region28
      $region27: #{_lambda_.6} parent=11 // pred_region
        _
      $region28: #{_lambda_.6} parent=11 // pred_fallthru
        _
      // Predicated region
      $region29: #{_lambda_.6} parent=11 // pred_check
        %p240 = pneg %p119
      $region30: #{_lambda_.6} parent=11 // pred_check_branch
        %242 = sbr.rel (%p240) target = $region32
      $region31: #{_lambda_.6} parent=11 // pred_region
        _
      $region32: #{_lambda_.6} parent=11 // pred_fallthru
        _
      // Predicated region
      $region33: #{_lambda_.6} parent=11 // pred_check
        %p243 = pneg %p140
      $region34: #{_lambda_.6} parent=11 // pred_check_branch
        %245 = sbr.rel (%p243) target = $region36
      $region35: #{_lambda_.6} parent=11 // pred_region
        _
      $region36: #{_lambda_.6} parent=11 // pred_fallthru
        _
      // Predicated region
      $region37: #{_lambda_.6} parent=11 // pred_check
        %p246 = pneg %p161
      $region38: #{_lambda_.6} parent=11 // pred_check_branch
        %248 = sbr.rel (%p246) target = $region40
      $region39: #{_lambda_.6} parent=11 // pred_region
        _
      $region40: #{_lambda_.6} parent=11 // pred_fallthru
        _
    $region12: #{_lambda_.6} parent=5 // pred_fallthru
      _
    %p249 = scmp.lt.s32.totalorder %s14, 2
    // Predicated region
    $region41: #{_lambda_.6} parent=5 // pred_check
      %p250 = pneg %p249
    $region42: #{_lambda_.6} parent=5 // pred_check_branch
      %252 = sbr.rel (%p250) target = $region44
    $region43: #{_lambda_.6} parent=5 // pred_region
      // Predicated region
      $region45: #{_lambda_.6} parent=43 // pred_check
        %p253 = pneg %p181
      $region46: #{_lambda_.6} parent=43 // pred_check_branch
        %255 = sbr.rel (%p253) target = $region48
      $region47: #{_lambda_.6} parent=43 // pred_region
        %p256 = scmp.lt.s32.totalorder %s14, 1
        %s257 = scalar_select %p256, %s14, 1
        %s258 = smul.addr %s257, 4
        %s259 = scalar_lea.vmem %s7, %s258
      $region48: #{_lambda_.6} parent=43 // pred_fallthru
        _
    $region44: #{_lambda_.6} parent=5 // pred_fallthru
      _
    %p260 = scmp.le.s32.totalorder 1, %s14
    %p261 = scmp.lt.s32.totalorder %s14, 3
    %p262 = pnand %p260, %p261
    %p263 = pneg %p262
    // Predicated region
    $region49: #{_lambda_.6} parent=5 // pred_check
      _
    $region50: #{_lambda_.6} parent=5 // pred_check_branch
      %265 = sbr.rel (%p262) target = $region52
    $region51: #{_lambda_.6} parent=5 // pred_region
      %s266 = ssub.s32 %s14, 1
      %p267 = pneg %p35
      %p268 = pneg %p32
      %p269 = pneg %p56
      %p270 = pneg %p53
      %p271 = pneg %p77
      %p272 = pneg %p74
      %p273 = pneg %p98
      %p274 = pneg %p95
      %p275 = pneg %p119
      %p276 = pneg %p116
      %p277 = pneg %p140
      %p278 = pneg %p137
      %p279 = pneg %p161
      %p280 = pneg %p158
      %p281 = scmp.lt.s32.totalorder %s19, 1
      %s282 = scalar_select %p281, %s19, 1
      %s283 = smul.addr %s282, 4
      %s284 = scalar_lea.vmem %s7, %s283
      %p285 = pneg %p187
      %p286 = pneg %p184
      %p287 = pneg %p213
      %p288 = pneg %p210
      %p289 = scmp.lt.s32.totalorder %s19, 1
      %s290 = scalar_select %p289, %s19, 1
      %s291 = smul.addr %s290, 8
      %s292 = scalar_lea.vmem %s8, %s291
      %p293 = scmp.lt.s32.totalorder %s19, 1
      %s294 = scalar_select %p293, %s19, 1
      %s295 = smul.addr %s294, 4
      %s296 = scalar_lea.vmem %s7, %s295
      %p297 = scmp.lt.s32.totalorder %s19, 1
      %s298 = scalar_select %p297, %s19, 1
      %s299 = smul.addr %s298, 8
      %s300 = scalar_lea.vmem %s8, %s299
      %v302 = vld [vmem:[%s0] sm:$0xff]
      %v303 = vld [vmem:[%s0 + $0x8] sm:$0xff]
      %v304 = vpack.c.bf16 %v303, %v302
      %v305 = vld [vmem:[%s1] sm:$0xff]
      %v306 = vld [vmem:[%s1 + $0x8] sm:$0xff]
      %v307 = vpack.c.bf16 %v306, %v305
      %v308 = vld [vmem:[%s2] sm:$0xff]
      %v309 = vld [vmem:[%s2 + $0x8] sm:$0xff]
      %v310 = vpack.c.bf16 %v309, %v308
      %v311 = vld [vmem:[%s3] sm:$0x1]
      %v313 = vlaneseq
      %v314 = vshrl.u32 %v313, 7
      %v315 = vsub.s32 0, %v314
      %v316 = vrot.slane %v311, %v315
      %vm318 = vcmask 130048
      %v320 = vsel %vm318, %v304, 0
      %322 = vmatprep.subr.bf16.mxu0 0
      %323 = vmatpush1.bf16.msra.mxu0 %v307
      %324 = vmatprep.subr.bf16.mxu0 0
      %325 = vmatpush1.bf16.msra.mxu0 0
      %326 = vmatprep.subr.bf16.mxu0 0
      %327 = vmatpush1.bf16.msra.mxu0 0
      %328 = vmatprep.subr.bf16.mxu0 0
      %329 = vmatpush1.bf16.msra.mxu0 0
      %330 = vmatprep.subr.bf16.mxu0 0
      %331 = vmatpush1.bf16.msra.mxu0 0
      %332 = vmatprep.subr.bf16.mxu0 0
      %333 = vmatpush1.bf16.msra.mxu0 0
      %334 = vmatprep.subr.bf16.mxu0 0
      %335 = vmatpush1.bf16.msra.mxu0 0
      %336 = vmatprep.subr.bf16.mxu0 0
      %337 = vmatpush1.bf16.msra.mxu0 0
      %338 = vmatprep.subr.bf16.mxu0 0
      %339 = vmatpush1.bf16.msra.mxu0 0
      %340 = vmatprep.subr.bf16.mxu0 0
      %341 = vmatpush1.bf16.msra.mxu0 0
      %342 = vmatprep.subr.bf16.mxu0 0
      %343 = vmatpush1.bf16.msra.mxu0 0
      %344 = vmatprep.subr.bf16.mxu0 0
      %345 = vmatpush1.bf16.msra.mxu0 0
      %346 = vmatprep.subr.bf16.mxu0 0
      %347 = vmatpush1.bf16.msra.mxu0 0
      %348 = vmatprep.subr.bf16.mxu0 0
      %349 = vmatpush1.bf16.msra.mxu0 0
      %350 = vmatprep.subr.bf16.mxu0 0
      %351 = vmatpush1.bf16.msra.mxu0 0
      %352 = vmatprep.subr.bf16.mxu0 0
      %353 = vmatpush1.bf16.msra.mxu0 0
      %354 = vmatprep.mubr.bf16.mxu0 0
      %355 = vmatmul.mubr.bf16.gmra.mrb[0].mxu0 %v320
      %v356 = vpop.f32.mrb[0].mxu0
      %v357 = vadd.f32 %v316, %v356
      %v358 = vpop.f32.mrb[0].mxu0
      %v359 = vpop.f32.mrb[0].mxu0
      %v360 = vadd.f32 %v316, %v359
      %v361 = vpop.f32.mrb[0].mxu0
      %362 = vdwg.mxu0
      %s363 = smul.u32 %s19, 8
      %s364 = scalar_lea.vmem %s0, %s363
      %v365 = vld [vmem:[%s364] sm:$0xff]
      %v366 = vpack.c.bf16 %v365, %v365
      %v367 = vld [vmem:[%s4] sm:$0x1]
      %v369 = vlaneseq
      %v370 = vshrl.u32 %v369, 7
      %v371 = vsub.s32 0, %v370
      %v372 = vrot.slane %v367, %v371
      %v375 = vsel %vm318, %v366, 0
      %377 = vmatprep.subr.bf16.mxu0 0
      %378 = vmatpush1.bf16.msra.mxu0 %v310
      %379 = vmatprep.subr.bf16.mxu0 0
      %380 = vmatpush1.bf16.msra.mxu0 0
      %381 = vmatprep.subr.bf16.mxu0 0
      %382 = vmatpush1.bf16.msra.mxu0 0
      %383 = vmatprep.subr.bf16.mxu0 0
      %384 = vmatpush1.bf16.msra.mxu0 0
      %385 = vmatprep.subr.bf16.mxu0 0
      %386 = vmatpush1.bf16.msra.mxu0 0
      %387 = vmatprep.subr.bf16.mxu0 0
      %388 = vmatpush1.bf16.msra.mxu0 0
      %389 = vmatprep.subr.bf16.mxu0 0
      %390 = vmatpush1.bf16.msra.mxu0 0
      %391 = vmatprep.subr.bf16.mxu0 0
      %392 = vmatpush1.bf16.msra.mxu0 0
      %393 = vmatprep.subr.bf16.mxu0 0
      %394 = vmatpush1.bf16.msra.mxu0 0
      %395 = vmatprep.subr.bf16.mxu0 0
      %396 = vmatpush1.bf16.msra.mxu0 0
      %397 = vmatprep.subr.bf16.mxu0 0
      %398 = vmatpush1.bf16.msra.mxu0 0
      %399 = vmatprep.subr.bf16.mxu0 0
      %400 = vmatpush1.bf16.msra.mxu0 0
      %401 = vmatprep.subr.bf16.mxu0 0
      %402 = vmatpush1.bf16.msra.mxu0 0
      %403 = vmatprep.subr.bf16.mxu0 0
      %404 = vmatpush1.bf16.msra.mxu0 0
      %405 = vmatprep.subr.bf16.mxu0 0
      %406 = vmatpush1.bf16.msra.mxu0 0
      %407 = vmatprep.subr.bf16.mxu0 0
      %408 = vmatpush1.bf16.msra.mxu0 0
      %409 = vmatprep.mubr.bf16.mxu0 0
      %410 = vmatmul.mubr.bf16.gmra.mrb[0].mxu0 %v375
      %v411 = vpop.f32.mrb[0].mxu0
      %v412 = vadd.f32 %v372, %v411
      %v413 = vpop.f32.mrb[0].mxu0
      %v414 = vpop.f32.mrb[0].mxu0
      %v415 = vpop.f32.mrb[0].mxu0
      %416 = vdwg.mxu0
      %v417 = vld [vmem:[%s296] sm:$0xf]
      %v418 = vunpack.c.l.bf16 %v417
      %vm419 = vcmp.gt.f32.partialorder %v418, 0.0
      %v420 = vld [vmem:[%s5] sm:$0x1]
      %v422 = vcombine.high %v412, %v412
      %v424 = vunpack.c.l.s4 1966171168
      %v425 = vunpack.c.0.s8 %v424
      %v426 = vlaneseq
      %v427 = vshrl.u32 %v426, 7
      %v428 = vsub.s32 %v425, %v427
      %v429 = vrot.slane %v412, %v428
      %v431 = vunpack.c.l.s4 1966171168
      %v432 = vunpack.c.0.s8 %v431
      %v433 = vlaneseq
      %v434 = vshrl.u32 %v433, 7
      %v435 = vsub.s32 %v432, %v434
      %v436 = vrot.slane %v422, %v435
      %v437 = vcombine.high %v429, %v429
      %v438 = vcombine.high %v436, %v436
      %v440 = vunpack.c.l.s4 1966171168
      %v441 = vunpack.c.0.s8 %v440
      %v442 = vlaneseq
      %v443 = vshrl.u32 %v442, 7
      %v444 = vsub.s32 %v441, %v443
      %v445 = vrot.slane %v429, %v444
      %v447 = vunpack.c.l.s4 1966171168
      %v448 = vunpack.c.0.s8 %v447
      %v449 = vlaneseq
      %v450 = vshrl.u32 %v449, 7
      %v451 = vsub.s32 %v448, %v450
      %v452 = vrot.slane %v436, %v451
      %v454 = vunpack.c.l.s4 1966171168
      %v455 = vunpack.c.0.s8 %v454
      %v456 = vlaneseq
      %v457 = vshrl.u32 %v456, 7
      %v458 = vsub.s32 %v455, %v457
      %v459 = vrot.slane %v437, %v458
      %v461 = vunpack.c.l.s4 1966171168
      %v462 = vunpack.c.0.s8 %v461
      %v463 = vlaneseq
      %v464 = vshrl.u32 %v463, 7
      %v465 = vsub.s32 %v462, %v464
      %v466 = vrot.slane %v438, %v465
      %v467 = vcombine.high %v445, %v445
      %v468 = vcombine.high %v452, %v452
      %v469 = vcombine.high %v459, %v459
      %v470 = vcombine.high %v466, %v466
      %v471 = vlaneseq
      %v472 = vshrl.u32 %v471, 7
      %v473 = vsub.s32 0, %v472
      %v474 = vrot.slane %v445, %v473
      %v475 = vlaneseq
      %v476 = vshrl.u32 %v475, 7
      %v477 = vsub.s32 0, %v476
      %v478 = vrot.slane %v459, %v477
      %v479 = vlaneseq
      %v480 = vshrl.u32 %v479, 7
      %v481 = vsub.s32 0, %v480
      %v482 = vrot.slane %v467, %v481
      %v483 = vlaneseq
      %v484 = vshrl.u32 %v483, 7
      %v485 = vsub.s32 0, %v484
      %v486 = vrot.slane %v469, %v485
      %v487 = vlaneseq
      %v488 = vshrl.u32 %v487, 7
      %v489 = vsub.s32 0, %v488
      %v490 = vrot.slane %v452, %v489
      %v491 = vlaneseq
      %v492 = vshrl.u32 %v491, 7
      %v493 = vsub.s32 0, %v492
      %v494 = vrot.slane %v466, %v493
      %v495 = vlaneseq
      %v496 = vshrl.u32 %v495, 7
      %v497 = vsub.s32 0, %v496
      %v498 = vrot.slane %v468, %v497
      %v499 = vlaneseq
      %v500 = vshrl.u32 %v499, 7
      %v501 = vsub.s32 0, %v500
      %v502 = vrot.slane %v470, %v501
      %v511 = vadd.f32 %v474, %v357
      %v512 = vadd.f32 %v474, %v360
      %v513 = vadd.f32 %v478, %v357
      %v514 = vadd.f32 %v478, %v360
      %v515 = vadd.f32 %v482, %v357
      %v516 = vadd.f32 %v482, %v360
      %v517 = vadd.f32 %v486, %v357
      %v518 = vadd.f32 %v486, %v360
      %v519 = vadd.f32 %v490, %v357
      %v520 = vadd.f32 %v490, %v360
      %v521 = vadd.f32 %v494, %v357
      %v522 = vadd.f32 %v494, %v360
      %v523 = vadd.f32 %v498, %v357
      %v524 = vadd.f32 %v498, %v360
      %v525 = vadd.f32 %v502, %v357
      %v526 = vadd.f32 %v502, %v360
      %vm527 = vcmp.gt.f32.partialorder %v511, 0.0
      %vm528 = vcmp.gt.f32.partialorder %v512, 0.0
      %vm529 = vcmp.gt.f32.partialorder %v513, 0.0
      %vm530 = vcmp.gt.f32.partialorder %v514, 0.0
      %vm531 = vcmp.gt.f32.partialorder %v515, 0.0
      %vm532 = vcmp.gt.f32.partialorder %v516, 0.0
      %vm533 = vcmp.gt.f32.partialorder %v517, 0.0
      %vm534 = vcmp.gt.f32.partialorder %v518, 0.0
      %vm535 = vcmp.gt.f32.partialorder %v519, 0.0
      %vm536 = vcmp.gt.f32.partialorder %v520, 0.0
      %vm537 = vcmp.gt.f32.partialorder %v521, 0.0
      %vm538 = vcmp.gt.f32.partialorder %v522, 0.0
      %vm539 = vcmp.gt.f32.partialorder %v523, 0.0
      %vm540 = vcmp.gt.f32.partialorder %v524, 0.0
      %vm541 = vcmp.gt.f32.partialorder %v525, 0.0
      %vm542 = vcmp.gt.f32.partialorder %v526, 0.0
      %v543 = vmul.f32 %v511, 0.2
      %v544 = vmul.f32 %v512, 0.2
      %v545 = vmul.f32 %v513, 0.2
      %v546 = vmul.f32 %v514, 0.2
      %v547 = vmul.f32 %v515, 0.2
      %v548 = vmul.f32 %v516, 0.2
      %v549 = vmul.f32 %v517, 0.2
      %v550 = vmul.f32 %v518, 0.2
      %v551 = vmul.f32 %v519, 0.2
      %v552 = vmul.f32 %v520, 0.2
      %v553 = vmul.f32 %v521, 0.2
      %v554 = vmul.f32 %v522, 0.2
      %v555 = vmul.f32 %v523, 0.2
      %v556 = vmul.f32 %v524, 0.2
      %v557 = vmul.f32 %v525, 0.2
      %v558 = vmul.f32 %v526, 0.2
      %v559 = vsel %vm527, %v511, %v543
      %v560 = vsel %vm528, %v512, %v544
      %v561 = vsel %vm529, %v513, %v545
      %v562 = vsel %vm530, %v514, %v546
      %v563 = vsel %vm531, %v515, %v547
      %v564 = vsel %vm532, %v516, %v548
      %v565 = vsel %vm533, %v517, %v549
      %v566 = vsel %vm534, %v518, %v550
      %v567 = vsel %vm535, %v519, %v551
      %v568 = vsel %vm536, %v520, %v552
      %v569 = vsel %vm537, %v521, %v553
      %v570 = vsel %vm538, %v522, %v554
      %v571 = vsel %vm539, %v523, %v555
      %v572 = vsel %vm540, %v524, %v556
      %v573 = vsel %vm541, %v525, %v557
      %v574 = vsel %vm542, %v526, %v558
      %v576 = vlaneseq
      %v577 = vshrl.u32 %v576, 7
      %v578 = vsub.s32 0, %v577
      %v579 = vrot.slane %v420, %v578
      %v581 = vmul.f32 %v559, %v579
      %v582 = vmul.f32 %v560, %v579
      %v583 = vmul.f32 %v561, %v579
      %v584 = vmul.f32 %v562, %v579
      %v585 = vmul.f32 %v563, %v579
      %v586 = vmul.f32 %v564, %v579
      %v587 = vmul.f32 %v565, %v579
      %v588 = vmul.f32 %v566, %v579
      %v589 = vmul.f32 %v567, %v579
      %v590 = vmul.f32 %v568, %v579
      %v591 = vmul.f32 %v569, %v579
      %v592 = vmul.f32 %v570, %v579
      %v593 = vmul.f32 %v571, %v579
      %v594 = vmul.f32 %v572, %v579
      %v595 = vmul.f32 %v573, %v579
      %v596 = vmul.f32 %v574, %v579
      %vm597 = vcmask 64512
      %v598 = vsel %vm597, %v581, 0.0
      %599 = vadd.xlane.f32.xlu0 %v598
      %v600 = vpop.xlane.xlu0 %599
      %v601 = vsel %vm597, %v582, 0.0
      %602 = vadd.xlane.f32.xlu0 %v601
      %v603 = vpop.xlane.xlu0 %602
      %v604 = vsel %vm597, %v583, 0.0
      %605 = vadd.xlane.f32.xlu0 %v604
      %v606 = vpop.xlane.xlu0 %605
      %v607 = vsel %vm597, %v584, 0.0
      %608 = vadd.xlane.f32.xlu0 %v607
      %v609 = vpop.xlane.xlu0 %608
      %v610 = vsel %vm597, %v585, 0.0
      %611 = vadd.xlane.f32.xlu0 %v610
      %v612 = vpop.xlane.xlu0 %611
      %v613 = vsel %vm597, %v586, 0.0
      %614 = vadd.xlane.f32.xlu0 %v613
      %v615 = vpop.xlane.xlu0 %614
      %v616 = vsel %vm597, %v587, 0.0
      %617 = vadd.xlane.f32.xlu0 %v616
      %v618 = vpop.xlane.xlu0 %617
      %v619 = vsel %vm597, %v588, 0.0
      %620 = vadd.xlane.f32.xlu0 %v619
      %v621 = vpop.xlane.xlu0 %620
      %v622 = vsel %vm597, %v589, 0.0
      %623 = vadd.xlane.f32.xlu0 %v622
      %v624 = vpop.xlane.xlu0 %623
      %v625 = vsel %vm597, %v590, 0.0
      %626 = vadd.xlane.f32.xlu0 %v625
      %v627 = vpop.xlane.xlu0 %626
      %v628 = vsel %vm597, %v591, 0.0
      %629 = vadd.xlane.f32.xlu0 %v628
      %v630 = vpop.xlane.xlu0 %629
      %v631 = vsel %vm597, %v592, 0.0
      %632 = vadd.xlane.f32.xlu0 %v631
      %v633 = vpop.xlane.xlu0 %632
      %v634 = vsel %vm597, %v593, 0.0
      %635 = vadd.xlane.f32.xlu0 %v634
      %v636 = vpop.xlane.xlu0 %635
      %v637 = vsel %vm597, %v594, 0.0
      %638 = vadd.xlane.f32.xlu0 %v637
      %v639 = vpop.xlane.xlu0 %638
      %v640 = vsel %vm597, %v595, 0.0
      %641 = vadd.xlane.f32.xlu0 %v640
      %v642 = vpop.xlane.xlu0 %641
      %v643 = vsel %vm597, %v596, 0.0
      %644 = vadd.xlane.f32.xlu0 %v643
      %v645 = vpop.xlane.xlu0 %644
      %v662 = vlaneseq
      %v663 = vand.u32 %v662, 127
      %v664 = vlaneseq
      %v665 = vshrl.u32 %v664, 7
      %v666 = vsub.s32 %v663, %v665
      %v667 = vrot.slane %v600, %v666
      %v668 = vadd.s32 %v663, 4294967288
      %v669 = vlaneseq
      %v670 = vshrl.u32 %v669, 7
      %v671 = vsub.s32 %v668, %v670
      %v672 = vrot.slane %v603, %v671
      %vm673 = vcmask 130112
      %v674 = vsel %vm673, %v672, %v667
      %v675 = vlaneseq
      %v676 = vshrl.u32 %v675, 7
      %v677 = vsub.s32 %v663, %v676
      %v678 = vrot.slane %v606, %v677
      %v679 = vlaneseq
      %v680 = vshrl.u32 %v679, 7
      %v681 = vsub.s32 %v668, %v680
      %v682 = vrot.slane %v609, %v681
      %v683 = vsel %vm673, %v682, %v678
      %v684 = vlaneseq
      %v685 = vshrl.u32 %v684, 7
      %v686 = vsub.s32 %v663, %v685
      %v687 = vrot.slane %v612, %v686
      %v688 = vlaneseq
      %v689 = vshrl.u32 %v688, 7
      %v690 = vsub.s32 %v668, %v689
      %v691 = vrot.slane %v615, %v690
      %v692 = vsel %vm673, %v691, %v687
      %v693 = vlaneseq
      %v694 = vshrl.u32 %v693, 7
      %v695 = vsub.s32 %v663, %v694
      %v696 = vrot.slane %v618, %v695
      %v697 = vlaneseq
      %v698 = vshrl.u32 %v697, 7
      %v699 = vsub.s32 %v668, %v698
      %v700 = vrot.slane %v621, %v699
      %v701 = vsel %vm673, %v700, %v696
      %v702 = vlaneseq
      %v703 = vshrl.u32 %v702, 7
      %v704 = vsub.s32 %v663, %v703
      %v705 = vrot.slane %v624, %v704
      %v706 = vlaneseq
      %v707 = vshrl.u32 %v706, 7
      %v708 = vsub.s32 %v668, %v707
      %v709 = vrot.slane %v627, %v708
      %v710 = vsel %vm673, %v709, %v705
      %v711 = vlaneseq
      %v712 = vshrl.u32 %v711, 7
      %v713 = vsub.s32 %v663, %v712
      %v714 = vrot.slane %v630, %v713
      %v715 = vlaneseq
      %v716 = vshrl.u32 %v715, 7
      %v717 = vsub.s32 %v668, %v716
      %v718 = vrot.slane %v633, %v717
      %v719 = vsel %vm673, %v718, %v714
      %v720 = vlaneseq
      %v721 = vshrl.u32 %v720, 7
      %v722 = vsub.s32 %v663, %v721
      %v723 = vrot.slane %v636, %v722
      %v724 = vlaneseq
      %v725 = vshrl.u32 %v724, 7
      %v726 = vsub.s32 %v668, %v725
      %v727 = vrot.slane %v639, %v726
      %v728 = vsel %vm673, %v727, %v723
      %v729 = vlaneseq
      %v730 = vshrl.u32 %v729, 7
      %v731 = vsub.s32 %v663, %v730
      %v732 = vrot.slane %v642, %v731
      %v733 = vlaneseq
      %v734 = vshrl.u32 %v733, 7
      %v735 = vsub.s32 %v668, %v734
      %v736 = vrot.slane %v645, %v735
      %v737 = vsel %vm673, %v736, %v732
      %vm738 = vcmask 1041409
      %v739 = vsel %vm738, %v683, %v674
      %vm740 = vcmask 1042434
      %v741 = vsel %vm740, %v692, %v739
      %vm742 = vcmask 1043459
      %v743 = vsel %vm742, %v701, %v741
      %vm744 = vcmask 1044484
      %v745 = vsel %vm744, %v710, %v743
      %vm746 = vcmask 1045509
      %v747 = vsel %vm746, %v719, %v745
      %vm748 = vcmask 1046534
      %v749 = vsel %vm748, %v728, %v747
      %vm750 = vcmask 1047559
      %v751 = vsel %vm750, %v737, %v749
      %v753 = vsel %vm419, %v751, -1e+30
      %v754 = vsel %vm318, %v753, -inf
      %755 = vmax.xlane.f32.xlu0 %v754
      %v756 = vpop.xlane.xlu0 %755
      %v757 = vsub.f32 %v753, %v756
      %v758 = vmul.f32 %v757, 1.442695
      %v759 = vpow.pop %v758
      %v760 = vsel %vm419, %v759, 0.0
      %v761 = vsel %vm318, %v760, 0.0
      %762 = vadd.xlane.f32.xlu0 %v761
      %v763 = vpop.xlane.xlu0 %762
      %v764 = vmax.f32 %v763, 1e-20
      %v765 = vrcp.pop %v764
      %v766 = vpack.c.bf16 %v760, %v760
      %v767 = vpack.c.bf16 %v360, %v357
      %v769 = vsel %vm318, %v766, 0
      %771 = vmatprep.subr.bf16.mxu0 0
      %772 = vmatpush1.bf16.msra.mxu0 %v767
      %773 = vmatprep.subr.bf16.mxu0 0
      %774 = vmatpush1.bf16.msra.mxu0 0
      %775 = vmatprep.subr.bf16.mxu0 0
      %776 = vmatpush1.bf16.msra.mxu0 0
      %777 = vmatprep.subr.bf16.mxu0 0
      %778 = vmatpush1.bf16.msra.mxu0 0
      %779 = vmatprep.subr.bf16.mxu0 0
      %780 = vmatpush1.bf16.msra.mxu0 0
      %781 = vmatprep.subr.bf16.mxu0 0
      %782 = vmatpush1.bf16.msra.mxu0 0
      %783 = vmatprep.subr.bf16.mxu0 0
      %784 = vmatpush1.bf16.msra.mxu0 0
      %785 = vmatprep.subr.bf16.mxu0 0
      %786 = vmatpush1.bf16.msra.mxu0 0
      %787 = vmatprep.subr.bf16.mxu0 0
      %788 = vmatpush1.bf16.msra.mxu0 0
      %789 = vmatprep.subr.bf16.mxu0 0
      %790 = vmatpush1.bf16.msra.mxu0 0
      %791 = vmatprep.subr.bf16.mxu0 0
      %792 = vmatpush1.bf16.msra.mxu0 0
      %793 = vmatprep.subr.bf16.mxu0 0
      %794 = vmatpush1.bf16.msra.mxu0 0
      %795 = vmatprep.subr.bf16.mxu0 0
      %796 = vmatpush1.bf16.msra.mxu0 0
      %797 = vmatprep.subr.bf16.mxu0 0
      %798 = vmatpush1.bf16.msra.mxu0 0
      %799 = vmatprep.subr.bf16.mxu0 0
      %800 = vmatpush1.bf16.msra.mxu0 0
      %801 = vmatprep.subr.bf16.mxu0 0
      %802 = vmatpush1.bf16.msra.mxu0 0
      %803 = vmatprep.mubr.bf16.mxu0 0
      %804 = vmatmul.mubr.bf16.gmra.mrb[0].mxu0 %v769
      %v805 = vpop.f32.mrb[0].mxu0
      %v806 = vadd.f32 0.0, %v805
      %v807 = vpop.f32.mrb[0].mxu0
      %v808 = vpop.f32.mrb[0].mxu0
      %v809 = vpop.f32.mrb[0].mxu0
      %810 = vdwg.mxu0
      %v811 = vmul.f32 %v806, %v765
      %828 = vrot.lane.b32.xlu0 %v581, 120
      %v829 = vpop.permute.xlu0 %828
      %830 = vrot.lane.b32.xlu0 %v582, 120
      %v831 = vpop.permute.xlu0 %830
      %832 = vrot.lane.b32.xlu0 %v583, 120
      %v833 = vpop.permute.xlu0 %832
      %834 = vrot.lane.b32.xlu0 %v584, 120
      %v835 = vpop.permute.xlu0 %834
      %836 = vrot.lane.b32.xlu0 %v585, 120
      %v837 = vpop.permute.xlu0 %836
      %838 = vrot.lane.b32.xlu0 %v586, 120
      %v839 = vpop.permute.xlu0 %838
      %840 = vrot.lane.b32.xlu0 %v587, 120
      %v841 = vpop.permute.xlu0 %840
      %842 = vrot.lane.b32.xlu0 %v588, 120
      %v843 = vpop.permute.xlu0 %842
      %844 = vrot.lane.b32.xlu0 %v589, 120
      %v845 = vpop.permute.xlu0 %844
      %846 = vrot.lane.b32.xlu0 %v590, 120
      %v847 = vpop.permute.xlu0 %846
      %848 = vrot.lane.b32.xlu0 %v591, 120
      %v849 = vpop.permute.xlu0 %848
      %850 = vrot.lane.b32.xlu0 %v592, 120
      %v851 = vpop.permute.xlu0 %850
      %852 = vrot.lane.b32.xlu0 %v593, 120
      %v853 = vpop.permute.xlu0 %852
      %854 = vrot.lane.b32.xlu0 %v594, 120
      %v855 = vpop.permute.xlu0 %854
      %856 = vrot.lane.b32.xlu0 %v595, 120
      %v857 = vpop.permute.xlu0 %856
      %858 = vrot.lane.b32.xlu0 %v596, 120
      %v859 = vpop.permute.xlu0 %858
      %v876 = vsel %vm597, %v829, 0.0
      %877 = vadd.xlane.f32.xlu0 %v876
      %v878 = vpop.xlane.xlu0 %877
      %v879 = vsel %vm597, %v831, 0.0
      %880 = vadd.xlane.f32.xlu0 %v879
      %v881 = vpop.xlane.xlu0 %880
      %v882 = vsel %vm597, %v833, 0.0
      %883 = vadd.xlane.f32.xlu0 %v882
      %v884 = vpop.xlane.xlu0 %883
      %v885 = vsel %vm597, %v835, 0.0
      %886 = vadd.xlane.f32.xlu0 %v885
      %v887 = vpop.xlane.xlu0 %886
      %v888 = vsel %vm597, %v837, 0.0
      %889 = vadd.xlane.f32.xlu0 %v888
      %v890 = vpop.xlane.xlu0 %889
      %v891 = vsel %vm597, %v839, 0.0
      %892 = vadd.xlane.f32.xlu0 %v891
      %v893 = vpop.xlane.xlu0 %892
      %v894 = vsel %vm597, %v841, 0.0
      %895 = vadd.xlane.f32.xlu0 %v894
      %v896 = vpop.xlane.xlu0 %895
      %v897 = vsel %vm597, %v843, 0.0
      %898 = vadd.xlane.f32.xlu0 %v897
      %v899 = vpop.xlane.xlu0 %898
      %v900 = vsel %vm597, %v845, 0.0
      %901 = vadd.xlane.f32.xlu0 %v900
      %v902 = vpop.xlane.xlu0 %901
      %v903 = vsel %vm597, %v847, 0.0
      %904 = vadd.xlane.f32.xlu0 %v903
      %v905 = vpop.xlane.xlu0 %904
      %v906 = vsel %vm597, %v849, 0.0
      %907 = vadd.xlane.f32.xlu0 %v906
      %v908 = vpop.xlane.xlu0 %907
      %v909 = vsel %vm597, %v851, 0.0
      %910 = vadd.xlane.f32.xlu0 %v909
      %v911 = vpop.xlane.xlu0 %910
      %v912 = vsel %vm597, %v853, 0.0
      %913 = vadd.xlane.f32.xlu0 %v912
      %v914 = vpop.xlane.xlu0 %913
      %v915 = vsel %vm597, %v855, 0.0
      %916 = vadd.xlane.f32.xlu0 %v915
      %v917 = vpop.xlane.xlu0 %916
      %v918 = vsel %vm597, %v857, 0.0
      %919 = vadd.xlane.f32.xlu0 %v918
      %v920 = vpop.xlane.xlu0 %919
      %v921 = vsel %vm597, %v859, 0.0
      %922 = vadd.xlane.f32.xlu0 %v921
      %v923 = vpop.xlane.xlu0 %922
      %v940 = vlaneseq
      %v941 = vshrl.u32 %v940, 7
      %v942 = vsub.s32 %v663, %v941
      %v943 = vrot.slane %v878, %v942
      %v944 = vlaneseq
      %v945 = vshrl.u32 %v944, 7
      %v946 = vsub.s32 %v668, %v945
      %v947 = vrot.slane %v881, %v946
      %v948 = vsel %vm673, %v947, %v943
      %v949 = vlaneseq
      %v950 = vshrl.u32 %v949, 7
      %v951 = vsub.s32 %v663, %v950
      %v952 = vrot.slane %v884, %v951
      %v953 = vlaneseq
      %v954 = vshrl.u32 %v953, 7
      %v955 = vsub.s32 %v668, %v954
      %v956 = vrot.slane %v887, %v955
      %v957 = vsel %vm673, %v956, %v952
      %v958 = vlaneseq
      %v959 = vshrl.u32 %v958, 7
      %v960 = vsub.s32 %v663, %v959
      %v961 = vrot.slane %v890, %v960
      %v962 = vlaneseq
      %v963 = vshrl.u32 %v962, 7
      %v964 = vsub.s32 %v668, %v963
      %v965 = vrot.slane %v893, %v964
      %v966 = vsel %vm673, %v965, %v961
      %v967 = vlaneseq
      %v968 = vshrl.u32 %v967, 7
      %v969 = vsub.s32 %v663, %v968
      %v970 = vrot.slane %v896, %v969
      %v971 = vlaneseq
      %v972 = vshrl.u32 %v971, 7
      %v973 = vsub.s32 %v668, %v972
      %v974 = vrot.slane %v899, %v973
      %v975 = vsel %vm673, %v974, %v970
      %v976 = vlaneseq
      %v977 = vshrl.u32 %v976, 7
      %v978 = vsub.s32 %v663, %v977
      %v979 = vrot.slane %v902, %v978
      %v980 = vlaneseq
      %v981 = vshrl.u32 %v980, 7
      %v982 = vsub.s32 %v668, %v981
      %v983 = vrot.slane %v905, %v982
      %v984 = vsel %vm673, %v983, %v979
      %v985 = vlaneseq
      %v986 = vshrl.u32 %v985, 7
      %v987 = vsub.s32 %v663, %v986
      %v988 = vrot.slane %v908, %v987
      %v989 = vlaneseq
      %v990 = vshrl.u32 %v989, 7
      %v991 = vsub.s32 %v668, %v990
      %v992 = vrot.slane %v911, %v991
      %v993 = vsel %vm673, %v992, %v988
      %v994 = vlaneseq
      %v995 = vshrl.u32 %v994, 7
      %v996 = vsub.s32 %v663, %v995
      %v997 = vrot.slane %v914, %v996
      %v998 = vlaneseq
      %v999 = vshrl.u32 %v998, 7
      %v1000 = vsub.s32 %v668, %v999
      %v1001 = vrot.slane %v917, %v1000
      %v1002 = vsel %vm673, %v1001, %v997
      %v1003 = vlaneseq
      %v1004 = vshrl.u32 %v1003, 7
      %v1005 = vsub.s32 %v663, %v1004
      %v1006 = vrot.slane %v920, %v1005
      %v1007 = vlaneseq
      %v1008 = vshrl.u32 %v1007, 7
      %v1009 = vsub.s32 %v668, %v1008
      %v1010 = vrot.slane %v923, %v1009
      %v1011 = vsel %vm673, %v1010, %v1006
      %v1012 = vsel %vm738, %v957, %v948
      %v1013 = vsel %vm740, %v966, %v1012
      %v1014 = vsel %vm742, %v975, %v1013
      %v1015 = vsel %vm744, %v984, %v1014
      %v1016 = vsel %vm746, %v993, %v1015
      %v1017 = vsel %vm748, %v1002, %v1016
      %v1018 = vsel %vm750, %v1011, %v1017
      %v1020 = vsel %vm419, %v1018, -1e+30
      %v1021 = vsel %vm318, %v1020, -inf
      %1022 = vmax.xlane.f32.xlu0 %v1021
      %v1023 = vpop.xlane.xlu0 %1022
      %v1024 = vsub.f32 %v1020, %v1023
      %v1025 = vmul.f32 %v1024, 1.442695
      %v1026 = vpow.pop %v1025
      %v1027 = vsel %vm419, %v1026, 0.0
      %v1028 = vsel %vm318, %v1027, 0.0
      %1029 = vadd.xlane.f32.xlu0 %v1028
      %v1030 = vpop.xlane.xlu0 %1029
      %v1031 = vmax.f32 %v1030, 1e-20
      %v1032 = vrcp.pop %v1031
      %v1033 = vpack.c.bf16 %v1027, %v1027
      %1035 = vrot.lane.b32.xlu0 %v767, 120
      %v1036 = vpop.permute.xlu0 %1035
      %v1039 = vsel %vm318, %v1033, 0
      %1041 = vmatprep.subr.bf16.mxu0 0
      %1042 = vmatpush1.bf16.msra.mxu0 %v1036
      %1043 = vmatprep.subr.bf16.mxu0 0
      %1044 = vmatpush1.bf16.msra.mxu0 0
      %1045 = vmatprep.subr.bf16.mxu0 0
      %1046 = vmatpush1.bf16.msra.mxu0 0
      %1047 = vmatprep.subr.bf16.mxu0 0
      %1048 = vmatpush1.bf16.msra.mxu0 0
      %1049 = vmatprep.subr.bf16.mxu0 0
      %1050 = vmatpush1.bf16.msra.mxu0 0
      %1051 = vmatprep.subr.bf16.mxu0 0
      %1052 = vmatpush1.bf16.msra.mxu0 0
      %1053 = vmatprep.subr.bf16.mxu0 0
      %1054 = vmatpush1.bf16.msra.mxu0 0
      %1055 = vmatprep.subr.bf16.mxu0 0
      %1056 = vmatpush1.bf16.msra.mxu0 0
      %1057 = vmatprep.subr.bf16.mxu0 0
      %1058 = vmatpush1.bf16.msra.mxu0 0
      %1059 = vmatprep.subr.bf16.mxu0 0
      %1060 = vmatpush1.bf16.msra.mxu0 0
      %1061 = vmatprep.subr.bf16.mxu0 0
      %1062 = vmatpush1.bf16.msra.mxu0 0
      %1063 = vmatprep.subr.bf16.mxu0 0
      %1064 = vmatpush1.bf16.msra.mxu0 0
      %1065 = vmatprep.subr.bf16.mxu0 0
      %1066 = vmatpush1.bf16.msra.mxu0 0
      %1067 = vmatprep.subr.bf16.mxu0 0
      %1068 = vmatpush1.bf16.msra.mxu0 0
      %1069 = vmatprep.subr.bf16.mxu0 0
      %1070 = vmatpush1.bf16.msra.mxu0 0
      %1071 = vmatprep.subr.bf16.mxu0 0
      %1072 = vmatpush1.bf16.msra.mxu0 0
      %1073 = vmatprep.mubr.bf16.mxu0 0
      %1074 = vmatmul.mubr.bf16.gmra.mrb[0].mxu0 %v1039
      %v1075 = vpop.f32.mrb[0].mxu0
      %v1076 = vadd.f32 0.0, %v1075
      %v1077 = vpop.f32.mrb[0].mxu0
      %v1078 = vpop.f32.mrb[0].mxu0
      %v1079 = vpop.f32.mrb[0].mxu0
      %1080 = vdwg.mxu0
      %v1081 = vmul.f32 %v1076, %v1032
      %v1082 = vadd.f32 %v811, 0.0
      %v1083 = vadd.f32 %v1082, %v1081
      %v1084 = vrcp.pop 2.0
      %v1085 = vmul.f32 %v1083, %v1084
      %v1086 = vld [vmem:[%s6] sm:$0x1]
      %v1088 = vlaneseq
      %v1089 = vshrl.u32 %v1088, 7
      %v1090 = vsub.s32 0, %v1089
      %v1091 = vrot.slane %v1086, %v1090
      %v1093 = vadd.f32 %v1085, %v1091
      %1094 = vst.msk [vmem:[%s300] sm:$0xff] %vm597, %v1093
      %p1095 = scmp.lt.s32.totalorder %s19, 1
      %s1096 = scalar_select %p1095, %s19, 1
      %s1097 = smul.addr %s1096, 8
      %s1098 = scalar_lea.vmem %s8, %s1097
      // Predicated region
      $region53: #{_lambda_.6} parent=51 // pred_check
        %p1099 = pneg %p210
      $region54: #{_lambda_.6} parent=51 // pred_check_branch
        %1101 = sbr.rel (%p1099) target = $region56
      $region55: #{_lambda_.6} parent=51 // pred_region
        _
      $region56: #{_lambda_.6} parent=51 // pred_fallthru
        _
    $region52: #{_lambda_.6} parent=5 // pred_fallthru
      _
    %p1102 = scmp.le.s32.totalorder 2, %s14
    // Predicated region
    $region57: #{_lambda_.6} parent=5 // pred_check
      %p1103 = pneg %p1102
    $region58: #{_lambda_.6} parent=5 // pred_check_branch
      %1105 = sbr.rel (%p1103) target = $region60
    $region59: #{_lambda_.6} parent=5 // pred_region
      %s1106 = ssub.s32 %s14, 2
      // Predicated region
      $region61: #{_lambda_.6} parent=59 // pred_check
        %p1107 = pneg %p216
      $region62: #{_lambda_.6} parent=59 // pred_check_branch
        %1109 = sbr.rel (%p1107) target = $region64
      $region63: #{_lambda_.6} parent=59 // pred_region
        %p1110 = scmp.lt.s32.totalorder %s20, 1
        %s1111 = scalar_select %p1110, %s20, 1
        %s1112 = smul.addr %s1111, 8
        %s1113 = scalar_lea.vmem %s8, %s1112
      $region64: #{_lambda_.6} parent=59 // pred_fallthru
        _
    $region60: #{_lambda_.6} parent=5 // pred_fallthru
      _
  $region6: #{_lambda_.6} parent=0 // loop_footer
    %s18 = sadd.s32 1, %s14
  $region7: #{_lambda_.6} parent=0 // loop_footer_branch
    %13 = sbr.rel target = $region3
  $region8: #{_lambda_.6} parent=0 // loop_exit
    _

</llo_original>
